<compile_context>
chip_gen: v5e
topology: v5e:2x2
jax: 0.10.0
libtpu: 0.0.40
codegen_flags: <defaults>
</compile_context>

<pallas_src>
import functools
import math

import jax
import jax.numpy as jnp
from jax.experimental import pallas as pl
from jax.experimental.pallas import tpu as pltpu

EPS_LN = 1e-6
EPS_RMS = 1e-6


# --------------------------------------------------------------------------
# Fused kernel: AdaLN + KV projection (first K step) + flash attention with
# per-head RMSNorm and joint img/ip softmax (online).
# --------------------------------------------------------------------------
def fused_ip_attn_kernel(ip_ref, scale_ref, shift_ref, wkv_ref,
                         q_ref, k_ref, v_ref,
                         wq_ref, wk_ref, wipk_ref,
                         o_ref,
                         q_scr, ipkv_scr, m_scr, l_scr, acc_scr,
                         *, n_heads, head_dim, compute_dtype, bf16_exp,
                         approx_recip):
    H = n_heads * head_dim
    inv_sqrt_d = 1.0 / math.sqrt(head_dim)
    ki = pl.program_id(2)
    nk = pl.num_programs(2)

    wq = wq_ref[...].astype(jnp.float32)        # (1, d)
    wk = wk_ref[...].astype(jnp.float32)
    wipk = wipk_ref[...].astype(jnp.float32)

    def rms(x, w):                               # x: (L, d) f32, stats in f32
        var = jnp.mean(x * x, axis=-1, keepdims=True)
        return x * jax.lax.rsqrt(var + EPS_RMS) * w

    def exp_p(x):                                # scores exp: bf16 on fast path
        if bf16_exp:
            return jnp.exp(x.astype(jnp.bfloat16))
        return jnp.exp(x)

    # ---- init (first K step of every (batch, q-tile)) ----------------------
    @pl.when(ki == 0)
    def _init():
        m_scr[...] = jnp.full_like(m_scr, -jnp.inf)
        l_scr[...] = jnp.zeros_like(l_scr)
        acc_scr[...] = jnp.zeros_like(acc_scr)

        # AdaLayerNorm (no affine) + modulation + fused [Wk^T | Wv^T] projection.
        x = ip_ref[0].astype(jnp.float32)                        # (L_ip, D_ip)
        mean = jnp.mean(x, axis=-1, keepdims=True)
        var = jnp.mean((x - mean) ** 2, axis=-1, keepdims=True)
        xn = (x - mean) * jax.lax.rsqrt(var + EPS_LN)
        xa = (xn * (1.0 + scale_ref[0].astype(jnp.float32))
              + shift_ref[0].astype(jnp.float32))
        ipkv_scr[...] = jnp.dot(xa.astype(wkv_ref.dtype), wkv_ref[...],
                                preferred_element_type=jnp.float32)   # (L_ip, 2H) f32

        # RMSNorm(q) with 1/sqrt(d) folded in, once per q-tile (reused over K steps).
        q_all = q_ref[0]                                          # native dtype
        for h in range(n_heads):
            lo, hi = h * head_dim, (h + 1) * head_dim
            qh = rms(q_all[:, lo:hi].astype(jnp.float32), wq) * inv_sqrt_d
            q_scr[:, lo:hi] = qh.astype(q_scr.dtype)

    # ---- online-softmax update with this img K/V tile (all heads) ----------
    k_blk = k_ref[0]                                              # (tk, H) native
    v_blk = v_ref[0]
    for h in range(n_heads):
        lo, hi = h * head_dim, (h + 1) * head_dim
        qc = q_scr[:, lo:hi]                                      # (tq, d) compute dtype
        kh = rms(k_blk[:, lo:hi].astype(jnp.float32), wk)         # (tk, d) f32
        s = jax.lax.dot_general(qc, kh.astype(compute_dtype),
                                (((1,), (1,)), ((), ())),
                                preferred_element_type=jnp.float32)   # (tq, tk)
        m_prev = m_scr[h]
        m_new = jnp.maximum(m_prev, jnp.max(s, axis=-1, keepdims=True))
        alpha = jnp.exp(m_prev - m_new)                           # f32 (tq, 1)
        p = exp_p(s - m_new)
        l_scr[h] = alpha * l_scr[h] + jnp.sum(p.astype(jnp.float32),
                                              axis=-1, keepdims=True)
        pv = jnp.dot(p.astype(compute_dtype),
                     v_blk[:, lo:hi].astype(compute_dtype),
                     preferred_element_type=jnp.float32)          # (tq, d)
        acc_scr[:, lo:hi] = alpha * acc_scr[:, lo:hi] + pv
        m_scr[h] = m_new

    # ---- last K step: fold in the tiny ip keys/values, normalize, store ----
    @pl.when(ki == nk - 1)
    def _finalize():
        ipkv = ipkv_scr[...]                                      # (L_ip, 2H) f32
        for h in range(n_heads):
            lo, hi = h * head_dim, (h + 1) * head_dim
            qc = q_scr[:, lo:hi]
            ipk = rms(ipkv[:, lo:hi], wipk)                       # (L_ip, d) f32
            s_ip = jax.lax.dot_general(qc, ipk.astype(compute_dtype),
                                       (((1,), (1,)), ((), ())),
                                       preferred_element_type=jnp.float32)  # (tq, L_ip)
            m_prev = m_scr[h]
            m_new = jnp.maximum(m_prev, jnp.max(s_ip, axis=-1, keepdims=True))
            alpha = jnp.exp(m_prev - m_new)
            p_ip = exp_p(s_ip - m_new)
            l_new = alpha * l_scr[h] + jnp.sum(p_ip.astype(jnp.float32),
                                               axis=-1, keepdims=True)
            ipv = ipkv[:, H + lo:H + hi].astype(compute_dtype)    # (L_ip, d)
            acc = alpha * acc_scr[:, lo:hi] + jnp.dot(
                p_ip.astype(compute_dtype), ipv,
                preferred_element_type=jnp.float32)
            inv = pl.reciprocal(l_new, approx=approx_recip)       # EUP
            acc_scr[:, lo:hi] = acc * inv
        # Single lane-dense store in the final (L_q, H) layout.
        o_ref[0] = acc_scr[...].astype(o_ref.dtype)


def _pick_tile(total, target):
    """Largest tile <= target that divides total (falls back to the full extent)."""
    if total <= target:
        return total
    t = min(target, total)
    while total % t != 0:
        t //= 2
        if t < 8:
            return total
    return t


def fused_ip_attention(q, k_img, v_img, ip, scale, shift, w_kv,
                       wq, wk, wipk, n_heads, head_dim, compute_dtype,
                       *, q_tile=256, k_tile=512, vmem_limit_bytes=None):
    B, Lq, H = q.shape
    Lk = k_img.shape[1]
    Lip, Dip = ip.shape[1], ip.shape[2]
    tq = _pick_tile(Lq, q_tile)
    tk = _pick_tile(Lk, k_tile)
    grid = (B, Lq // tq, Lk // tk)

    bf16 = compute_dtype == jnp.bfloat16
    kernel = functools.partial(
        fused_ip_attn_kernel, n_heads=n_heads, head_dim=head_dim,
        compute_dtype=compute_dtype, bf16_exp=bf16, approx_recip=bf16)

    cp_kwargs = dict(dimension_semantics=("parallel", "parallel", "arbitrary"))
    if vmem_limit_bytes is not None:
        cp_kwargs["vmem_limit_bytes"] = vmem_limit_bytes

    return pl.pallas_call(
        kernel,
        out_shape=jax.ShapeDtypeStruct((B, Lq, H), q.dtype),
        grid=grid,
        in_specs=[
            pl.BlockSpec((1, Lip, Dip), lambda b, qi, ki: (b, 0, 0)),   # ip hidden
            pl.BlockSpec((1, 1, Dip), lambda b, qi, ki: (b, 0, 0)),     # AdaLN scale
            pl.BlockSpec((1, 1, Dip), lambda b, qi, ki: (b, 0, 0)),     # AdaLN shift
            pl.BlockSpec((Dip, 2 * H), lambda b, qi, ki: (0, 0)),       # [Wk^T|Wv^T]
            pl.BlockSpec((1, tq, H), lambda b, qi, ki: (b, qi, 0)),     # q tile
            pl.BlockSpec((1, tk, H), lambda b, qi, ki: (b, ki, 0)),     # k tile
            pl.BlockSpec((1, tk, H), lambda b, qi, ki: (b, ki, 0)),     # v tile
            pl.BlockSpec((1, head_dim), lambda b, qi, ki: (0, 0)),      # rms_q w
            pl.BlockSpec((1, head_dim), lambda b, qi, ki: (0, 0)),      # rms_k w
            pl.BlockSpec((1, head_dim), lambda b, qi, ki: (0, 0)),      # rms_ip_k w
        ],
        out_specs=pl.BlockSpec((1, tq, H), lambda b, qi, ki: (b, qi, 0)),
        scratch_shapes=[
            pltpu.VMEM((tq, H), compute_dtype),          # normalized/scaled q
            pltpu.VMEM((Lip, 2 * H), jnp.float32),       # ip K|V (f32, pre-RMS)
            pltpu.VMEM((n_heads, tq, 1), jnp.float32),   # running max  m
            pltpu.VMEM((n_heads, tq, 1), jnp.float32),   # running sum  l
            pltpu.VMEM((tq, H), jnp.float32),            # output accumulator
        ],
        compiler_params=pltpu.CompilerParams(**cp_kwargs),
    )(ip, scale, shift, w_kv, q, k_img, v_img, wq, wk, wipk)


# --------------------------------------------------------------------------
# Parameter preparation (done ONCE, outside the per-call path)
# --------------------------------------------------------------------------
def prepare_params(params, head_dim, compute_dtype):
    w_kv = jnp.concatenate(
        [params["w_k_ip"].T, params["w_v_ip"].T], axis=1).astype(compute_dtype)
    return {
        "w_emb_t": params["w_emb"].T,
        "b_emb": params["b_emb"],
        "w_kv": w_kv,                                            # (D_ip, 2H)
        "rms_q": params["rms_q_w"].reshape(1, head_dim).astype(jnp.float32),
        "rms_k": params["rms_k_w"].reshape(1, head_dim).astype(jnp.float32),
        "rms_ipk": params["rms_ipk_w"].reshape(1, head_dim).astype(jnp.float32),
    }


# --------------------------------------------------------------------------
# Full IPAttnProcessor.forward
# --------------------------------------------------------------------------
def ip_attn_forward(ip_hidden_states, img_query, img_key, img_value, t_emb,
                    prep, n_heads, *, compute_dtype=jnp.bfloat16,
                    q_tile=256, k_tile=512):
    B, Lq, hidden = img_query.shape
    head_dim = hidden // n_heads
    Lk = img_key.shape[1]

    # AdaLN conditioning linear (tiny (B,T) x (T, 2*D_ip)) — plain-JAX glue.
    emb = jax.nn.silu(t_emb) @ prep["w_emb_t"] + prep["b_emb"]
    shift, scale = jnp.split(emb, 2, axis=1)                     # torch .chunk(2, dim=1)

    # (B, L_k, h, d) -> (B, L_k, h*d): contiguous reshape; replaces
    # torch.transpose(img_value, 1, 2) + per-head gather (heads sliced in-kernel).
    v_flat = img_value.reshape(B, Lk, hidden)

    return fused_ip_attention(img_query, img_key, v_flat, ip_hidden_states,
                              scale[:, None, :], shift[:, None, :],
                              prep["w_kv"],
                              prep["rms_q"], prep["rms_k"], prep["rms_ipk"],
                              n_heads, head_dim, compute_dtype,
                              q_tile=q_tile, k_tile=k_tile)


# --------------------------------------------------------------------------
# Pure-JAX reference (mirrors the PyTorch module exactly) for verification
# --------------------------------------------------------------------------
def reference_forward(ip, q_in, k_in, v_in, t_emb, params, n_heads):
    emb = jax.nn.silu(t_emb) @ params["w_emb"].T + params["b_emb"]
    shift, scale = jnp.split(emb, 2, axis=1)
    mean = ip.mean(-1, keepdims=True)
    var = ((ip - mean) ** 2).mean(-1, keepdims=True)
    xn = (ip - mean) / jnp.sqrt(var + EPS_LN)
    x = xn * (1.0 + scale[:, None, :]) + shift[:, None, :]
    ip_key = x @ params["w_k_ip"].T
    ip_value = x @ params["w_v_ip"].T

    head_dim = q_in.shape[-1] // n_heads

    def to_heads(t):
        Bx, Lx, _ = t.shape
        return t.reshape(Bx, Lx, n_heads, head_dim).transpose(0, 2, 1, 3)

    def rms(t, w):
        v_ = jnp.mean(t * t, axis=-1, keepdims=True)
        return t * jax.lax.rsqrt(v_ + EPS_RMS) * w

    q = rms(to_heads(q_in), params["rms_q_w"])
    k_img = rms(to_heads(k_in), params["rms_k_w"])
    ip_k = rms(to_heads(ip_key), params["rms_ipk_w"])
    v_img = jnp.transpose(v_in, (0, 2, 1, 3))
    ip_v = to_heads(ip_value)

    k = jnp.concatenate([k_img, ip_k], axis=2)
    v = jnp.concatenate([v_img, ip_v], axis=2)
    scores = jnp.einsum("bhqd,bhkd->bhqk", q, k) / math.sqrt(head_dim)
    p = jax.nn.softmax(scores, axis=-1)
    out = jnp.einsum("bhqk,bhkd->bhqd", p, v)
    B, Hn, Lq, d = out.shape
    return out.transpose(0, 2, 1, 3).reshape(B, Lq, Hn * d)


def _make_inputs(key, B, n_heads, head_dim, D_ip, L_ip, L_q, L_k, T_dim):
    hidden = n_heads * head_dim
    ks = jax.random.split(key, 5)
    ip_hidden_states = jax.random.normal(ks[0], (B, L_ip, D_ip), jnp.float32)
    img_query = jax.random.normal(ks[1], (B, L_q, hidden), jnp.float32)
    img_key = jax.random.normal(ks[2], (B, L_k, hidden), jnp.float32)
    img_value = jax.random.normal(ks[3], (B, L_k, n_heads, head_dim), jnp.float32)
    t_emb = jax.random.normal(ks[4], (B, T_dim), jnp.float32)
    return ip_hidden_states, img_query, img_key, img_value, t_emb


if __name__ == "__main__":
    B, n_heads, head_dim = 2, 4, 32
    hidden = n_heads * head_dim          # 128 -> lane-dense kernel I/O
    D_ip = 64                            # ip_hidden_states_dim
    L_ip, L_q, L_k = 8, 16, 16
    T_dim = 64                           # timesteps_emb_dim (small for the demo)

    key = jax.random.PRNGKey(0)
    k_in, k_par, k_in2 = jax.random.split(key, 3)
    kp = jax.random.split(k_par, 7)

    # Deterministic synthetic parameters (torch conventions: Linear.weight = (out, in))
    params = {
        "w_emb": 0.05 * jax.random.normal(kp[0], (2 * D_ip, T_dim), jnp.float32),
        "b_emb": 0.05 * jax.random.normal(kp[1], (2 * D_ip,), jnp.float32),
        "w_k_ip": 0.05 * jax.random.normal(kp[2], (hidden, D_ip), jnp.float32),
        "w_v_ip": 0.05 * jax.random.normal(kp[3], (hidden, D_ip), jnp.float32),
        "rms_q_w": 1.0 + 0.1 * jax.random.normal(kp[4], (head_dim,), jnp.float32),
        "rms_k_w": 1.0 + 0.1 * jax.random.normal(kp[5], (head_dim,), jnp.float32),
        "rms_ipk_w": 1.0 + 0.1 * jax.random.normal(kp[6], (head_dim,), jnp.float32),
    }

    (ip_hidden_states, img_query, img_key, img_value,
     t_emb) = _make_inputs(k_in, B, n_heads, head_dim, D_ip, L_ip, L_q, L_k, T_dim)
    ref = reference_forward(ip_hidden_states, img_query, img_key, img_value,
                            t_emb, params, n_heads)

    # --- f32 compute path, single tile: algorithmic correctness (tight tol) ---
    prep32 = prepare_params(params, head_dim, jnp.float32)
    out32 = ip_attn_forward(ip_hidden_states, img_query, img_key, img_value,
                            t_emb, prep32, n_heads, compute_dtype=jnp.float32)
    out32 = jax.block_until_ready(out32)
    assert out32.shape == (B, L_q, hidden)
    assert jnp.allclose(out32, ref, atol=2e-4, rtol=2e-4), \
        float(jnp.max(jnp.abs(out32 - ref)))

    # --- bf16 MXU fast path (production): sanity check vs the f32 reference ---
    prep16 = prepare_params(params, head_dim, jnp.bfloat16)
    out16 = ip_attn_forward(ip_hidden_states, img_query, img_key, img_value,
                            t_emb, prep16, n_heads, compute_dtype=jnp.bfloat16)
    out16 = jax.block_until_ready(out16)
    assert out16.shape == (B, L_q, hidden)
    assert jnp.allclose(out16, ref, atol=2e-1, rtol=2e-1), \
        float(jnp.max(jnp.abs(out16 - ref)))

    # --- tiled path: multiple q/k tiles exercising the online (flash) softmax ---
    L_q2, L_k2 = 64, 64
    (ip2, q2, k2, v2, t2) = _make_inputs(k_in2, B, n_heads, head_dim,
                                         D_ip, L_ip, L_q2, L_k2, T_dim)
    ref2 = reference_forward(ip2, q2, k2, v2, t2, params, n_heads)
    out2 = ip_attn_forward(ip2, q2, k2, v2, t2, prep32, n_heads,
                           compute_dtype=jnp.float32, q_tile=16, k_tile=16)
    out2 = jax.block_until_ready(out2)
    assert out2.shape == (B, L_q2, hidden)
    assert jnp.allclose(out2, ref2, atol=2e-4, rtol=2e-4), \
        float(jnp.max(jnp.abs(out2 - ref2)))

    print("KERNEL_OK")
</pallas_src>

<mosaic_0001>
module attributes {stable_mosaic.version = 11 : i64} {
  func.func @fused_ip_attn_kernel(%arg0: i32, %arg1: i32, %arg2: i32, %arg3: memref<1x8x64xf32, #tpu.memory_space<vmem>>, %arg4: memref<1x1x64xf32, #tpu.memory_space<vmem>>, %arg5: memref<1x1x64xf32, #tpu.memory_space<vmem>>, %arg6: memref<64x256xf32, #tpu.memory_space<vmem>>, %arg7: memref<1x16x128xf32, #tpu.memory_space<vmem>>, %arg8: memref<1x16x128xf32, #tpu.memory_space<vmem>>, %arg9: memref<1x16x128xf32, #tpu.memory_space<vmem>>, %arg10: memref<1x32xf32, #tpu.memory_space<vmem>>, %arg11: memref<1x32xf32, #tpu.memory_space<vmem>>, %arg12: memref<1x32xf32, #tpu.memory_space<vmem>>, %arg13: memref<1x16x128xf32, #tpu.memory_space<vmem>>, %arg14: memref<16x128xf32, #tpu.memory_space<vmem>>, %arg15: memref<8x256xf32, #tpu.memory_space<vmem>>, %arg16: memref<4x16x1xf32, #tpu.memory_space<vmem>>, %arg17: memref<4x16x1xf32, #tpu.memory_space<vmem>>, %arg18: memref<16x128xf32, #tpu.memory_space<vmem>>) attributes {dimension_semantics = [#tpu.dimension_semantics<parallel>, #tpu.dimension_semantics<parallel>, #tpu.dimension_semantics<arbitrary>], iteration_bounds = array<i64: 2, 1, 1>, scalar_prefetch = 0 : i64, scratch_operands = 5 : i64, tpu.core_type = #tpu.core_type<tc>, window_params = [{transform_indices = @transform_0, window_bounds = array<i64: 1, 8, 64>}, {transform_indices = @transform_1, window_bounds = array<i64: 1, 1, 64>}, {transform_indices = @transform_2, window_bounds = array<i64: 1, 1, 64>}, {pipeline_mode = #tpu.pipeline_mode<synchronous>, transform_indices = @transform_3, window_bounds = array<i64: 64, 256>}, {transform_indices = @transform_4, window_bounds = array<i64: 1, 16, 128>}, {transform_indices = @transform_5, window_bounds = array<i64: 1, 16, 128>}, {transform_indices = @transform_6, window_bounds = array<i64: 1, 16, 128>}, {pipeline_mode = #tpu.pipeline_mode<synchronous>, transform_indices = @transform_7, window_bounds = array<i64: 1, 32>}, {pipeline_mode = #tpu.pipeline_mode<synchronous>, transform_indices = @transform_8, window_bounds = array<i64: 1, 32>}, {pipeline_mode = #tpu.pipeline_mode<synchronous>, transform_indices = @transform_9, window_bounds = array<i64: 1, 32>}, {transform_indices = @transform_10, window_bounds = array<i64: 1, 16, 128>}]} {
    %c0 = arith.constant 0 : index
    %c0_0 = arith.constant 0 : index
    %0 = vector.load %arg10[%c0, %c0_0] : memref<1x32xf32, #tpu.memory_space<vmem>>, vector<1x32xf32>
    %c0_1 = arith.constant 0 : index
    %c0_2 = arith.constant 0 : index
    %1 = vector.load %arg11[%c0_1, %c0_2] : memref<1x32xf32, #tpu.memory_space<vmem>>, vector<1x32xf32>
    %c0_3 = arith.constant 0 : index
    %c0_4 = arith.constant 0 : index
    %2 = vector.load %arg12[%c0_3, %c0_4] : memref<1x32xf32, #tpu.memory_space<vmem>>, vector<1x32xf32>
    %c0_i32 = arith.constant 0 : i32
    %3 = arith.cmpi eq, %arg2, %c0_i32 : i32
    %4 = arith.extui %3 : i1 to i32
    %c0_i32_5 = arith.constant 0 : i32
    %5 = arith.cmpi ne, %4, %c0_i32_5 : i32
    scf.if %5 {
      %cst_107 = arith.constant 0xFF800000 : f32
      %189 = vector.broadcast %cst_107 : f32 to vector<4x16x1xf32>
      %c0_108 = arith.constant 0 : index
      %c0_109 = arith.constant 0 : index
      %c0_110 = arith.constant 0 : index
      %190 = vector.load %arg16[%c0_108, %c0_109, %c0_110] : memref<4x16x1xf32, #tpu.memory_space<vmem>>, vector<4x16x1xf32>
      tpu.vector_store %arg16[%c0_108, %c0_109, %c0_110], %189 {strides = array<i32>} : memref<4x16x1xf32, #tpu.memory_space<vmem>>, vector<4x16x1xf32>,
      %cst_111 = arith.constant 0.000000e+00 : f32
      %191 = vector.broadcast %cst_111 : f32 to vector<4x16x1xf32>
      %c0_112 = arith.constant 0 : index
      %c0_113 = arith.constant 0 : index
      %c0_114 = arith.constant 0 : index
      %192 = vector.load %arg17[%c0_112, %c0_113, %c0_114] : memref<4x16x1xf32, #tpu.memory_space<vmem>>, vector<4x16x1xf32>
      tpu.vector_store %arg17[%c0_112, %c0_113, %c0_114], %191 {strides = array<i32>} : memref<4x16x1xf32, #tpu.memory_space<vmem>>, vector<4x16x1xf32>,
      %cst_115 = arith.constant 0.000000e+00 : f32
      %193 = vector.broadcast %cst_115 : f32 to vector<16x128xf32>
      %c0_116 = arith.constant 0 : index
      %c0_117 = arith.constant 0 : index
      %194 = vector.load %arg18[%c0_116, %c0_117] : memref<16x128xf32, #tpu.memory_space<vmem>>, vector<16x128xf32>
      tpu.vector_store %arg18[%c0_116, %c0_117], %193 {strides = array<i32>} : memref<16x128xf32, #tpu.memory_space<vmem>>, vector<16x128xf32>,
      %c0_118 = arith.constant 0 : index
      %c0_119 = arith.constant 0 : index
      %c0_120 = arith.constant 0 : index
      %195 = vector.load %arg3[%c0_118, %c0_119, %c0_120] : memref<1x8x64xf32, #tpu.memory_space<vmem>>, vector<1x8x64xf32>
      %196 = vector.shape_cast %195 : vector<1x8x64xf32> to vector<8x64xf32>
      %cst_121 = arith.constant dense<0.000000e+00> : vector<8xf32>
      %197 = vector.multi_reduction <add>, %196, %cst_121 [1] : vector<8x64xf32> to vector<8xf32>
      %198 = vector.shape_cast %197 : vector<8xf32> to vector<8x1xf32>
      %cst_122 = arith.constant 6.400000e+01 : f32
      %199 = vector.broadcast %cst_122 : f32 to vector<8x1xf32>
      %200 = arith.divf %198, %199 : vector<8x1xf32>
      %201 = vector.broadcast %200 : vector<8x1xf32> to vector<8x64xf32>
      %202 = arith.subf %196, %201 : vector<8x64xf32>
      %203 = arith.mulf %202, %202 : vector<8x64xf32>
      %cst_123 = arith.constant dense<0.000000e+00> : vector<8xf32>
      %204 = vector.multi_reduction <add>, %203, %cst_123 [1] : vector<8x64xf32> to vector<8xf32>
      %205 = vector.shape_cast %204 : vector<8xf32> to vector<8x1xf32>
      %cst_124 = arith.constant 6.400000e+01 : f32
      %206 = vector.broadcast %cst_124 : f32 to vector<8x1xf32>
      %207 = arith.divf %205, %206 : vector<8x1xf32>
      %208 = vector.broadcast %200 : vector<8x1xf32> to vector<8x64xf32>
      %209 = arith.subf %196, %208 : vector<8x64xf32>
      %cst_125 = arith.constant 9.99999997E-7 : f32
      %210 = vector.broadcast %cst_125 : f32 to vector<8x1xf32>
      %211 = arith.addf %207, %210 : vector<8x1xf32>
      %212 = math.rsqrt %211 : vector<8x1xf32>
      %213 = vector.broadcast %212 : vector<8x1xf32> to vector<8x64xf32>
      %214 = arith.mulf %209, %213 : vector<8x64xf32>
      %c0_126 = arith.constant 0 : index
      %c0_127 = arith.constant 0 : index
      %c0_128 = arith.constant 0 : index
      %215 = vector.load %arg4[%c0_126, %c0_127, %c0_128] : memref<1x1x64xf32, #tpu.memory_space<vmem>>, vector<1x1x64xf32>
      %216 = vector.shape_cast %215 : vector<1x1x64xf32> to vector<1x64xf32>
      %cst_129 = arith.constant 1.000000e+00 : f32
      %217 = vector.broadcast %cst_129 : f32 to vector<1x64xf32>
      %218 = arith.addf %217, %216 : vector<1x64xf32>
      %219 = vector.broadcast %218 : vector<1x64xf32> to vector<8x64xf32>
      %220 = arith.mulf %214, %219 : vector<8x64xf32>
      %c0_130 = arith.constant 0 : index
      %c0_131 = arith.constant 0 : index
      %c0_132 = arith.constant 0 : index
      %221 = vector.load %arg5[%c0_130, %c0_131, %c0_132] : memref<1x1x64xf32, #tpu.memory_space<vmem>>, vector<1x1x64xf32>
      %222 = vector.shape_cast %221 : vector<1x1x64xf32> to vector<1x64xf32>
      %223 = vector.broadcast %222 : vector<1x64xf32> to vector<8x64xf32>
      %224 = arith.addf %220, %223 : vector<8x64xf32>
      %c0_133 = arith.constant 0 : index
      %c0_134 = arith.constant 0 : index
      %225 = vector.load %arg6[%c0_133, %c0_134] : memref<64x256xf32, #tpu.memory_space<vmem>>, vector<64x256xf32>
      %cst_135 = arith.constant dense<0.000000e+00> : vector<8x256xf32>
      %226 = tpu.matmul %224, %225, %cst_135 {dimension_numbers = #tpu.dot_dimension_numbers<[1], [0], [0], [1], [0, 0, 1, 1], [], []>} : vector<8x64xf32>, vector<64x256xf32>, vector<8x256xf32> -> vector<8x256xf32>
      %c0_136 = arith.constant 0 : index
      %c0_137 = arith.constant 0 : index
      %227 = vector.load %arg15[%c0_136, %c0_137] : memref<8x256xf32, #tpu.memory_space<vmem>>, vector<8x256xf32>
      tpu.vector_store %arg15[%c0_136, %c0_137], %226 {strides = array<i32>} : memref<8x256xf32, #tpu.memory_space<vmem>>, vector<8x256xf32>,
      %c0_138 = arith.constant 0 : index
      %c0_139 = arith.constant 0 : index
      %c0_140 = arith.constant 0 : index
      %228 = vector.load %arg7[%c0_138, %c0_139, %c0_140] : memref<1x16x128xf32, #tpu.memory_space<vmem>>, vector<1x16x128xf32>
      %229 = vector.shape_cast %228 : vector<1x16x128xf32> to vector<16x128xf32>
      %230 = vector.extract_strided_slice %229 {offsets = [0, 0], sizes = [16, 32], strides = [1, 1]} : vector<16x128xf32> to vector<16x32xf32>
      %231 = arith.mulf %230, %230 : vector<16x32xf32>
      %cst_141 = arith.constant dense<0.000000e+00> : vector<16xf32>
      %232 = vector.multi_reduction <add>, %231, %cst_141 [1] : vector<16x32xf32> to vector<16xf32>
      %233 = vector.shape_cast %232 : vector<16xf32> to vector<16x1xf32>
      %cst_142 = arith.constant 3.200000e+01 : f32
      %234 = vector.broadcast %cst_142 : f32 to vector<16x1xf32>
      %235 = arith.divf %233, %234 : vector<16x1xf32>
      %cst_143 = arith.constant 9.99999997E-7 : f32
      %236 = vector.broadcast %cst_143 : f32 to vector<16x1xf32>
      %237 = arith.addf %235, %236 : vector<16x1xf32>
      %238 = math.rsqrt %237 : vector<16x1xf32>
      %239 = vector.broadcast %238 : vector<16x1xf32> to vector<16x32xf32>
      %240 = arith.mulf %230, %239 : vector<16x32xf32>
      %241 = vector.broadcast %0 : vector<1x32xf32> to vector<16x32xf32>
      %242 = arith.mulf %240, %241 : vector<16x32xf32>
      %cst_144 = arith.constant 0.176776692 : f32
      %243 = vector.broadcast %cst_144 : f32 to vector<16x32xf32>
      %244 = arith.mulf %242, %243 : vector<16x32xf32>
      %c0_145 = arith.constant 0 : index
      %c0_146 = arith.constant 0 : index
      %245 = vector.load %arg14[%c0_145, %c0_146] : memref<16x128xf32, #tpu.memory_space<vmem>>, vector<16x32xf32>
      tpu.vector_store %arg14[%c0_145, %c0_146], %244 {strides = array<i32>} : memref<16x128xf32, #tpu.memory_space<vmem>>, vector<16x32xf32>,
      %246 = vector.extract_strided_slice %229 {offsets = [0, 32], sizes = [16, 32], strides = [1, 1]} : vector<16x128xf32> to vector<16x32xf32>
      %247 = arith.mulf %246, %246 : vector<16x32xf32>
      %cst_147 = arith.constant dense<0.000000e+00> : vector<16xf32>
      %248 = vector.multi_reduction <add>, %247, %cst_147 [1] : vector<16x32xf32> to vector<16xf32>
      %249 = vector.shape_cast %248 : vector<16xf32> to vector<16x1xf32>
      %cst_148 = arith.constant 3.200000e+01 : f32
      %250 = vector.broadcast %cst_148 : f32 to vector<16x1xf32>
      %251 = arith.divf %249, %250 : vector<16x1xf32>
      %cst_149 = arith.constant 9.99999997E-7 : f32
      %252 = vector.broadcast %cst_149 : f32 to vector<16x1xf32>
      %253 = arith.addf %251, %252 : vector<16x1xf32>
      %254 = math.rsqrt %253 : vector<16x1xf32>
      %255 = vector.broadcast %254 : vector<16x1xf32> to vector<16x32xf32>
      %256 = arith.mulf %246, %255 : vector<16x32xf32>
      %257 = vector.broadcast %0 : vector<1x32xf32> to vector<16x32xf32>
      %258 = arith.mulf %256, %257 : vector<16x32xf32>
      %cst_150 = arith.constant 0.176776692 : f32
      %259 = vector.broadcast %cst_150 : f32 to vector<16x32xf32>
      %260 = arith.mulf %258, %259 : vector<16x32xf32>
      %c0_151 = arith.constant 0 : index
      %c32_152 = arith.constant 32 : index
      %261 = vector.load %arg14[%c0_151, %c32_152] : memref<16x128xf32, #tpu.memory_space<vmem>>, vector<16x32xf32>
      tpu.vector_store %arg14[%c0_151, %c32_152], %260 {strides = array<i32>} : memref<16x128xf32, #tpu.memory_space<vmem>>, vector<16x32xf32>,
      %262 = vector.extract_strided_slice %229 {offsets = [0, 64], sizes = [16, 32], strides = [1, 1]} : vector<16x128xf32> to vector<16x32xf32>
      %263 = arith.mulf %262, %262 : vector<16x32xf32>
      %cst_153 = arith.constant dense<0.000000e+00> : vector<16xf32>
      %264 = vector.multi_reduction <add>, %263, %cst_153 [1] : vector<16x32xf32> to vector<16xf32>
      %265 = vector.shape_cast %264 : vector<16xf32> to vector<16x1xf32>
      %cst_154 = arith.constant 3.200000e+01 : f32
      %266 = vector.broadcast %cst_154 : f32 to vector<16x1xf32>
      %267 = arith.divf %265, %266 : vector<16x1xf32>
      %cst_155 = arith.constant 9.99999997E-7 : f32
      %268 = vector.broadcast %cst_155 : f32 to vector<16x1xf32>
      %269 = arith.addf %267, %268 : vector<16x1xf32>
      %270 = math.rsqrt %269 : vector<16x1xf32>
      %271 = vector.broadcast %270 : vector<16x1xf32> to vector<16x32xf32>
      %272 = arith.mulf %262, %271 : vector<16x32xf32>
      %273 = vector.broadcast %0 : vector<1x32xf32> to vector<16x32xf32>
      %274 = arith.mulf %272, %273 : vector<16x32xf32>
      %cst_156 = arith.constant 0.176776692 : f32
      %275 = vector.broadcast %cst_156 : f32 to vector<16x32xf32>
      %276 = arith.mulf %274, %275 : vector<16x32xf32>
      %c0_157 = arith.constant 0 : index
      %c64_158 = arith.constant 64 : index
      %277 = vector.load %arg14[%c0_157, %c64_158] : memref<16x128xf32, #tpu.memory_space<vmem>>, vector<16x32xf32>
      tpu.vector_store %arg14[%c0_157, %c64_158], %276 {strides = array<i32>} : memref<16x128xf32, #tpu.memory_space<vmem>>, vector<16x32xf32>,
      %278 = vector.extract_strided_slice %229 {offsets = [0, 96], sizes = [16, 32], strides = [1, 1]} : vector<16x128xf32> to vector<16x32xf32>
      %279 = arith.mulf %278, %278 : vector<16x32xf32>
      %cst_159 = arith.constant dense<0.000000e+00> : vector<16xf32>
      %280 = vector.multi_reduction <add>, %279, %cst_159 [1] : vector<16x32xf32> to vector<16xf32>
      %281 = vector.shape_cast %280 : vector<16xf32> to vector<16x1xf32>
      %cst_160 = arith.constant 3.200000e+01 : f32
      %282 = vector.broadcast %cst_160 : f32 to vector<16x1xf32>
      %283 = arith.divf %281, %282 : vector<16x1xf32>
      %cst_161 = arith.constant 9.99999997E-7 : f32
      %284 = vector.broadcast %cst_161 : f32 to vector<16x1xf32>
      %285 = arith.addf %283, %284 : vector<16x1xf32>
      %286 = math.rsqrt %285 : vector<16x1xf32>
      %287 = vector.broadcast %286 : vector<16x1xf32> to vector<16x32xf32>
      %288 = arith.mulf %278, %287 : vector<16x32xf32>
      %289 = vector.broadcast %0 : vector<1x32xf32> to vector<16x32xf32>
      %290 = arith.mulf %288, %289 : vector<16x32xf32>
      %cst_162 = arith.constant 0.176776692 : f32
      %291 = vector.broadcast %cst_162 : f32 to vector<16x32xf32>
      %292 = arith.mulf %290, %291 : vector<16x32xf32>
      %c0_163 = arith.constant 0 : index
      %c96_164 = arith.constant 96 : index
      %293 = vector.load %arg14[%c0_163, %c96_164] : memref<16x128xf32, #tpu.memory_space<vmem>>, vector<16x32xf32>
      tpu.vector_store %arg14[%c0_163, %c96_164], %292 {strides = array<i32>} : memref<16x128xf32, #tpu.memory_space<vmem>>, vector<16x32xf32>,
    } else {
    }
    %c0_6 = arith.constant 0 : index
    %c0_7 = arith.constant 0 : index
    %c0_8 = arith.constant 0 : index
    %6 = vector.load %arg8[%c0_6, %c0_7, %c0_8] : memref<1x16x128xf32, #tpu.memory_space<vmem>>, vector<1x16x128xf32>
    %7 = vector.shape_cast %6 : vector<1x16x128xf32> to vector<16x128xf32>
    %c0_9 = arith.constant 0 : index
    %c0_10 = arith.constant 0 : index
    %c0_11 = arith.constant 0 : index
    %8 = vector.load %arg9[%c0_9, %c0_10, %c0_11] : memref<1x16x128xf32, #tpu.memory_space<vmem>>, vector<1x16x128xf32>
    %9 = vector.shape_cast %8 : vector<1x16x128xf32> to vector<16x128xf32>
    %c0_12 = arith.constant 0 : index
    %c0_13 = arith.constant 0 : index
    %10 = vector.load %arg14[%c0_12, %c0_13] : memref<16x128xf32, #tpu.memory_space<vmem>>, vector<16x32xf32>
    %11 = vector.extract_strided_slice %7 {offsets = [0, 0], sizes = [16, 32], strides = [1, 1]} : vector<16x128xf32> to vector<16x32xf32>
    %12 = arith.mulf %11, %11 : vector<16x32xf32>
    %cst = arith.constant dense<0.000000e+00> : vector<16xf32>
    %13 = vector.multi_reduction <add>, %12, %cst [1] : vector<16x32xf32> to vector<16xf32>
    %14 = vector.shape_cast %13 : vector<16xf32> to vector<16x1xf32>
    %cst_14 = arith.constant 3.200000e+01 : f32
    %15 = vector.broadcast %cst_14 : f32 to vector<16x1xf32>
    %16 = arith.divf %14, %15 : vector<16x1xf32>
    %cst_15 = arith.constant 9.99999997E-7 : f32
    %17 = vector.broadcast %cst_15 : f32 to vector<16x1xf32>
    %18 = arith.addf %16, %17 : vector<16x1xf32>
    %19 = math.rsqrt %18 : vector<16x1xf32>
    %20 = vector.broadcast %19 : vector<16x1xf32> to vector<16x32xf32>
    %21 = arith.mulf %11, %20 : vector<16x32xf32>
    %22 = vector.broadcast %1 : vector<1x32xf32> to vector<16x32xf32>
    %23 = arith.mulf %21, %22 : vector<16x32xf32>
    %cst_16 = arith.constant dense<0.000000e+00> : vector<16x16xf32>
    %24 = tpu.matmul %10, %23, %cst_16 {dimension_numbers = #tpu.dot_dimension_numbers<[1], [1], [0], [0], [0, 0, 1, 0], [], []>} : vector<16x32xf32>, vector<16x32xf32>, vector<16x16xf32> -> vector<16x16xf32>
    %c0_17 = arith.constant 0 : index
    %c0_18 = arith.constant 0 : index
    %c0_19 = arith.constant 0 : index
    %25 = vector.load %arg16[%c0_17, %c0_18, %c0_19] : memref<4x16x1xf32, #tpu.memory_space<vmem>>, vector<1x16x1xf32>
    %26 = vector.shape_cast %25 : vector<1x16x1xf32> to vector<16x1xf32>
    %cst_20 = arith.constant dense<0xFF800000> : vector<16xf32>
    %27 = vector.multi_reduction <maximumf>, %24, %cst_20 [1] : vector<16x16xf32> to vector<16xf32>
    %28 = vector.shape_cast %27 : vector<16xf32> to vector<16x1xf32>
    %29 = arith.maximumf %26, %28 : vector<16x1xf32>
    %30 = arith.subf %26, %29 : vector<16x1xf32>
    %31 = math.exp %30 : vector<16x1xf32>
    %32 = vector.broadcast %29 : vector<16x1xf32> to vector<16x16xf32>
    %33 = arith.subf %24, %32 : vector<16x16xf32>
    %34 = math.exp %33 : vector<16x16xf32>
    %c0_21 = arith.constant 0 : index
    %c0_22 = arith.constant 0 : index
    %c0_23 = arith.constant 0 : index
    %35 = vector.load %arg17[%c0_21, %c0_22, %c0_23] : memref<4x16x1xf32, #tpu.memory_space<vmem>>, vector<1x16x1xf32>
    %36 = vector.shape_cast %35 : vector<1x16x1xf32> to vector<16x1xf32>
    %37 = arith.mulf %31, %36 : vector<16x1xf32>
    %cst_24 = arith.constant dense<0.000000e+00> : vector<16xf32>
    %38 = vector.multi_reduction <add>, %34, %cst_24 [1] : vector<16x16xf32> to vector<16xf32>
    %39 = vector.shape_cast %38 : vector<16xf32> to vector<16x1xf32>
    %40 = arith.addf %37, %39 : vector<16x1xf32>
    %c0_25 = arith.constant 0 : index
    %c0_26 = arith.constant 0 : index
    %c0_27 = arith.constant 0 : index
    %41 = vector.load %arg17[%c0_25, %c0_26, %c0_27] : memref<4x16x1xf32, #tpu.memory_space<vmem>>, vector<1x16x1xf32>
    %42 = vector.shape_cast %41 : vector<1x16x1xf32> to vector<16x1xf32>
    %43 = vector.shape_cast %40 : vector<16x1xf32> to vector<1x16x1xf32>
    tpu.vector_store %arg17[%c0_25, %c0_26, %c0_27], %43 {strides = array<i32>} : memref<4x16x1xf32, #tpu.memory_space<vmem>>, vector<1x16x1xf32>,
    %44 = vector.extract_strided_slice %9 {offsets = [0, 0], sizes = [16, 32], strides = [1, 1]} : vector<16x128xf32> to vector<16x32xf32>
    %cst_28 = arith.constant dense<0.000000e+00> : vector<16x32xf32>
    %45 = tpu.matmul %34, %44, %cst_28 {dimension_numbers = #tpu.dot_dimension_numbers<[1], [0], [0], [1], [0, 0, 1, 1], [], []>} : vector<16x16xf32>, vector<16x32xf32>, vector<16x32xf32> -> vector<16x32xf32>
    %c0_29 = arith.constant 0 : index
    %c0_30 = arith.constant 0 : index
    %46 = vector.load %arg18[%c0_29, %c0_30] : memref<16x128xf32, #tpu.memory_space<vmem>>, vector<16x32xf32>
    %47 = vector.broadcast %31 : vector<16x1xf32> to vector<16x32xf32>
    %48 = arith.mulf %47, %46 : vector<16x32xf32>
    %49 = arith.addf %48, %45 : vector<16x32xf32>
    %c0_31 = arith.constant 0 : index
    %c0_32 = arith.constant 0 : index
    %50 = vector.load %arg18[%c0_31, %c0_32] : memref<16x128xf32, #tpu.memory_space<vmem>>, vector<16x32xf32>
    tpu.vector_store %arg18[%c0_31, %c0_32], %49 {strides = array<i32>} : memref<16x128xf32, #tpu.memory_space<vmem>>, vector<16x32xf32>,
    %c0_33 = arith.constant 0 : index
    %c0_34 = arith.constant 0 : index
    %c0_35 = arith.constant 0 : index
    %51 = vector.load %arg16[%c0_33, %c0_34, %c0_35] : memref<4x16x1xf32, #tpu.memory_space<vmem>>, vector<1x16x1xf32>
    %52 = vector.shape_cast %51 : vector<1x16x1xf32> to vector<16x1xf32>
    %53 = vector.shape_cast %29 : vector<16x1xf32> to vector<1x16x1xf32>
    tpu.vector_store %arg16[%c0_33, %c0_34, %c0_35], %53 {strides = array<i32>} : memref<4x16x1xf32, #tpu.memory_space<vmem>>, vector<1x16x1xf32>,
    %c0_36 = arith.constant 0 : index
    %c32 = arith.constant 32 : index
    %54 = vector.load %arg14[%c0_36, %c32] : memref<16x128xf32, #tpu.memory_space<vmem>>, vector<16x32xf32>
    %55 = vector.extract_strided_slice %7 {offsets = [0, 32], sizes = [16, 32], strides = [1, 1]} : vector<16x128xf32> to vector<16x32xf32>
    %56 = arith.mulf %55, %55 : vector<16x32xf32>
    %cst_37 = arith.constant dense<0.000000e+00> : vector<16xf32>
    %57 = vector.multi_reduction <add>, %56, %cst_37 [1] : vector<16x32xf32> to vector<16xf32>
    %58 = vector.shape_cast %57 : vector<16xf32> to vector<16x1xf32>
    %cst_38 = arith.constant 3.200000e+01 : f32
    %59 = vector.broadcast %cst_38 : f32 to vector<16x1xf32>
    %60 = arith.divf %58, %59 : vector<16x1xf32>
    %cst_39 = arith.constant 9.99999997E-7 : f32
    %61 = vector.broadcast %cst_39 : f32 to vector<16x1xf32>
    %62 = arith.addf %60, %61 : vector<16x1xf32>
    %63 = math.rsqrt %62 : vector<16x1xf32>
    %64 = vector.broadcast %63 : vector<16x1xf32> to vector<16x32xf32>
    %65 = arith.mulf %55, %64 : vector<16x32xf32>
    %66 = vector.broadcast %1 : vector<1x32xf32> to vector<16x32xf32>
    %67 = arith.mulf %65, %66 : vector<16x32xf32>
    %cst_40 = arith.constant dense<0.000000e+00> : vector<16x16xf32>
    %68 = tpu.matmul %54, %67, %cst_40 {dimension_numbers = #tpu.dot_dimension_numbers<[1], [1], [0], [0], [0, 0, 1, 0], [], []>} : vector<16x32xf32>, vector<16x32xf32>, vector<16x16xf32> -> vector<16x16xf32>
    %c1 = arith.constant 1 : index
    %c0_41 = arith.constant 0 : index
    %c0_42 = arith.constant 0 : index
    %69 = vector.load %arg16[%c1, %c0_41, %c0_42] : memref<4x16x1xf32, #tpu.memory_space<vmem>>, vector<1x16x1xf32>
    %70 = vector.shape_cast %69 : vector<1x16x1xf32> to vector<16x1xf32>
    %cst_43 = arith.constant dense<0xFF800000> : vector<16xf32>
    %71 = vector.multi_reduction <maximumf>, %68, %cst_43 [1] : vector<16x16xf32> to vector<16xf32>
    %72 = vector.shape_cast %71 : vector<16xf32> to vector<16x1xf32>
    %73 = arith.maximumf %70, %72 : vector<16x1xf32>
    %74 = arith.subf %70, %73 : vector<16x1xf32>
    %75 = math.exp %74 : vector<16x1xf32>
    %76 = vector.broadcast %73 : vector<16x1xf32> to vector<16x16xf32>
    %77 = arith.subf %68, %76 : vector<16x16xf32>
    %78 = math.exp %77 : vector<16x16xf32>
    %c1_44 = arith.constant 1 : index
    %c0_45 = arith.constant 0 : index
    %c0_46 = arith.constant 0 : index
    %79 = vector.load %arg17[%c1_44, %c0_45, %c0_46] : memref<4x16x1xf32, #tpu.memory_space<vmem>>, vector<1x16x1xf32>
    %80 = vector.shape_cast %79 : vector<1x16x1xf32> to vector<16x1xf32>
    %81 = arith.mulf %75, %80 : vector<16x1xf32>
    %cst_47 = arith.constant dense<0.000000e+00> : vector<16xf32>
    %82 = vector.multi_reduction <add>, %78, %cst_47 [1] : vector<16x16xf32> to vector<16xf32>
    %83 = vector.shape_cast %82 : vector<16xf32> to vector<16x1xf32>
    %84 = arith.addf %81, %83 : vector<16x1xf32>
    %c1_48 = arith.constant 1 : index
    %c0_49 = arith.constant 0 : index
    %c0_50 = arith.constant 0 : index
    %85 = vector.load %arg17[%c1_48, %c0_49, %c0_50] : memref<4x16x1xf32, #tpu.memory_space<vmem>>, vector<1x16x1xf32>
    %86 = vector.shape_cast %85 : vector<1x16x1xf32> to vector<16x1xf32>
    %87 = vector.shape_cast %84 : vector<16x1xf32> to vector<1x16x1xf32>
    tpu.vector_store %arg17[%c1_48, %c0_49, %c0_50], %87 {strides = array<i32>} : memref<4x16x1xf32, #tpu.memory_space<vmem>>, vector<1x16x1xf32>,
    %88 = vector.extract_strided_slice %9 {offsets = [0, 32], sizes = [16, 32], strides = [1, 1]} : vector<16x128xf32> to vector<16x32xf32>
    %cst_51 = arith.constant dense<0.000000e+00> : vector<16x32xf32>
    %89 = tpu.matmul %78, %88, %cst_51 {dimension_numbers = #tpu.dot_dimension_numbers<[1], [0], [0], [1], [0, 0, 1, 1], [], []>} : vector<16x16xf32>, vector<16x32xf32>, vector<16x32xf32> -> vector<16x32xf32>
    %c0_52 = arith.constant 0 : index
    %c32_53 = arith.constant 32 : index
    %90 = vector.load %arg18[%c0_52, %c32_53] : memref<16x128xf32, #tpu.memory_space<vmem>>, vector<16x32xf32>
    %91 = vector.broadcast %75 : vector<16x1xf32> to vector<16x32xf32>
    %92 = arith.mulf %91, %90 : vector<16x32xf32>
    %93 = arith.addf %92, %89 : vector<16x32xf32>
    %c0_54 = arith.constant 0 : index
    %c32_55 = arith.constant 32 : index
    %94 = vector.load %arg18[%c0_54, %c32_55] : memref<16x128xf32, #tpu.memory_space<vmem>>, vector<16x32xf32>
    tpu.vector_store %arg18[%c0_54, %c32_55], %93 {strides = array<i32>} : memref<16x128xf32, #tpu.memory_space<vmem>>, vector<16x32xf32>,
    %c1_56 = arith.constant 1 : index
    %c0_57 = arith.constant 0 : index
    %c0_58 = arith.constant 0 : index
    %95 = vector.load %arg16[%c1_56, %c0_57, %c0_58] : memref<4x16x1xf32, #tpu.memory_space<vmem>>, vector<1x16x1xf32>
    %96 = vector.shape_cast %95 : vector<1x16x1xf32> to vector<16x1xf32>
    %97 = vector.shape_cast %73 : vector<16x1xf32> to vector<1x16x1xf32>
    tpu.vector_store %arg16[%c1_56, %c0_57, %c0_58], %97 {strides = array<i32>} : memref<4x16x1xf32, #tpu.memory_space<vmem>>, vector<1x16x1xf32>,
    %c0_59 = arith.constant 0 : index
    %c64 = arith.constant 64 : index
    %98 = vector.load %arg14[%c0_59, %c64] : memref<16x128xf32, #tpu.memory_space<vmem>>, vector<16x32xf32>
    %99 = vector.extract_strided_slice %7 {offsets = [0, 64], sizes = [16, 32], strides = [1, 1]} : vector<16x128xf32> to vector<16x32xf32>
    %100 = arith.mulf %99, %99 : vector<16x32xf32>
    %cst_60 = arith.constant dense<0.000000e+00> : vector<16xf32>
    %101 = vector.multi_reduction <add>, %100, %cst_60 [1] : vector<16x32xf32> to vector<16xf32>
    %102 = vector.shape_cast %101 : vector<16xf32> to vector<16x1xf32>
    %cst_61 = arith.constant 3.200000e+01 : f32
    %103 = vector.broadcast %cst_61 : f32 to vector<16x1xf32>
    %104 = arith.divf %102, %103 : vector<16x1xf32>
    %cst_62 = arith.constant 9.99999997E-7 : f32
    %105 = vector.broadcast %cst_62 : f32 to vector<16x1xf32>
    %106 = arith.addf %104, %105 : vector<16x1xf32>
    %107 = math.rsqrt %106 : vector<16x1xf32>
    %108 = vector.broadcast %107 : vector<16x1xf32> to vector<16x32xf32>
    %109 = arith.mulf %99, %108 : vector<16x32xf32>
    %110 = vector.broadcast %1 : vector<1x32xf32> to vector<16x32xf32>
    %111 = arith.mulf %109, %110 : vector<16x32xf32>
    %cst_63 = arith.constant dense<0.000000e+00> : vector<16x16xf32>
    %112 = tpu.matmul %98, %111, %cst_63 {dimension_numbers = #tpu.dot_dimension_numbers<[1], [1], [0], [0], [0, 0, 1, 0], [], []>} : vector<16x32xf32>, vector<16x32xf32>, vector<16x16xf32> -> vector<16x16xf32>
    %c2 = arith.constant 2 : index
    %c0_64 = arith.constant 0 : index
    %c0_65 = arith.constant 0 : index
    %113 = vector.load %arg16[%c2, %c0_64, %c0_65] : memref<4x16x1xf32, #tpu.memory_space<vmem>>, vector<1x16x1xf32>
    %114 = vector.shape_cast %113 : vector<1x16x1xf32> to vector<16x1xf32>
    %cst_66 = arith.constant dense<0xFF800000> : vector<16xf32>
    %115 = vector.multi_reduction <maximumf>, %112, %cst_66 [1] : vector<16x16xf32> to vector<16xf32>
    %116 = vector.shape_cast %115 : vector<16xf32> to vector<16x1xf32>
    %117 = arith.maximumf %114, %116 : vector<16x1xf32>
    %118 = arith.subf %114, %117 : vector<16x1xf32>
    %119 = math.exp %118 : vector<16x1xf32>
    %120 = vector.broadcast %117 : vector<16x1xf32> to vector<16x16xf32>
    %121 = arith.subf %112, %120 : vector<16x16xf32>
    %122 = math.exp %121 : vector<16x16xf32>
    %c2_67 = arith.constant 2 : index
    %c0_68 = arith.constant 0 : index
    %c0_69 = arith.constant 0 : index
    %123 = vector.load %arg17[%c2_67, %c0_68, %c0_69] : memref<4x16x1xf32, #tpu.memory_space<vmem>>, vector<1x16x1xf32>
    %124 = vector.shape_cast %123 : vector<1x16x1xf32> to vector<16x1xf32>
    %125 = arith.mulf %119, %124 : vector<16x1xf32>
    %cst_70 = arith.constant dense<0.000000e+00> : vector<16xf32>
    %126 = vector.multi_reduction <add>, %122, %cst_70 [1] : vector<16x16xf32> to vector<16xf32>
    %127 = vector.shape_cast %126 : vector<16xf32> to vector<16x1xf32>
    %128 = arith.addf %125, %127 : vector<16x1xf32>
    %c2_71 = arith.constant 2 : index
    %c0_72 = arith.constant 0 : index
    %c0_73 = arith.constant 0 : index
    %129 = vector.load %arg17[%c2_71, %c0_72, %c0_73] : memref<4x16x1xf32, #tpu.memory_space<vmem>>, vector<1x16x1xf32>
    %130 = vector.shape_cast %129 : vector<1x16x1xf32> to vector<16x1xf32>
    %131 = vector.shape_cast %128 : vector<16x1xf32> to vector<1x16x1xf32>
    tpu.vector_store %arg17[%c2_71, %c0_72, %c0_73], %131 {strides = array<i32>} : memref<4x16x1xf32, #tpu.memory_space<vmem>>, vector<1x16x1xf32>,
    %132 = vector.extract_strided_slice %9 {offsets = [0, 64], sizes = [16, 32], strides = [1, 1]} : vector<16x128xf32> to vector<16x32xf32>
    %cst_74 = arith.constant dense<0.000000e+00> : vector<16x32xf32>
    %133 = tpu.matmul %122, %132, %cst_74 {dimension_numbers = #tpu.dot_dimension_numbers<[1], [0], [0], [1], [0, 0, 1, 1], [], []>} : vector<16x16xf32>, vector<16x32xf32>, vector<16x32xf32> -> vector<16x32xf32>
    %c0_75 = arith.constant 0 : index
    %c64_76 = arith.constant 64 : index
    %134 = vector.load %arg18[%c0_75, %c64_76] : memref<16x128xf32, #tpu.memory_space<vmem>>, vector<16x32xf32>
    %135 = vector.broadcast %119 : vector<16x1xf32> to vector<16x32xf32>
    %136 = arith.mulf %135, %134 : vector<16x32xf32>
    %137 = arith.addf %136, %133 : vector<16x32xf32>
    %c0_77 = arith.constant 0 : index
    %c64_78 = arith.constant 64 : index
    %138 = vector.load %arg18[%c0_77, %c64_78] : memref<16x128xf32, #tpu.memory_space<vmem>>, vector<16x32xf32>
    tpu.vector_store %arg18[%c0_77, %c64_78], %137 {strides = array<i32>} : memref<16x128xf32, #tpu.memory_space<vmem>>, vector<16x32xf32>,
    %c2_79 = arith.constant 2 : index
    %c0_80 = arith.constant 0 : index
    %c0_81 = arith.constant 0 : index
    %139 = vector.load %arg16[%c2_79, %c0_80, %c0_81] : memref<4x16x1xf32, #tpu.memory_space<vmem>>, vector<1x16x1xf32>
    %140 = vector.shape_cast %139 : vector<1x16x1xf32> to vector<16x1xf32>
    %141 = vector.shape_cast %117 : vector<16x1xf32> to vector<1x16x1xf32>
    tpu.vector_store %arg16[%c2_79, %c0_80, %c0_81], %141 {strides = array<i32>} : memref<4x16x1xf32, #tpu.memory_space<vmem>>, vector<1x16x1xf32>,
    %c0_82 = arith.constant 0 : index
    %c96 = arith.constant 96 : index
    %142 = vector.load %arg14[%c0_82, %c96] : memref<16x128xf32, #tpu.memory_space<vmem>>, vector<16x32xf32>
    %143 = vector.extract_strided_slice %7 {offsets = [0, 96], sizes = [16, 32], strides = [1, 1]} : vector<16x128xf32> to vector<16x32xf32>
    %144 = arith.mulf %143, %143 : vector<16x32xf32>
    %cst_83 = arith.constant dense<0.000000e+00> : vector<16xf32>
    %145 = vector.multi_reduction <add>, %144, %cst_83 [1] : vector<16x32xf32> to vector<16xf32>
    %146 = vector.shape_cast %145 : vector<16xf32> to vector<16x1xf32>
    %cst_84 = arith.constant 3.200000e+01 : f32
    %147 = vector.broadcast %cst_84 : f32 to vector<16x1xf32>
    %148 = arith.divf %146, %147 : vector<16x1xf32>
    %cst_85 = arith.constant 9.99999997E-7 : f32
    %149 = vector.broadcast %cst_85 : f32 to vector<16x1xf32>
    %150 = arith.addf %148, %149 : vector<16x1xf32>
    %151 = math.rsqrt %150 : vector<16x1xf32>
    %152 = vector.broadcast %151 : vector<16x1xf32> to vector<16x32xf32>
    %153 = arith.mulf %143, %152 : vector<16x32xf32>
    %154 = vector.broadcast %1 : vector<1x32xf32> to vector<16x32xf32>
    %155 = arith.mulf %153, %154 : vector<16x32xf32>
    %cst_86 = arith.constant dense<0.000000e+00> : vector<16x16xf32>
    %156 = tpu.matmul %142, %155, %cst_86 {dimension_numbers = #tpu.dot_dimension_numbers<[1], [1], [0], [0], [0, 0, 1, 0], [], []>} : vector<16x32xf32>, vector<16x32xf32>, vector<16x16xf32> -> vector<16x16xf32>
    %c3 = arith.constant 3 : index
    %c0_87 = arith.constant 0 : index
    %c0_88 = arith.constant 0 : index
    %157 = vector.load %arg16[%c3, %c0_87, %c0_88] : memref<4x16x1xf32, #tpu.memory_space<vmem>>, vector<1x16x1xf32>
    %158 = vector.shape_cast %157 : vector<1x16x1xf32> to vector<16x1xf32>
    %cst_89 = arith.constant dense<0xFF800000> : vector<16xf32>
    %159 = vector.multi_reduction <maximumf>, %156, %cst_89 [1] : vector<16x16xf32> to vector<16xf32>
    %160 = vector.shape_cast %159 : vector<16xf32> to vector<16x1xf32>
    %161 = arith.maximumf %158, %160 : vector<16x1xf32>
    %162 = arith.subf %158, %161 : vector<16x1xf32>
    %163 = math.exp %162 : vector<16x1xf32>
    %164 = vector.broadcast %161 : vector<16x1xf32> to vector<16x16xf32>
    %165 = arith.subf %156, %164 : vector<16x16xf32>
    %166 = math.exp %165 : vector<16x16xf32>
    %c3_90 = arith.constant 3 : index
    %c0_91 = arith.constant 0 : index
    %c0_92 = arith.constant 0 : index
    %167 = vector.load %arg17[%c3_90, %c0_91, %c0_92] : memref<4x16x1xf32, #tpu.memory_space<vmem>>, vector<1x16x1xf32>
    %168 = vector.shape_cast %167 : vector<1x16x1xf32> to vector<16x1xf32>
    %169 = arith.mulf %163, %168 : vector<16x1xf32>
    %cst_93 = arith.constant dense<0.000000e+00> : vector<16xf32>
    %170 = vector.multi_reduction <add>, %166, %cst_93 [1] : vector<16x16xf32> to vector<16xf32>
    %171 = vector.shape_cast %170 : vector<16xf32> to vector<16x1xf32>
    %172 = arith.addf %169, %171 : vector<16x1xf32>
    %c3_94 = arith.constant 3 : index
    %c0_95 = arith.constant 0 : index
    %c0_96 = arith.constant 0 : index
    %173 = vector.load %arg17[%c3_94, %c0_95, %c0_96] : memref<4x16x1xf32, #tpu.memory_space<vmem>>, vector<1x16x1xf32>
    %174 = vector.shape_cast %173 : vector<1x16x1xf32> to vector<16x1xf32>
    %175 = vector.shape_cast %172 : vector<16x1xf32> to vector<1x16x1xf32>
    tpu.vector_store %arg17[%c3_94, %c0_95, %c0_96], %175 {strides = array<i32>} : memref<4x16x1xf32, #tpu.memory_space<vmem>>, vector<1x16x1xf32>,
    %176 = vector.extract_strided_slice %9 {offsets = [0, 96], sizes = [16, 32], strides = [1, 1]} : vector<16x128xf32> to vector<16x32xf32>
    %cst_97 = arith.constant dense<0.000000e+00> : vector<16x32xf32>
    %177 = tpu.matmul %166, %176, %cst_97 {dimension_numbers = #tpu.dot_dimension_numbers<[1], [0], [0], [1], [0, 0, 1, 1], [], []>} : vector<16x16xf32>, vector<16x32xf32>, vector<16x32xf32> -> vector<16x32xf32>
    %c0_98 = arith.constant 0 : index
    %c96_99 = arith.constant 96 : index
    %178 = vector.load %arg18[%c0_98, %c96_99] : memref<16x128xf32, #tpu.memory_space<vmem>>, vector<16x32xf32>
    %179 = vector.broadcast %163 : vector<16x1xf32> to vector<16x32xf32>
    %180 = arith.mulf %179, %178 : vector<16x32xf32>
    %181 = arith.addf %180, %177 : vector<16x32xf32>
    %c0_100 = arith.constant 0 : index
    %c96_101 = arith.constant 96 : index
    %182 = vector.load %arg18[%c0_100, %c96_101] : memref<16x128xf32, #tpu.memory_space<vmem>>, vector<16x32xf32>
    tpu.vector_store %arg18[%c0_100, %c96_101], %181 {strides = array<i32>} : memref<16x128xf32, #tpu.memory_space<vmem>>, vector<16x32xf32>,
    %c3_102 = arith.constant 3 : index
    %c0_103 = arith.constant 0 : index
    %c0_104 = arith.constant 0 : index
    %183 = vector.load %arg16[%c3_102, %c0_103, %c0_104] : memref<4x16x1xf32, #tpu.memory_space<vmem>>, vector<1x16x1xf32>
    %184 = vector.shape_cast %183 : vector<1x16x1xf32> to vector<16x1xf32>
    %185 = vector.shape_cast %161 : vector<16x1xf32> to vector<1x16x1xf32>
    tpu.vector_store %arg16[%c3_102, %c0_103, %c0_104], %185 {strides = array<i32>} : memref<4x16x1xf32, #tpu.memory_space<vmem>>, vector<1x16x1xf32>,
    %c0_i32_105 = arith.constant 0 : i32
    %186 = arith.cmpi eq, %arg2, %c0_i32_105 : i32
    %187 = arith.extui %186 : i1 to i32
    %c0_i32_106 = arith.constant 0 : i32
    %188 = arith.cmpi ne, %187, %c0_i32_106 : i32
    scf.if %188 {
      %c0_107 = arith.constant 0 : index
      %c0_108 = arith.constant 0 : index
      %189 = vector.load %arg15[%c0_107, %c0_108] : memref<8x256xf32, #tpu.memory_space<vmem>>, vector<8x256xf32>
      %c0_109 = arith.constant 0 : index
      %c0_110 = arith.constant 0 : index
      %190 = vector.load %arg14[%c0_109, %c0_110] : memref<16x128xf32, #tpu.memory_space<vmem>>, vector<16x32xf32>
      %191 = vector.extract_strided_slice %189 {offsets = [0, 0], sizes = [8, 32], strides = [1, 1]} : vector<8x256xf32> to vector<8x32xf32>
      %192 = arith.mulf %191, %191 : vector<8x32xf32>
      %cst_111 = arith.constant dense<0.000000e+00> : vector<8xf32>
      %193 = vector.multi_reduction <add>, %192, %cst_111 [1] : vector<8x32xf32> to vector<8xf32>
      %194 = vector.shape_cast %193 : vector<8xf32> to vector<8x1xf32>
      %cst_112 = arith.constant 3.200000e+01 : f32
      %195 = vector.broadcast %cst_112 : f32 to vector<8x1xf32>
      %196 = arith.divf %194, %195 : vector<8x1xf32>
      %cst_113 = arith.constant 9.99999997E-7 : f32
      %197 = vector.broadcast %cst_113 : f32 to vector<8x1xf32>
      %198 = arith.addf %196, %197 : vector<8x1xf32>
      %199 = math.rsqrt %198 : vector<8x1xf32>
      %200 = vector.broadcast %199 : vector<8x1xf32> to vector<8x32xf32>
      %201 = arith.mulf %191, %200 : vector<8x32xf32>
      %202 = vector.broadcast %2 : vector<1x32xf32> to vector<8x32xf32>
      %203 = arith.mulf %201, %202 : vector<8x32xf32>
      %cst_114 = arith.constant dense<0.000000e+00> : vector<16x8xf32>
      %204 = tpu.matmul %190, %203, %cst_114 {dimension_numbers = #tpu.dot_dimension_numbers<[1], [1], [0], [0], [0, 0, 1, 0], [], []>} : vector<16x32xf32>, vector<8x32xf32>, vector<16x8xf32> -> vector<16x8xf32>
      %c0_115 = arith.constant 0 : index
      %c0_116 = arith.constant 0 : index
      %c0_117 = arith.constant 0 : index
      %205 = vector.load %arg16[%c0_115, %c0_116, %c0_117] : memref<4x16x1xf32, #tpu.memory_space<vmem>>, vector<1x16x1xf32>
      %206 = vector.shape_cast %205 : vector<1x16x1xf32> to vector<16x1xf32>
      %cst_118 = arith.constant dense<0xFF800000> : vector<16xf32>
      %207 = vector.multi_reduction <maximumf>, %204, %cst_118 [1] : vector<16x8xf32> to vector<16xf32>
      %208 = vector.shape_cast %207 : vector<16xf32> to vector<16x1xf32>
      %209 = arith.maximumf %206, %208 : vector<16x1xf32>
      %210 = arith.subf %206, %209 : vector<16x1xf32>
      %211 = math.exp %210 : vector<16x1xf32>
      %212 = vector.broadcast %209 : vector<16x1xf32> to vector<16x8xf32>
      %213 = arith.subf %204, %212 : vector<16x8xf32>
      %214 = math.exp %213 : vector<16x8xf32>
      %c0_119 = arith.constant 0 : index
      %c0_120 = arith.constant 0 : index
      %c0_121 = arith.constant 0 : index
      %215 = vector.load %arg17[%c0_119, %c0_120, %c0_121] : memref<4x16x1xf32, #tpu.memory_space<vmem>>, vector<1x16x1xf32>
      %216 = vector.shape_cast %215 : vector<1x16x1xf32> to vector<16x1xf32>
      %217 = arith.mulf %211, %216 : vector<16x1xf32>
      %cst_122 = arith.constant dense<0.000000e+00> : vector<16xf32>
      %218 = vector.multi_reduction <add>, %214, %cst_122 [1] : vector<16x8xf32> to vector<16xf32>
      %219 = vector.shape_cast %218 : vector<16xf32> to vector<16x1xf32>
      %220 = arith.addf %217, %219 : vector<16x1xf32>
      %221 = vector.extract_strided_slice %189 {offsets = [0, 128], sizes = [8, 32], strides = [1, 1]} : vector<8x256xf32> to vector<8x32xf32>
      %c0_123 = arith.constant 0 : index
      %c0_124 = arith.constant 0 : index
      %222 = vector.load %arg18[%c0_123, %c0_124] : memref<16x128xf32, #tpu.memory_space<vmem>>, vector<16x32xf32>
      %223 = vector.broadcast %211 : vector<16x1xf32> to vector<16x32xf32>
      %224 = arith.mulf %223, %222 : vector<16x32xf32>
      %cst_125 = arith.constant dense<0.000000e+00> : vector<16x32xf32>
      %225 = tpu.matmul %214, %221, %cst_125 {dimension_numbers = #tpu.dot_dimension_numbers<[1], [0], [0], [1], [0, 0, 1, 1], [], []>} : vector<16x8xf32>, vector<8x32xf32>, vector<16x32xf32> -> vector<16x32xf32>
      %226 = arith.addf %224, %225 : vector<16x32xf32>
      %227 = tpu.reciprocal %220 : vector<16x1xf32> -> vector<16x1xf32>
      %228 = vector.broadcast %227 : vector<16x1xf32> to vector<16x32xf32>
      %229 = arith.mulf %226, %228 : vector<16x32xf32>
      %c0_126 = arith.constant 0 : index
      %c0_127 = arith.constant 0 : index
      %230 = vector.load %arg18[%c0_126, %c0_127] : memref<16x128xf32, #tpu.memory_space<vmem>>, vector<16x32xf32>
      tpu.vector_store %arg18[%c0_126, %c0_127], %229 {strides = array<i32>} : memref<16x128xf32, #tpu.memory_space<vmem>>, vector<16x32xf32>,
      %c0_128 = arith.constant 0 : index
      %c32_129 = arith.constant 32 : index
      %231 = vector.load %arg14[%c0_128, %c32_129] : memref<16x128xf32, #tpu.memory_space<vmem>>, vector<16x32xf32>
      %232 = vector.extract_strided_slice %189 {offsets = [0, 32], sizes = [8, 32], strides = [1, 1]} : vector<8x256xf32> to vector<8x32xf32>
      %233 = arith.mulf %232, %232 : vector<8x32xf32>
      %cst_130 = arith.constant dense<0.000000e+00> : vector<8xf32>
      %234 = vector.multi_reduction <add>, %233, %cst_130 [1] : vector<8x32xf32> to vector<8xf32>
      %235 = vector.shape_cast %234 : vector<8xf32> to vector<8x1xf32>
      %cst_131 = arith.constant 3.200000e+01 : f32
      %236 = vector.broadcast %cst_131 : f32 to vector<8x1xf32>
      %237 = arith.divf %235, %236 : vector<8x1xf32>
      %cst_132 = arith.constant 9.99999997E-7 : f32
      %238 = vector.broadcast %cst_132 : f32 to vector<8x1xf32>
      %239 = arith.addf %237, %238 : vector<8x1xf32>
      %240 = math.rsqrt %239 : vector<8x1xf32>
      %241 = vector.broadcast %240 : vector<8x1xf32> to vector<8x32xf32>
      %242 = arith.mulf %232, %241 : vector<8x32xf32>
      %243 = vector.broadcast %2 : vector<1x32xf32> to vector<8x32xf32>
      %244 = arith.mulf %242, %243 : vector<8x32xf32>
      %cst_133 = arith.constant dense<0.000000e+00> : vector<16x8xf32>
      %245 = tpu.matmul %231, %244, %cst_133 {dimension_numbers = #tpu.dot_dimension_numbers<[1], [1], [0], [0], [0, 0, 1, 0], [], []>} : vector<16x32xf32>, vector<8x32xf32>, vector<16x8xf32> -> vector<16x8xf32>
      %c1_134 = arith.constant 1 : index
      %c0_135 = arith.constant 0 : index
      %c0_136 = arith.constant 0 : index
      %246 = vector.load %arg16[%c1_134, %c0_135, %c0_136] : memref<4x16x1xf32, #tpu.memory_space<vmem>>, vector<1x16x1xf32>
      %247 = vector.shape_cast %246 : vector<1x16x1xf32> to vector<16x1xf32>
      %cst_137 = arith.constant dense<0xFF800000> : vector<16xf32>
      %248 = vector.multi_reduction <maximumf>, %245, %cst_137 [1] : vector<16x8xf32> to vector<16xf32>
      %249 = vector.shape_cast %248 : vector<16xf32> to vector<16x1xf32>
      %250 = arith.maximumf %247, %249 : vector<16x1xf32>
      %251 = arith.subf %247, %250 : vector<16x1xf32>
      %252 = math.exp %251 : vector<16x1xf32>
      %253 = vector.broadcast %250 : vector<16x1xf32> to vector<16x8xf32>
      %254 = arith.subf %245, %253 : vector<16x8xf32>
      %255 = math.exp %254 : vector<16x8xf32>
      %c1_138 = arith.constant 1 : index
      %c0_139 = arith.constant 0 : index
      %c0_140 = arith.constant 0 : index
      %256 = vector.load %arg17[%c1_138, %c0_139, %c0_140] : memref<4x16x1xf32, #tpu.memory_space<vmem>>, vector<1x16x1xf32>
      %257 = vector.shape_cast %256 : vector<1x16x1xf32> to vector<16x1xf32>
      %258 = arith.mulf %252, %257 : vector<16x1xf32>
      %cst_141 = arith.constant dense<0.000000e+00> : vector<16xf32>
      %259 = vector.multi_reduction <add>, %255, %cst_141 [1] : vector<16x8xf32> to vector<16xf32>
      %260 = vector.shape_cast %259 : vector<16xf32> to vector<16x1xf32>
      %261 = arith.addf %258, %260 : vector<16x1xf32>
      %262 = vector.extract_strided_slice %189 {offsets = [0, 160], sizes = [8, 32], strides = [1, 1]} : vector<8x256xf32> to vector<8x32xf32>
      %c0_142 = arith.constant 0 : index
      %c32_143 = arith.constant 32 : index
      %263 = vector.load %arg18[%c0_142, %c32_143] : memref<16x128xf32, #tpu.memory_space<vmem>>, vector<16x32xf32>
      %264 = vector.broadcast %252 : vector<16x1xf32> to vector<16x32xf32>
      %265 = arith.mulf %264, %263 : vector<16x32xf32>
      %cst_144 = arith.constant dense<0.000000e+00> : vector<16x32xf32>
      %266 = tpu.matmul %255, %262, %cst_144 {dimension_numbers = #tpu.dot_dimension_numbers<[1], [0], [0], [1], [0, 0, 1, 1], [], []>} : vector<16x8xf32>, vector<8x32xf32>, vector<16x32xf32> -> vector<16x32xf32>
      %267 = arith.addf %265, %266 : vector<16x32xf32>
      %268 = tpu.reciprocal %261 : vector<16x1xf32> -> vector<16x1xf32>
      %269 = vector.broadcast %268 : vector<16x1xf32> to vector<16x32xf32>
      %270 = arith.mulf %267, %269 : vector<16x32xf32>
      %c0_145 = arith.constant 0 : index
      %c32_146 = arith.constant 32 : index
      %271 = vector.load %arg18[%c0_145, %c32_146] : memref<16x128xf32, #tpu.memory_space<vmem>>, vector<16x32xf32>
      tpu.vector_store %arg18[%c0_145, %c32_146], %270 {strides = array<i32>} : memref<16x128xf32, #tpu.memory_space<vmem>>, vector<16x32xf32>,
      %c0_147 = arith.constant 0 : index
      %c64_148 = arith.constant 64 : index
      %272 = vector.load %arg14[%c0_147, %c64_148] : memref<16x128xf32, #tpu.memory_space<vmem>>, vector<16x32xf32>
      %273 = vector.extract_strided_slice %189 {offsets = [0, 64], sizes = [8, 32], strides = [1, 1]} : vector<8x256xf32> to vector<8x32xf32>
      %274 = arith.mulf %273, %273 : vector<8x32xf32>
      %cst_149 = arith.constant dense<0.000000e+00> : vector<8xf32>
      %275 = vector.multi_reduction <add>, %274, %cst_149 [1] : vector<8x32xf32> to vector<8xf32>
      %276 = vector.shape_cast %275 : vector<8xf32> to vector<8x1xf32>
      %cst_150 = arith.constant 3.200000e+01 : f32
      %277 = vector.broadcast %cst_150 : f32 to vector<8x1xf32>
      %278 = arith.divf %276, %277 : vector<8x1xf32>
      %cst_151 = arith.constant 9.99999997E-7 : f32
      %279 = vector.broadcast %cst_151 : f32 to vector<8x1xf32>
      %280 = arith.addf %278, %279 : vector<8x1xf32>
      %281 = math.rsqrt %280 : vector<8x1xf32>
      %282 = vector.broadcast %281 : vector<8x1xf32> to vector<8x32xf32>
      %283 = arith.mulf %273, %282 : vector<8x32xf32>
      %284 = vector.broadcast %2 : vector<1x32xf32> to vector<8x32xf32>
      %285 = arith.mulf %283, %284 : vector<8x32xf32>
      %cst_152 = arith.constant dense<0.000000e+00> : vector<16x8xf32>
      %286 = tpu.matmul %272, %285, %cst_152 {dimension_numbers = #tpu.dot_dimension_numbers<[1], [1], [0], [0], [0, 0, 1, 0], [], []>} : vector<16x32xf32>, vector<8x32xf32>, vector<16x8xf32> -> vector<16x8xf32>
      %c2_153 = arith.constant 2 : index
      %c0_154 = arith.constant 0 : index
      %c0_155 = arith.constant 0 : index
      %287 = vector.load %arg16[%c2_153, %c0_154, %c0_155] : memref<4x16x1xf32, #tpu.memory_space<vmem>>, vector<1x16x1xf32>
      %288 = vector.shape_cast %287 : vector<1x16x1xf32> to vector<16x1xf32>
      %cst_156 = arith.constant dense<0xFF800000> : vector<16xf32>
      %289 = vector.multi_reduction <maximumf>, %286, %cst_156 [1] : vector<16x8xf32> to vector<16xf32>
      %290 = vector.shape_cast %289 : vector<16xf32> to vector<16x1xf32>
      %291 = arith.maximumf %288, %290 : vector<16x1xf32>
      %292 = arith.subf %288, %291 : vector<16x1xf32>
      %293 = math.exp %292 : vector<16x1xf32>
      %294 = vector.broadcast %291 : vector<16x1xf32> to vector<16x8xf32>
      %295 = arith.subf %286, %294 : vector<16x8xf32>
      %296 = math.exp %295 : vector<16x8xf32>
      %c2_157 = arith.constant 2 : index
      %c0_158 = arith.constant 0 : index
      %c0_159 = arith.constant 0 : index
      %297 = vector.load %arg17[%c2_157, %c0_158, %c0_159] : memref<4x16x1xf32, #tpu.memory_space<vmem>>, vector<1x16x1xf32>
      %298 = vector.shape_cast %297 : vector<1x16x1xf32> to vector<16x1xf32>
      %299 = arith.mulf %293, %298 : vector<16x1xf32>
      %cst_160 = arith.constant dense<0.000000e+00> : vector<16xf32>
      %300 = vector.multi_reduction <add>, %296, %cst_160 [1] : vector<16x8xf32> to vector<16xf32>
      %301 = vector.shape_cast %300 : vector<16xf32> to vector<16x1xf32>
      %302 = arith.addf %299, %301 : vector<16x1xf32>
      %303 = vector.extract_strided_slice %189 {offsets = [0, 192], sizes = [8, 32], strides = [1, 1]} : vector<8x256xf32> to vector<8x32xf32>
      %c0_161 = arith.constant 0 : index
      %c64_162 = arith.constant 64 : index
      %304 = vector.load %arg18[%c0_161, %c64_162] : memref<16x128xf32, #tpu.memory_space<vmem>>, vector<16x32xf32>
      %305 = vector.broadcast %293 : vector<16x1xf32> to vector<16x32xf32>
      %306 = arith.mulf %305, %304 : vector<16x32xf32>
      %cst_163 = arith.constant dense<0.000000e+00> : vector<16x32xf32>
      %307 = tpu.matmul %296, %303, %cst_163 {dimension_numbers = #tpu.dot_dimension_numbers<[1], [0], [0], [1], [0, 0, 1, 1], [], []>} : vector<16x8xf32>, vector<8x32xf32>, vector<16x32xf32> -> vector<16x32xf32>
      %308 = arith.addf %306, %307 : vector<16x32xf32>
      %309 = tpu.reciprocal %302 : vector<16x1xf32> -> vector<16x1xf32>
      %310 = vector.broadcast %309 : vector<16x1xf32> to vector<16x32xf32>
      %311 = arith.mulf %308, %310 : vector<16x32xf32>
      %c0_164 = arith.constant 0 : index
      %c64_165 = arith.constant 64 : index
      %312 = vector.load %arg18[%c0_164, %c64_165] : memref<16x128xf32, #tpu.memory_space<vmem>>, vector<16x32xf32>
      tpu.vector_store %arg18[%c0_164, %c64_165], %311 {strides = array<i32>} : memref<16x128xf32, #tpu.memory_space<vmem>>, vector<16x32xf32>,
      %c0_166 = arith.constant 0 : index
      %c96_167 = arith.constant 96 : index
      %313 = vector.load %arg14[%c0_166, %c96_167] : memref<16x128xf32, #tpu.memory_space<vmem>>, vector<16x32xf32>
      %314 = vector.extract_strided_slice %189 {offsets = [0, 96], sizes = [8, 32], strides = [1, 1]} : vector<8x256xf32> to vector<8x32xf32>
      %315 = arith.mulf %314, %314 : vector<8x32xf32>
      %cst_168 = arith.constant dense<0.000000e+00> : vector<8xf32>
      %316 = vector.multi_reduction <add>, %315, %cst_168 [1] : vector<8x32xf32> to vector<8xf32>
      %317 = vector.shape_cast %316 : vector<8xf32> to vector<8x1xf32>
      %cst_169 = arith.constant 3.200000e+01 : f32
      %318 = vector.broadcast %cst_169 : f32 to vector<8x1xf32>
      %319 = arith.divf %317, %318 : vector<8x1xf32>
      %cst_170 = arith.constant 9.99999997E-7 : f32
      %320 = vector.broadcast %cst_170 : f32 to vector<8x1xf32>
      %321 = arith.addf %319, %320 : vector<8x1xf32>
      %322 = math.rsqrt %321 : vector<8x1xf32>
      %323 = vector.broadcast %322 : vector<8x1xf32> to vector<8x32xf32>
      %324 = arith.mulf %314, %323 : vector<8x32xf32>
      %325 = vector.broadcast %2 : vector<1x32xf32> to vector<8x32xf32>
      %326 = arith.mulf %324, %325 : vector<8x32xf32>
      %cst_171 = arith.constant dense<0.000000e+00> : vector<16x8xf32>
      %327 = tpu.matmul %313, %326, %cst_171 {dimension_numbers = #tpu.dot_dimension_numbers<[1], [1], [0], [0], [0, 0, 1, 0], [], []>} : vector<16x32xf32>, vector<8x32xf32>, vector<16x8xf32> -> vector<16x8xf32>
      %c3_172 = arith.constant 3 : index
      %c0_173 = arith.constant 0 : index
      %c0_174 = arith.constant 0 : index
      %328 = vector.load %arg16[%c3_172, %c0_173, %c0_174] : memref<4x16x1xf32, #tpu.memory_space<vmem>>, vector<1x16x1xf32>
      %329 = vector.shape_cast %328 : vector<1x16x1xf32> to vector<16x1xf32>
      %cst_175 = arith.constant dense<0xFF800000> : vector<16xf32>
      %330 = vector.multi_reduction <maximumf>, %327, %cst_175 [1] : vector<16x8xf32> to vector<16xf32>
      %331 = vector.shape_cast %330 : vector<16xf32> to vector<16x1xf32>
      %332 = arith.maximumf %329, %331 : vector<16x1xf32>
      %333 = arith.subf %329, %332 : vector<16x1xf32>
      %334 = math.exp %333 : vector<16x1xf32>
      %335 = vector.broadcast %332 : vector<16x1xf32> to vector<16x8xf32>
      %336 = arith.subf %327, %335 : vector<16x8xf32>
      %337 = math.exp %336 : vector<16x8xf32>
      %c3_176 = arith.constant 3 : index
      %c0_177 = arith.constant 0 : index
      %c0_178 = arith.constant 0 : index
      %338 = vector.load %arg17[%c3_176, %c0_177, %c0_178] : memref<4x16x1xf32, #tpu.memory_space<vmem>>, vector<1x16x1xf32>
      %339 = vector.shape_cast %338 : vector<1x16x1xf32> to vector<16x1xf32>
      %340 = arith.mulf %334, %339 : vector<16x1xf32>
      %cst_179 = arith.constant dense<0.000000e+00> : vector<16xf32>
      %341 = vector.multi_reduction <add>, %337, %cst_179 [1] : vector<16x8xf32> to vector<16xf32>
      %342 = vector.shape_cast %341 : vector<16xf32> to vector<16x1xf32>
      %343 = arith.addf %340, %342 : vector<16x1xf32>
      %344 = vector.extract_strided_slice %189 {offsets = [0, 224], sizes = [8, 32], strides = [1, 1]} : vector<8x256xf32> to vector<8x32xf32>
      %c0_180 = arith.constant 0 : index
      %c96_181 = arith.constant 96 : index
      %345 = vector.load %arg18[%c0_180, %c96_181] : memref<16x128xf32, #tpu.memory_space<vmem>>, vector<16x32xf32>
      %346 = vector.broadcast %334 : vector<16x1xf32> to vector<16x32xf32>
      %347 = arith.mulf %346, %345 : vector<16x32xf32>
      %cst_182 = arith.constant dense<0.000000e+00> : vector<16x32xf32>
      %348 = tpu.matmul %337, %344, %cst_182 {dimension_numbers = #tpu.dot_dimension_numbers<[1], [0], [0], [1], [0, 0, 1, 1], [], []>} : vector<16x8xf32>, vector<8x32xf32>, vector<16x32xf32> -> vector<16x32xf32>
      %349 = arith.addf %347, %348 : vector<16x32xf32>
      %350 = tpu.reciprocal %343 : vector<16x1xf32> -> vector<16x1xf32>
      %351 = vector.broadcast %350 : vector<16x1xf32> to vector<16x32xf32>
      %352 = arith.mulf %349, %351 : vector<16x32xf32>
      %c0_183 = arith.constant 0 : index
      %c96_184 = arith.constant 96 : index
      %353 = vector.load %arg18[%c0_183, %c96_184] : memref<16x128xf32, #tpu.memory_space<vmem>>, vector<16x32xf32>
      tpu.vector_store %arg18[%c0_183, %c96_184], %352 {strides = array<i32>} : memref<16x128xf32, #tpu.memory_space<vmem>>, vector<16x32xf32>,
      %c0_185 = arith.constant 0 : index
      %c0_186 = arith.constant 0 : index
      %354 = vector.load %arg18[%c0_185, %c0_186] : memref<16x128xf32, #tpu.memory_space<vmem>>, vector<16x128xf32>
      %c0_187 = arith.constant 0 : index
      %c0_188 = arith.constant 0 : index
      %c0_189 = arith.constant 0 : index
      %355 = vector.load %arg13[%c0_187, %c0_188, %c0_189] : memref<1x16x128xf32, #tpu.memory_space<vmem>>, vector<1x16x128xf32>
      %356 = vector.shape_cast %355 : vector<1x16x128xf32> to vector<16x128xf32>
      %357 = vector.shape_cast %354 : vector<16x128xf32> to vector<1x16x128xf32>
      tpu.vector_store %arg13[%c0_187, %c0_188, %c0_189], %357 {strides = array<i32>} : memref<1x16x128xf32, #tpu.memory_space<vmem>>, vector<1x16x128xf32>,
    } else {
    }
    return
  }
  func.func @transform_0(%arg0: i32, %arg1: i32, %arg2: i32) -> (i32, i32, i32) {
    %c0_i32 = arith.constant 0 : i32
    %c0_i32_0 = arith.constant 0 : i32
    %c0_i32_1 = arith.constant 0 : i32
    return %arg0, %c0_i32, %c0_i32_0 : i32, i32, i32
  }
  func.func @transform_1(%arg0: i32, %arg1: i32, %arg2: i32) -> (i32, i32, i32) {
    %c0_i32 = arith.constant 0 : i32
    %c0_i32_0 = arith.constant 0 : i32
    %c0_i32_1 = arith.constant 0 : i32
    return %arg0, %c0_i32, %c0_i32_0 : i32, i32, i32
  }
  func.func @transform_2(%arg0: i32, %arg1: i32, %arg2: i32) -> (i32, i32, i32) {
    %c0_i32 = arith.constant 0 : i32
    %c0_i32_0 = arith.constant 0 : i32
    %c0_i32_1 = arith.constant 0 : i32
    return %arg0, %c0_i32, %c0_i32_0 : i32, i32, i32
  }
  func.func @transform_3(%arg0: i32, %arg1: i32, %arg2: i32) -> (i32, i32) {
    %c0_i32 = arith.constant 0 : i32
    %c0_i32_0 = arith.constant 0 : i32
    %c0_i32_1 = arith.constant 0 : i32
    return %c0_i32, %c0_i32_0 : i32, i32
  }
  func.func @transform_4(%arg0: i32, %arg1: i32, %arg2: i32) -> (i32, i32, i32) {
    %c0_i32 = arith.constant 0 : i32
    %c0_i32_0 = arith.constant 0 : i32
    return %arg0, %arg1, %c0_i32 : i32, i32, i32
  }
  func.func @transform_5(%arg0: i32, %arg1: i32, %arg2: i32) -> (i32, i32, i32) {
    %c0_i32 = arith.constant 0 : i32
    %c0_i32_0 = arith.constant 0 : i32
    return %arg0, %arg2, %c0_i32 : i32, i32, i32
  }
  func.func @transform_6(%arg0: i32, %arg1: i32, %arg2: i32) -> (i32, i32, i32) {
    %c0_i32 = arith.constant 0 : i32
    %c0_i32_0 = arith.constant 0 : i32
    return %arg0, %arg2, %c0_i32 : i32, i32, i32
  }
  func.func @transform_7(%arg0: i32, %arg1: i32, %arg2: i32) -> (i32, i32) {
    %c0_i32 = arith.constant 0 : i32
    %c0_i32_0 = arith.constant 0 : i32
    %c0_i32_1 = arith.constant 0 : i32
    return %c0_i32, %c0_i32_0 : i32, i32
  }
  func.func @transform_8(%arg0: i32, %arg1: i32, %arg2: i32) -> (i32, i32) {
    %c0_i32 = arith.constant 0 : i32
    %c0_i32_0 = arith.constant 0 : i32
    %c0_i32_1 = arith.constant 0 : i32
    return %c0_i32, %c0_i32_0 : i32, i32
  }
  func.func @transform_9(%arg0: i32, %arg1: i32, %arg2: i32) -> (i32, i32) {
    %c0_i32 = arith.constant 0 : i32
    %c0_i32_0 = arith.constant 0 : i32
    %c0_i32_1 = arith.constant 0 : i32
    return %c0_i32, %c0_i32_0 : i32, i32
  }
  func.func @transform_10(%arg0: i32, %arg1: i32, %arg2: i32) -> (i32, i32, i32) {
    %c0_i32 = arith.constant 0 : i32
    %c0_i32_0 = arith.constant 0 : i32
    return %arg0, %arg1, %c0_i32 : i32, i32, i32
  }
}

</mosaic_0001>

<llo_original>
// kernel: tpu_custom_call.1
$region0: #{tpu_custom_call.1}
  #allocation0 [shape = 'u32[]', space=smem, size = 0x4, offset = 0x4, fixed_abs, tag = 'smem constant byte address 0x4 - core index']
  #allocation1 [shape = 'u32[72,128]{1,0:T(1,128)}', space=vmem, size = 0x9000, scoped, tag = 'internal scratch']
  #allocation2 [shape = 'f32[16,128]{1,0:T(8,128)}', space=vmem, size = 0x2000, scoped, tag = 'scratch operand']
  #allocation3 [shape = 'f32[8,256]{1,0:T(8,128)}', space=vmem, size = 0x2000, scoped, tag = 'scratch operand']
  #allocation4 [shape = 'f32[4,16,1]{2,1,0:T(8,128)}', space=vmem, size = 0x8000, scoped, tag = 'scratch operand']
  #allocation5 [shape = 'f32[4,16,1]{2,1,0:T(8,128)}', space=vmem, size = 0x8000, scoped, tag = 'scratch operand']
  #allocation6 [shape = 'f32[16,128]{1,0:T(8,128)}', space=vmem, size = 0x2000, scoped, tag = 'scratch operand']
  %s0 = inlined_call_operand.hbm [shape: f32[2,8,64], index: 0, kind: input, shape index: {}]
  %s1 = inlined_call_operand.hbm [shape: f32[2,1,64], index: 1, kind: input, shape index: {}]
  %s2 = inlined_call_operand.hbm [shape: f32[2,1,64], index: 2, kind: input, shape index: {}]
  %s3 = inlined_call_operand.hbm [shape: f32[64,256], index: 3, kind: input, shape index: {}]
  %s4 = inlined_call_operand.hbm [shape: f32[2,16,128], index: 4, kind: input, shape index: {}]
  %s5 = inlined_call_operand.hbm [shape: f32[2,16,128], index: 5, kind: input, shape index: {}]
  %s6 = inlined_call_operand.hbm [shape: f32[2,16,128], index: 6, kind: input, shape index: {}]
  %s7 = inlined_call_operand.vmem [shape: f32[1,32], index: 7, kind: input, shape index: {}]
  %s8 = inlined_call_operand.vmem [shape: f32[1,32], index: 8, kind: input, shape index: {}]
  %s9 = inlined_call_operand.vmem [shape: f32[1,32], index: 9, kind: input, shape index: {}]
  %s10 = inlined_call_operand.hbm [shape: f32[2,16,128], index: 10, kind: output, shape index: {}]
  %s11 = sld [smem:[#allocation0]]
  $region109: #{tpu_custom_call.1} parent=0
    _
  %s13 = ssub.s32 1, %s11
  %s14 = scalar_select 0, %s13, %s11
  $region1: #{tpu_custom_call.1} parent=0
    #allocation7 [shape = 'u8[8192]{0}', space=vmem, size = 0x2000, scoped, tag = 'input window, operand 0']
    #allocation8 [shape = 's32[2]{0}', space=sflag, size = 0x8, scoped, tag = 'scoped memory for tpu_custom_call.1']
    #allocation9 [shape = 's32[2]{0}', space=sflag, size = 0x8, scoped, tag = 'scoped memory for tpu_custom_call.1']
    #allocation10 [shape = 'u8[1024]{0}', space=vmem, size = 0x400, scoped, tag = 'input window, operand 1']
    #allocation11 [shape = 's32[2]{0}', space=sflag, size = 0x8, scoped, tag = 'scoped memory for tpu_custom_call.1']
    #allocation12 [shape = 'u8[1024]{0}', space=vmem, size = 0x400, scoped, tag = 'input window, operand 2']
    #allocation13 [shape = 'u8[65536]{0}', space=vmem, size = 0x10000, scoped, tag = 'input window, operand 3, single buffered']
    #allocation14 [shape = 's32[1]{0}', space=sflag, size = 0x4, scoped, tag = 'scoped memory for tpu_custom_call.1']
    #allocation15 [shape = 'u8[16384]{0}', space=vmem, size = 0x4000, scoped, tag = 'input window, operand 4']
    #allocation16 [shape = 'u8[16384]{0}', space=vmem, size = 0x4000, scoped, tag = 'input window, operand 5']
    #allocation17 [shape = 'u8[16384]{0}', space=vmem, size = 0x4000, scoped, tag = 'input window, operand 6']
    #allocation18 [shape = 'u8[16384]{0}', space=vmem, size = 0x4000, scoped, tag = 'output window, operand 0']
    %15 = vsyncpa [#allocation8], 0
    %s16 = scalar_lea.sflag [#allocation8], 1
    %17 = vsyncpa %s16, 0
    %18 = vsyncpa [#allocation11], 0
    %s19 = scalar_lea.sflag [#allocation11], 1
    %20 = vsyncpa %s19, 0
    %21 = vsyncpa [#allocation14], 0
    %22 = vsyncpa [#allocation9], 0
    %s23 = scalar_lea.sflag [#allocation9], 1
    %24 = vsyncpa %s23, 0
    loop: start=0, step=1, limit=4
    $region2: #{tpu_custom_call.1} parent=1 // loop_pre_header
      _
    $region3: #{tpu_custom_call.1} parent=1 // loop_header
      %s26 = sphi 0, %s30
      %p27 = scmp.ge.s32.totalorder %s26, 4
      %s33 = sphi 0, %s52
      %s34 = sphi 0, %s48
      %s35 = sphi 0, %s44
      %s36 = sphi 0, %s33
      %s37 = sphi 0, %s34
      %s38 = sphi 0, %s35
      %s39 = sphi 0, %s36
      %s40 = sphi 0, %s37
      %s41 = sphi 0, %s38
      %s55 = sphi 0, %s57
      %s58 = sphi 0, %s55
      %s59 = sphi 0, %s58
      %s75 = sphi 0, %s59
      %s81 = sphi 0, %s83
      %s84 = sphi 0, %s81
      %s85 = sphi 0, %s84
      %s101 = sphi 0, %s85
      %s107 = sphi 0, %s109
      %s110 = sphi 0, %s107
      %s111 = sphi 0, %s110
      %s127 = sphi 0, %s111
      %s131 = sphi 0, %s131
      %s133 = sphi 0, %s131
      %s134 = sphi 0, %s133
      %s148 = sphi 0, %s134
      %s156 = sphi 0, %s158
      %s159 = sphi 0, %s156
      %s160 = sphi 0, %s159
      %s176 = sphi 0, %s160
      %s184 = sphi 0, %s186
      %s187 = sphi 0, %s184
      %s188 = sphi 0, %s187
      %s204 = sphi 0, %s188
      %s212 = sphi 0, %s214
      %s215 = sphi 0, %s212
      %s216 = sphi 0, %s215
      %s232 = sphi 0, %s216
      %s236 = sphi 0, %s236
      %s238 = sphi 0, %s236
      %s239 = sphi 0, %s238
      %s253 = sphi 0, %s239
      %s257 = sphi 0, %s257
      %s259 = sphi 0, %s257
      %s260 = sphi 0, %s259
      %s274 = sphi 0, %s260
      %s278 = sphi 0, %s278
      %s280 = sphi 0, %s278
      %s281 = sphi 0, %s280
      %s295 = sphi 0, %s281
      %s303 = sphi 0, %s305
      %s306 = sphi 0, %s303
      %s307 = sphi 0, %s306
      %s323 = sphi 0, %s307
    $region4: #{tpu_custom_call.1} parent=1 // loop_header_branch
      %29 = sbr.rel (%p27) target = $region8
    $region5: #{tpu_custom_call.1} parent=1 // loop_body
      %s31 = ssub.s32 %s26, 1
      %s32 = ssub.s32 %s26, 2
      %s42 = sadd.s32 1, %s35
      %p43 = scmp.ge.s32.totalorder %s42, 1
      %s44 = scalar_select %p43, 0, %s42
      %s45 = sadd.s32 1, %s34
      %s46 = scalar_select %p43, %s45, %s34
      %p47 = scmp.ge.s32.totalorder %s46, 1
      %s48 = scalar_select %p47, 0, %s46
      %s49 = sadd.s32 1, %s33
      %s50 = scalar_select %p47, %s49, %s33
      %p51 = scmp.ge.s32.totalorder %s50, 2
      %s52 = scalar_select %p51, 0, %s50
      %s53 = ssub.s32 %s33, %s52
      %p54 = scmp.eq.s32.totalorder %s53, 0
      %s56 = sadd.s32 %s55, 1
      %s57 = scalar_select %p54, %s55, %s56
      %p60 = pneg %p54
      %p61 = scmp.eq.s32.totalorder %s26, 1
      %p62 = por %p60, %p61
      %p63 = scmp.ne.s32.totalorder %s55, %s58
      %p64 = scmp.eq.s32.totalorder %s26, 0
      %p65 = por %p63, %p64
      %p66 = scmp.ne.s32.totalorder %s55, %s58
      %p67 = scmp.eq.s32.totalorder %s31, 1
      %p68 = por %p66, %p67
      %p69 = scmp.ne.s32.totalorder %s58, %s59
      %p70 = scmp.eq.s32.totalorder %s31, 0
      %p71 = por %p69, %p70
      %p72 = scmp.ne.s32.totalorder %s58, %s59
      %p73 = scmp.eq.s32.totalorder %s32, 1
      %p74 = por %p72, %p73
      %p76 = scmp.ne.s32.totalorder %s59, %s75
      %p77 = scmp.eq.s32.totalorder %s32, 0
      %p78 = por %p76, %p77
      %s79 = ssub.s32 %s33, %s52
      %p80 = scmp.eq.s32.totalorder %s79, 0
      %s82 = sadd.s32 %s81, 1
      %s83 = scalar_select %p80, %s81, %s82
      %p86 = pneg %p80
      %p87 = scmp.eq.s32.totalorder %s26, 1
      %p88 = por %p86, %p87
      %p89 = scmp.ne.s32.totalorder %s81, %s84
      %p90 = scmp.eq.s32.totalorder %s26, 0
      %p91 = por %p89, %p90
      %p92 = scmp.ne.s32.totalorder %s81, %s84
      %p93 = scmp.eq.s32.totalorder %s31, 1
      %p94 = por %p92, %p93
      %p95 = scmp.ne.s32.totalorder %s84, %s85
      %p96 = scmp.eq.s32.totalorder %s31, 0
      %p97 = por %p95, %p96
      %p98 = scmp.ne.s32.totalorder %s84, %s85
      %p99 = scmp.eq.s32.totalorder %s32, 1
      %p100 = por %p98, %p99
      %p102 = scmp.ne.s32.totalorder %s85, %s101
      %p103 = scmp.eq.s32.totalorder %s32, 0
      %p104 = por %p102, %p103
      %s105 = ssub.s32 %s33, %s52
      %p106 = scmp.eq.s32.totalorder %s105, 0
      %s108 = sadd.s32 %s107, 1
      %s109 = scalar_select %p106, %s107, %s108
      %p112 = pneg %p106
      %p113 = scmp.eq.s32.totalorder %s26, 1
      %p114 = por %p112, %p113
      %p115 = scmp.ne.s32.totalorder %s107, %s110
      %p116 = scmp.eq.s32.totalorder %s26, 0
      %p117 = por %p115, %p116
      %p118 = scmp.ne.s32.totalorder %s107, %s110
      %p119 = scmp.eq.s32.totalorder %s31, 1
      %p120 = por %p118, %p119
      %p121 = scmp.ne.s32.totalorder %s110, %s111
      %p122 = scmp.eq.s32.totalorder %s31, 0
      %p123 = por %p121, %p122
      %p124 = scmp.ne.s32.totalorder %s110, %s111
      %p125 = scmp.eq.s32.totalorder %s32, 1
      %p126 = por %p124, %p125
      %p128 = scmp.ne.s32.totalorder %s111, %s127
      %p129 = scmp.eq.s32.totalorder %s32, 0
      %p130 = por %p128, %p129
      %s132 = sadd.s32 %s131, 1
      %p135 = scmp.eq.s32.totalorder %s26, 1
      %p136 = scmp.ne.s32.totalorder %s131, %s133
      %p137 = scmp.eq.s32.totalorder %s26, 0
      %p138 = por %p136, %p137
      %p139 = scmp.ne.s32.totalorder %s131, %s133
      %p140 = scmp.eq.s32.totalorder %s31, 1
      %p141 = por %p139, %p140
      %p142 = scmp.ne.s32.totalorder %s133, %s134
      %p143 = scmp.eq.s32.totalorder %s31, 0
      %p144 = por %p142, %p143
      %p145 = scmp.ne.s32.totalorder %s133, %s134
      %p146 = scmp.eq.s32.totalorder %s32, 1
      %p147 = por %p145, %p146
      %p149 = scmp.ne.s32.totalorder %s134, %s148
      %p150 = scmp.eq.s32.totalorder %s32, 0
      %p151 = por %p149, %p150
      %s152 = ssub.s32 %s33, %s52
      %s153 = ssub.s32 %s34, %s48
      %s154 = sor.u32 %s152, %s153
      %p155 = scmp.eq.s32.totalorder %s154, 0
      %s157 = sadd.s32 %s156, 1
      %s158 = scalar_select %p155, %s156, %s157
      %p161 = pneg %p155
      %p162 = scmp.eq.s32.totalorder %s26, 1
      %p163 = por %p161, %p162
      %p164 = scmp.ne.s32.totalorder %s156, %s159
      %p165 = scmp.eq.s32.totalorder %s26, 0
      %p166 = por %p164, %p165
      %p167 = scmp.ne.s32.totalorder %s156, %s159
      %p168 = scmp.eq.s32.totalorder %s31, 1
      %p169 = por %p167, %p168
      %p170 = scmp.ne.s32.totalorder %s159, %s160
      %p171 = scmp.eq.s32.totalorder %s31, 0
      %p172 = por %p170, %p171
      %p173 = scmp.ne.s32.totalorder %s159, %s160
      %p174 = scmp.eq.s32.totalorder %s32, 1
      %p175 = por %p173, %p174
      %p177 = scmp.ne.s32.totalorder %s160, %s176
      %p178 = scmp.eq.s32.totalorder %s32, 0
      %p179 = por %p177, %p178
      %s180 = ssub.s32 %s33, %s52
      %s181 = ssub.s32 %s35, %s44
      %s182 = sor.u32 %s180, %s181
      %p183 = scmp.eq.s32.totalorder %s182, 0
      %s185 = sadd.s32 %s184, 1
      %s186 = scalar_select %p183, %s184, %s185
      %p189 = pneg %p183
      %p190 = scmp.eq.s32.totalorder %s26, 1
      %p191 = por %p189, %p190
      %p192 = scmp.ne.s32.totalorder %s184, %s187
      %p193 = scmp.eq.s32.totalorder %s26, 0
      %p194 = por %p192, %p193
      %p195 = scmp.ne.s32.totalorder %s184, %s187
      %p196 = scmp.eq.s32.totalorder %s31, 1
      %p197 = por %p195, %p196
      %p198 = scmp.ne.s32.totalorder %s187, %s188
      %p199 = scmp.eq.s32.totalorder %s31, 0
      %p200 = por %p198, %p199
      %p201 = scmp.ne.s32.totalorder %s187, %s188
      %p202 = scmp.eq.s32.totalorder %s32, 1
      %p203 = por %p201, %p202
      %p205 = scmp.ne.s32.totalorder %s188, %s204
      %p206 = scmp.eq.s32.totalorder %s32, 0
      %p207 = por %p205, %p206
      %s208 = ssub.s32 %s33, %s52
      %s209 = ssub.s32 %s35, %s44
      %s210 = sor.u32 %s208, %s209
      %p211 = scmp.eq.s32.totalorder %s210, 0
      %s213 = sadd.s32 %s212, 1
      %s214 = scalar_select %p211, %s212, %s213
      %p217 = pneg %p211
      %p218 = scmp.eq.s32.totalorder %s26, 1
      %p219 = por %p217, %p218
      %p220 = scmp.ne.s32.totalorder %s212, %s215
      %p221 = scmp.eq.s32.totalorder %s26, 0
      %p222 = por %p220, %p221
      %p223 = scmp.ne.s32.totalorder %s212, %s215
      %p224 = scmp.eq.s32.totalorder %s31, 1
      %p225 = por %p223, %p224
      %p226 = scmp.ne.s32.totalorder %s215, %s216
      %p227 = scmp.eq.s32.totalorder %s31, 0
      %p228 = por %p226, %p227
      %p229 = scmp.ne.s32.totalorder %s215, %s216
      %p230 = scmp.eq.s32.totalorder %s32, 1
      %p231 = por %p229, %p230
      %p233 = scmp.ne.s32.totalorder %s216, %s232
      %p234 = scmp.eq.s32.totalorder %s32, 0
      %p235 = por %p233, %p234
      %s237 = sadd.s32 %s236, 1
      %p240 = scmp.eq.s32.totalorder %s26, 1
      %p241 = scmp.ne.s32.totalorder %s236, %s238
      %p242 = scmp.eq.s32.totalorder %s26, 0
      %p243 = por %p241, %p242
      %p244 = scmp.ne.s32.totalorder %s236, %s238
      %p245 = scmp.eq.s32.totalorder %s31, 1
      %p246 = por %p244, %p245
      %p247 = scmp.ne.s32.totalorder %s238, %s239
      %p248 = scmp.eq.s32.totalorder %s31, 0
      %p249 = por %p247, %p248
      %p250 = scmp.ne.s32.totalorder %s238, %s239
      %p251 = scmp.eq.s32.totalorder %s32, 1
      %p252 = por %p250, %p251
      %p254 = scmp.ne.s32.totalorder %s239, %s253
      %p255 = scmp.eq.s32.totalorder %s32, 0
      %p256 = por %p254, %p255
      %s258 = sadd.s32 %s257, 1
      %p261 = scmp.eq.s32.totalorder %s26, 1
      %p262 = scmp.ne.s32.totalorder %s257, %s259
      %p263 = scmp.eq.s32.totalorder %s26, 0
      %p264 = por %p262, %p263
      %p265 = scmp.ne.s32.totalorder %s257, %s259
      %p266 = scmp.eq.s32.totalorder %s31, 1
      %p267 = por %p265, %p266
      %p268 = scmp.ne.s32.totalorder %s259, %s260
      %p269 = scmp.eq.s32.totalorder %s31, 0
      %p270 = por %p268, %p269
      %p271 = scmp.ne.s32.totalorder %s259, %s260
      %p272 = scmp.eq.s32.totalorder %s32, 1
      %p273 = por %p271, %p272
      %p275 = scmp.ne.s32.totalorder %s260, %s274
      %p276 = scmp.eq.s32.totalorder %s32, 0
      %p277 = por %p275, %p276
      %s279 = sadd.s32 %s278, 1
      %p282 = scmp.eq.s32.totalorder %s26, 1
      %p283 = scmp.ne.s32.totalorder %s278, %s280
      %p284 = scmp.eq.s32.totalorder %s26, 0
      %p285 = por %p283, %p284
      %p286 = scmp.ne.s32.totalorder %s278, %s280
      %p287 = scmp.eq.s32.totalorder %s31, 1
      %p288 = por %p286, %p287
      %p289 = scmp.ne.s32.totalorder %s280, %s281
      %p290 = scmp.eq.s32.totalorder %s31, 0
      %p291 = por %p289, %p290
      %p292 = scmp.ne.s32.totalorder %s280, %s281
      %p293 = scmp.eq.s32.totalorder %s32, 1
      %p294 = por %p292, %p293
      %p296 = scmp.ne.s32.totalorder %s281, %s295
      %p297 = scmp.eq.s32.totalorder %s32, 0
      %p298 = por %p296, %p297
      %s299 = ssub.s32 %s33, %s52
      %s300 = ssub.s32 %s34, %s48
      %s301 = sor.u32 %s299, %s300
      %p302 = scmp.eq.s32.totalorder %s301, 0
      %s304 = sadd.s32 %s303, 1
      %s305 = scalar_select %p302, %s303, %s304
      %p308 = pneg %p302
      %p309 = scmp.eq.s32.totalorder %s26, 1
      %p310 = por %p308, %p309
      %p311 = scmp.ne.s32.totalorder %s303, %s306
      %p312 = scmp.eq.s32.totalorder %s26, 0
      %p313 = por %p311, %p312
      %p314 = scmp.ne.s32.totalorder %s303, %s306
      %p315 = scmp.eq.s32.totalorder %s31, 1
      %p316 = por %p314, %p315
      %p317 = scmp.ne.s32.totalorder %s306, %s307
      %p318 = scmp.eq.s32.totalorder %s31, 0
      %p319 = por %p317, %p318
      %p320 = scmp.ne.s32.totalorder %s306, %s307
      %p321 = scmp.eq.s32.totalorder %s32, 1
      %p322 = por %p320, %p321
      %p324 = scmp.ne.s32.totalorder %s307, %s323
      %p325 = scmp.eq.s32.totalorder %s32, 0
      %p326 = por %p324, %p325
      %p327 = scmp.le.s32.totalorder 1, %s26
      %p328 = scmp.lt.s32.totalorder %s26, 3
      %p329 = pnand %p327, %p328
      %p330 = pneg %p329
      // Predicated region
      $region9: #{tpu_custom_call.1} parent=5 // pred_check
        _
      $region10: #{tpu_custom_call.1} parent=5 // pred_check_branch
        %332 = sbr.rel (%p329) target = $region12
      $region11: #{tpu_custom_call.1} parent=5 // pred_region
        %s333 = ssub.s32 %s26, 1
        // Predicated region
        $region13: #{tpu_custom_call.1} parent=11 // pred_check
          %p334 = pneg %p144
        $region14: #{tpu_custom_call.1} parent=11 // pred_check_branch
          %336 = sbr.rel (%p334) target = $region16
        $region15: #{tpu_custom_call.1} parent=11 // pred_region
          %338 = vsyncadd [#allocation14], 0
          %s339 = sshll.u32 %s3, 4
          %s340 = int_to_ptr.hbm [resolvable:$true] %s339
          %s341 = sshll.u32 [#allocation13], 4
          %s342 = int_to_ptr.vmem [resolvable:$true] %s341
          %347 = dma.hbm_to_vmem [thread:$0]  %s340, 2048, %s342, [#allocation14], 256, 256, 16
        $region16: #{tpu_custom_call.1} parent=11 // pred_fallthru
          _
        // Predicated region
        $region17: #{tpu_custom_call.1} parent=11 // pred_check
          %p348 = pneg %p249
        $region18: #{tpu_custom_call.1} parent=11 // pred_check_branch
          %350 = sbr.rel (%p348) target = $region20
        $region19: #{tpu_custom_call.1} parent=11 // pred_region
          _
        $region20: #{tpu_custom_call.1} parent=11 // pred_fallthru
          _
        // Predicated region
        $region21: #{tpu_custom_call.1} parent=11 // pred_check
          %p351 = pneg %p270
        $region22: #{tpu_custom_call.1} parent=11 // pred_check_branch
          %353 = sbr.rel (%p351) target = $region24
        $region23: #{tpu_custom_call.1} parent=11 // pred_region
          _
        $region24: #{tpu_custom_call.1} parent=11 // pred_fallthru
          _
        // Predicated region
        $region25: #{tpu_custom_call.1} parent=11 // pred_check
          %p354 = pneg %p291
        $region26: #{tpu_custom_call.1} parent=11 // pred_check_branch
          %356 = sbr.rel (%p354) target = $region28
        $region27: #{tpu_custom_call.1} parent=11 // pred_region
          _
        $region28: #{tpu_custom_call.1} parent=11 // pred_fallthru
          _
      $region12: #{tpu_custom_call.1} parent=5 // pred_fallthru
        _
      %p357 = scmp.lt.s32.totalorder %s26, 2
      // Predicated region
      $region29: #{tpu_custom_call.1} parent=5 // pred_check
        %p358 = pneg %p357
      $region30: #{tpu_custom_call.1} parent=5 // pred_check_branch
        %360 = sbr.rel (%p358) target = $region32
      $region31: #{tpu_custom_call.1} parent=5 // pred_region
        // Predicated region
        $region33: #{tpu_custom_call.1} parent=31 // pred_check
          %p361 = pneg %p65
        $region34: #{tpu_custom_call.1} parent=31 // pred_check_branch
          %363 = sbr.rel (%p361) target = $region36
        $region35: #{tpu_custom_call.1} parent=31 // pred_region
          %s364 = sand.u32 %s26, 1
          %s365 = scalar_lea.sflag [#allocation8], %s364
          %s366 = sand.u32 %s55, 1
          %s367 = smul.addr %s366, 8
          %s368 = scalar_lea.vmem [#allocation7], %s367
          %370 = vsyncadd %s365, 0
          %s371 = smul.addr %s33, 8
          %s372 = scalar_lea.hbm %s0, %s371
          %s374 = sshll.u32 %s372, 4
          %s375 = int_to_ptr.hbm [resolvable:$true] %s374
          %s376 = sshll.u32 %s368, 4
          %s377 = int_to_ptr.vmem [resolvable:$true] %s376
          %379 = dma.hbm_to_vmem [thread:$0]  %s375, 128, %s377, %s365
        $region36: #{tpu_custom_call.1} parent=31 // pred_fallthru
          _
        // Predicated region
        $region37: #{tpu_custom_call.1} parent=31 // pred_check
          %p380 = pneg %p91
        $region38: #{tpu_custom_call.1} parent=31 // pred_check_branch
          %382 = sbr.rel (%p380) target = $region40
        $region39: #{tpu_custom_call.1} parent=31 // pred_region
          %s383 = sand.u32 %s26, 1
          %s384 = scalar_lea.sflag [#allocation11], %s383
          %s385 = sand.u32 %s81, 1
          %s386 = scalar_lea.vmem [#allocation10], %s385
          %388 = vsyncadd %s384, 0
          %s389 = scalar_lea.hbm %s1, %s33
          %s391 = sshll.u32 %s389, 4
          %s392 = int_to_ptr.hbm [resolvable:$true] %s391
          %s393 = sshll.u32 %s386, 4
          %s394 = int_to_ptr.vmem [resolvable:$true] %s393
          %396 = dma.hbm_to_vmem [thread:$0]  %s392, 16, %s394, %s384
        $region40: #{tpu_custom_call.1} parent=31 // pred_fallthru
          _
        // Predicated region
        $region41: #{tpu_custom_call.1} parent=31 // pred_check
          %p397 = pneg %p117
        $region42: #{tpu_custom_call.1} parent=31 // pred_check_branch
          %399 = sbr.rel (%p397) target = $region44
        $region43: #{tpu_custom_call.1} parent=31 // pred_region
          %s400 = sand.u32 %s26, 1
          %s401 = scalar_lea.sflag [#allocation11], %s400
          %s402 = sand.u32 %s107, 1
          %s403 = scalar_lea.vmem [#allocation12], %s402
          %405 = vsyncadd %s401, 0
          %s406 = scalar_lea.hbm %s2, %s33
          %s408 = sshll.u32 %s406, 4
          %s409 = int_to_ptr.hbm [resolvable:$true] %s408
          %s410 = sshll.u32 %s403, 4
          %s411 = int_to_ptr.vmem [resolvable:$true] %s410
          %413 = dma.hbm_to_vmem [thread:$0]  %s409, 16, %s411, %s401
        $region44: #{tpu_custom_call.1} parent=31 // pred_fallthru
          _
        // Predicated region
        $region45: #{tpu_custom_call.1} parent=31 // pred_check
          %p414 = pneg %p166
        $region46: #{tpu_custom_call.1} parent=31 // pred_check_branch
          %416 = sbr.rel (%p414) target = $region48
        $region47: #{tpu_custom_call.1} parent=31 // pred_region
          %s417 = sand.u32 %s26, 1
          %s418 = scalar_lea.sflag [#allocation8], %s417
          %s419 = sand.u32 %s156, 1
          %s420 = smul.addr %s419, 16
          %s421 = scalar_lea.vmem [#allocation15], %s420
          %s422 = smul.u32 2, %s34
          %424 = vsyncadd %s418, 0
          %s425 = smul.addr %s33, 2
          %s426 = sadd.s32 %s422, %s425
          %s427 = smul.addr %s426, 8
          %s428 = scalar_lea.hbm %s4, %s427
          %s429 = sshll.u32 %s428, 4
          %s430 = int_to_ptr.hbm [resolvable:$true] %s429
          %s431 = sshll.u32 %s421, 4
          %s432 = int_to_ptr.vmem [resolvable:$true] %s431
          %437 = dma.hbm_to_vmem [thread:$0]  %s430, 256, %s432, %s418, 128, 128, 8
        $region48: #{tpu_custom_call.1} parent=31 // pred_fallthru
          _
        // Predicated region
        $region49: #{tpu_custom_call.1} parent=31 // pred_check
          %p438 = pneg %p194
        $region50: #{tpu_custom_call.1} parent=31 // pred_check_branch
          %440 = sbr.rel (%p438) target = $region52
        $region51: #{tpu_custom_call.1} parent=31 // pred_region
          %s441 = sand.u32 %s26, 1
          %s442 = scalar_lea.sflag [#allocation11], %s441
          %s443 = sand.u32 %s184, 1
          %s444 = smul.addr %s443, 16
          %s445 = scalar_lea.vmem [#allocation16], %s444
          %s446 = smul.u32 2, %s35
          %448 = vsyncadd %s442, 0
          %s449 = smul.addr %s33, 2
          %s450 = sadd.s32 %s446, %s449
          %s451 = smul.addr %s450, 8
          %s452 = scalar_lea.hbm %s5, %s451
          %s453 = sshll.u32 %s452, 4
          %s454 = int_to_ptr.hbm [resolvable:$true] %s453
          %s455 = sshll.u32 %s445, 4
          %s456 = int_to_ptr.vmem [resolvable:$true] %s455
          %461 = dma.hbm_to_vmem [thread:$0]  %s454, 256, %s456, %s442, 128, 128, 8
        $region52: #{tpu_custom_call.1} parent=31 // pred_fallthru
          _
        // Predicated region
        $region53: #{tpu_custom_call.1} parent=31 // pred_check
          %p462 = pneg %p222
        $region54: #{tpu_custom_call.1} parent=31 // pred_check_branch
          %464 = sbr.rel (%p462) target = $region56
        $region55: #{tpu_custom_call.1} parent=31 // pred_region
          %s465 = sand.u32 %s26, 1
          %s466 = scalar_lea.sflag [#allocation8], %s465
          %s467 = sand.u32 %s212, 1
          %s468 = smul.addr %s467, 16
          %s469 = scalar_lea.vmem [#allocation17], %s468
          %s470 = smul.u32 2, %s35
          %472 = vsyncadd %s466, 0
          %s473 = smul.addr %s33, 2
          %s474 = sadd.s32 %s470, %s473
          %s475 = smul.addr %s474, 8
          %s476 = scalar_lea.hbm %s6, %s475
          %s477 = sshll.u32 %s476, 4
          %s478 = int_to_ptr.hbm [resolvable:$true] %s477
          %s479 = sshll.u32 %s469, 4
          %s480 = int_to_ptr.vmem [resolvable:$true] %s479
          %485 = dma.hbm_to_vmem [thread:$0]  %s478, 256, %s480, %s466, 128, 128, 8
        $region56: #{tpu_custom_call.1} parent=31 // pred_fallthru
          _
      $region32: #{tpu_custom_call.1} parent=5 // pred_fallthru
        _
      %p486 = scmp.le.s32.totalorder 1, %s26
      %p487 = scmp.lt.s32.totalorder %s26, 3
      %p488 = pnand %p486, %p487
      %p489 = pneg %p488
      // Predicated region
      $region57: #{tpu_custom_call.1} parent=5 // pred_check
        _
      $region58: #{tpu_custom_call.1} parent=5 // pred_check_branch
        %491 = sbr.rel (%p488) target = $region60
      $region59: #{tpu_custom_call.1} parent=5 // pred_region
        %s492 = ssub.s32 %s26, 1
        %s493 = sand.u32 %s31, 1
        %s494 = scalar_lea.sflag [#allocation8], %s493
        %s495 = sand.u32 %s58, 1
        %s496 = smul.addr %s495, 8
        %s497 = scalar_lea.vmem [#allocation7], %s496
        // Predicated region
        $region61: #{tpu_custom_call.1} parent=59 // pred_check
          %p498 = pneg %p71
        $region62: #{tpu_custom_call.1} parent=59 // pred_check_branch
          %500 = sbr.rel (%p498) target = $region64
        $region63: #{tpu_custom_call.1} parent=59 // pred_region
          %502 = dma.done %s494, 128
        $region64: #{tpu_custom_call.1} parent=59 // pred_fallthru
          _
        %s503 = sand.u32 %s31, 1
        %s504 = scalar_lea.sflag [#allocation11], %s503
        %s505 = sand.u32 %s84, 1
        %s506 = scalar_lea.vmem [#allocation10], %s505
        // Predicated region
        $region65: #{tpu_custom_call.1} parent=59 // pred_check
          %p507 = pneg %p97
        $region66: #{tpu_custom_call.1} parent=59 // pred_check_branch
          %509 = sbr.rel (%p507) target = $region68
        $region67: #{tpu_custom_call.1} parent=59 // pred_region
          %511 = dma.done %s504, 16
        $region68: #{tpu_custom_call.1} parent=59 // pred_fallthru
          _
        %s512 = sand.u32 %s31, 1
        %s513 = scalar_lea.sflag [#allocation11], %s512
        %s514 = sand.u32 %s110, 1
        %s515 = scalar_lea.vmem [#allocation12], %s514
        // Predicated region
        $region69: #{tpu_custom_call.1} parent=59 // pred_check
          %p516 = pneg %p123
        $region70: #{tpu_custom_call.1} parent=59 // pred_check_branch
          %518 = sbr.rel (%p516) target = $region72
        $region71: #{tpu_custom_call.1} parent=59 // pred_region
          %520 = dma.done %s513, 16
        $region72: #{tpu_custom_call.1} parent=59 // pred_fallthru
          _
        // Predicated region
        $region73: #{tpu_custom_call.1} parent=59 // pred_check
          %p521 = pneg %p144
        $region74: #{tpu_custom_call.1} parent=59 // pred_check_branch
          %523 = sbr.rel (%p521) target = $region76
        $region75: #{tpu_custom_call.1} parent=59 // pred_region
          %525 = dma.done [#allocation14], 2048
        $region76: #{tpu_custom_call.1} parent=59 // pred_fallthru
          _
        %s526 = sand.u32 %s31, 1
        %s527 = scalar_lea.sflag [#allocation8], %s526
        %s528 = sand.u32 %s159, 1
        %s529 = smul.addr %s528, 16
        %s530 = scalar_lea.vmem [#allocation15], %s529
        // Predicated region
        $region77: #{tpu_custom_call.1} parent=59 // pred_check
          %p531 = pneg %p172
        $region78: #{tpu_custom_call.1} parent=59 // pred_check_branch
          %533 = sbr.rel (%p531) target = $region80
        $region79: #{tpu_custom_call.1} parent=59 // pred_region
          %535 = dma.done %s527, 256
        $region80: #{tpu_custom_call.1} parent=59 // pred_fallthru
          _
        %s536 = sand.u32 %s31, 1
        %s537 = scalar_lea.sflag [#allocation11], %s536
        %s538 = sand.u32 %s187, 1
        %s539 = smul.addr %s538, 16
        %s540 = scalar_lea.vmem [#allocation16], %s539
        // Predicated region
        $region81: #{tpu_custom_call.1} parent=59 // pred_check
          %p541 = pneg %p200
        $region82: #{tpu_custom_call.1} parent=59 // pred_check_branch
          %543 = sbr.rel (%p541) target = $region84
        $region83: #{tpu_custom_call.1} parent=59 // pred_region
          %545 = dma.done %s537, 256
        $region84: #{tpu_custom_call.1} parent=59 // pred_fallthru
          _
        %s546 = sand.u32 %s31, 1
        %s547 = scalar_lea.sflag [#allocation8], %s546
        %s548 = sand.u32 %s215, 1
        %s549 = smul.addr %s548, 16
        %s550 = scalar_lea.vmem [#allocation17], %s549
        // Predicated region
        $region85: #{tpu_custom_call.1} parent=59 // pred_check
          %p551 = pneg %p228
        $region86: #{tpu_custom_call.1} parent=59 // pred_check_branch
          %553 = sbr.rel (%p551) target = $region88
        $region87: #{tpu_custom_call.1} parent=59 // pred_region
          %555 = dma.done %s547, 256
        $region88: #{tpu_custom_call.1} parent=59 // pred_fallthru
          _
        %s556 = sand.u32 %s31, 1
        %s557 = scalar_lea.sflag [#allocation8], %s556
        %s558 = sand.u32 %s58, 1
        %s559 = smul.addr %s558, 8
        %s560 = scalar_lea.vmem [#allocation7], %s559
        %p561 = pneg %p71
        %p562 = pneg %p68
        %s563 = sand.u32 %s31, 1
        %s564 = scalar_lea.sflag [#allocation11], %s563
        %s565 = sand.u32 %s84, 1
        %s566 = scalar_lea.vmem [#allocation10], %s565
        %p567 = pneg %p97
        %p568 = pneg %p94
        %s569 = sand.u32 %s31, 1
        %s570 = scalar_lea.sflag [#allocation11], %s569
        %s571 = sand.u32 %s110, 1
        %s572 = scalar_lea.vmem [#allocation12], %s571
        %p573 = pneg %p123
        %p574 = pneg %p120
        %p575 = pneg %p144
        %p576 = pneg %p141
        %s577 = sand.u32 %s31, 1
        %s578 = scalar_lea.sflag [#allocation8], %s577
        %s579 = sand.u32 %s159, 1
        %s580 = smul.addr %s579, 16
        %s581 = scalar_lea.vmem [#allocation15], %s580
        %p582 = pneg %p172
        %p583 = pneg %p169
        %s584 = sand.u32 %s31, 1
        %s585 = scalar_lea.sflag [#allocation11], %s584
        %s586 = sand.u32 %s187, 1
        %s587 = smul.addr %s586, 16
        %s588 = scalar_lea.vmem [#allocation16], %s587
        %p589 = pneg %p200
        %p590 = pneg %p197
        %s591 = sand.u32 %s31, 1
        %s592 = scalar_lea.sflag [#allocation8], %s591
        %s593 = sand.u32 %s215, 1
        %s594 = smul.addr %s593, 16
        %s595 = scalar_lea.vmem [#allocation17], %s594
        %p596 = pneg %p228
        %p597 = pneg %p225
        %p598 = pneg %p249
        %p599 = pneg %p246
        %p600 = pneg %p270
        %p601 = pneg %p267
        %p602 = pneg %p291
        %p603 = pneg %p288
        %p604 = pneg %p319
        %p605 = pneg %p316
        %s606 = sand.u32 %s306, 1
        %s607 = scalar_lea.sflag [#allocation9], %s606
        %s608 = sand.u32 %s306, 1
        %s609 = smul.addr %s608, 16
        %s610 = scalar_lea.vmem [#allocation18], %s609
        %s611 = smul.u32 2, %s37
        %s612 = smul.u32 2, %s38
        %s613 = smul.u32 2, %s38
        %s614 = smul.u32 2, %s37
        %v615 = vld [vmem:[%s7] sm:$0x1]
        %v616 = vld [vmem:[%s8] sm:$0x1]
        %v617 = vld [vmem:[%s9] sm:$0x1]
        %p618 = scmp.eq.s32.totalorder %s38, 0
        // Predicated region
        $region89: #{tpu_custom_call.1} parent=59 // pred_check
          %p619 = pneg %p618
        $region90: #{tpu_custom_call.1} parent=59 // pred_check_branch
          %621 = sbr.rel (%p619) target = $region92
        $region91: #{tpu_custom_call.1} parent=59 // pred_region
          %vm622 = vcmask 7168
          %623 = vst.msk [vmem:[#allocation4] sm:$0xff] %vm622, -inf
          %624 = vst.msk [vmem:[#allocation4 + $0x8] sm:$0xff] %vm622, -inf
          %625 = vst.msk [vmem:[#allocation4 + $0x10] sm:$0xff] %vm622, -inf
          %626 = vst.msk [vmem:[#allocation4 + $0x18] sm:$0xff] %vm622, -inf
          %627 = vst.msk [vmem:[#allocation4 + $0x20] sm:$0xff] %vm622, -inf
          %628 = vst.msk [vmem:[#allocation4 + $0x28] sm:$0xff] %vm622, -inf
          %629 = vst.msk [vmem:[#allocation4 + $0x30] sm:$0xff] %vm622, -inf
          %630 = vst.msk [vmem:[#allocation4 + $0x38] sm:$0xff] %vm622, -inf
          %631 = vst.msk [vmem:[#allocation5] sm:$0xff] %vm622, 0.0
          %632 = vst.msk [vmem:[#allocation5 + $0x8] sm:$0xff] %vm622, 0.0
          %633 = vst.msk [vmem:[#allocation5 + $0x10] sm:$0xff] %vm622, 0.0
          %634 = vst.msk [vmem:[#allocation5 + $0x18] sm:$0xff] %vm622, 0.0
          %635 = vst.msk [vmem:[#allocation5 + $0x20] sm:$0xff] %vm622, 0.0
          %636 = vst.msk [vmem:[#allocation5 + $0x28] sm:$0xff] %vm622, 0.0
          %637 = vst.msk [vmem:[#allocation5 + $0x30] sm:$0xff] %vm622, 0.0
          %638 = vst.msk [vmem:[#allocation5 + $0x38] sm:$0xff] %vm622, 0.0
          %639 = vst [vmem:[#allocation6] sm:$0xff] 0.0
          %640 = vst [vmem:[#allocation6 + $0x8] sm:$0xff] 0.0
          %v641 = vld [vmem:[%s497] sm:$0xff]
          %vm642 = vcmask 523264
          %v643 = vsel %vm642, %v641, 0.0
          %644 = vadd.xlane.f32.xlu0 %v643
          %v645 = vpop.xlane.xlu0 %644
          %v646 = vrcp.pop 64.0
          %v647 = vmul.f32 64.0, %v646
          %v648 = vsub.f32 1.0, %v647
          %v649 = vmul.f32 %v646, %v648
          %v650 = vadd.f32 %v646, %v649
          %vm651 = vweird.f32 %v646
          %v652 = vsel %vm651, %v646, %v650
          %v653 = vmul.f32 %v645, %v652
          %v654 = vsub.f32 %v641, %v653
          %v655 = vmul.f32 %v654, %v654
          %v656 = vsel %vm642, %v655, 0.0
          %657 = vadd.xlane.f32.xlu0 %v656
          %v658 = vpop.xlane.xlu0 %657
          %v659 = vmul.f32 %v658, %v652
          %v660 = vadd.f32 %v659, 1e-06
          %v661 = vrsqrt.pop %v660
          %v662 = vmul.f32 %v661, %v660
          %v663 = vmul.f32 %v662, %v661
          %v664 = vmul.f32 0.5, %v663
          %v665 = vsub.f32 1.5, %v664
          %v666 = vmul.f32 %v661, %v665
          %vm667 = vweird.f32 %v660
          %vm668 = vweird.f32 %v661
          %vm669 = vmor %vm667, %vm668
          %v670 = vsel %vm669, %v661, %v666
          %v671 = vmul.f32 %v654, %v670
          %v672 = vld [vmem:[%s506] sm:$0x1]
          %v673 = vadd.f32 %v672, 1.0
          %v675 = vperm.slane %v673, 0
          %v677 = vmul.f32 %v671, %v675
          %v678 = vld [vmem:[%s515] sm:$0x1]
          %v680 = vperm.slane %v678, 0
          %v682 = vadd.f32 %v677, %v680
          %v683 = vld [vmem:[#allocation13] sm:$0xff]
          %v684 = vld [vmem:[#allocation13 + $0x8] sm:$0xff]
          %v685 = vld [vmem:[#allocation13 + $0x10] sm:$0xff]
          %v686 = vld [vmem:[#allocation13 + $0x18] sm:$0xff]
          %v687 = vld [vmem:[#allocation13 + $0x20] sm:$0xff]
          %v688 = vld [vmem:[#allocation13 + $0x28] sm:$0xff]
          %v689 = vld [vmem:[#allocation13 + $0x30] sm:$0xff]
          %v690 = vld [vmem:[#allocation13 + $0x38] sm:$0xff]
          %v691 = vld [vmem:[#allocation13 + $0x40] sm:$0xff]
          %v692 = vld [vmem:[#allocation13 + $0x48] sm:$0xff]
          %v693 = vld [vmem:[#allocation13 + $0x50] sm:$0xff]
          %v694 = vld [vmem:[#allocation13 + $0x58] sm:$0xff]
          %v695 = vld [vmem:[#allocation13 + $0x60] sm:$0xff]
          %v696 = vld [vmem:[#allocation13 + $0x68] sm:$0xff]
          %v697 = vld [vmem:[#allocation13 + $0x70] sm:$0xff]
          %v698 = vld [vmem:[#allocation13 + $0x78] sm:$0xff]
          %v700 = vsel %vm642, %v682, 0
          %702 = vmatpush.msra.mxu0 0.0
          %703 = vmatpush.msra.mxu0 0.0
          %704 = vmatpush.msra.mxu0 0.0
          %705 = vmatpush.msra.mxu0 0.0
          %706 = vmatpush.msra.mxu0 0.0
          %707 = vmatpush.msra.mxu0 0.0
          %708 = vmatpush.msra.mxu0 0.0
          %709 = vmatpush.msra.mxu0 0.0
          %710 = vmatpush.msra.mxu0 %v697
          %711 = vmatpush.msra.mxu0 %v695
          %712 = vmatpush.msra.mxu0 %v693
          %713 = vmatpush.msra.mxu0 %v691
          %714 = vmatpush.msra.mxu0 %v689
          %715 = vmatpush.msra.mxu0 %v687
          %716 = vmatpush.msra.mxu0 %v685
          %717 = vmatpush.msra.mxu0 %v683
          %718 = vmatmul.f32.gmra.mxu0 %v700
          %v719 = vpop.f32.mrf.mxu0
          %v720 = vadd.f32 0.0, %v719
          %721 = vdwg.mxu0
          %722 = vmatpush.msra.mxu0 0.0
          %723 = vmatpush.msra.mxu0 0.0
          %724 = vmatpush.msra.mxu0 0.0
          %725 = vmatpush.msra.mxu0 0.0
          %726 = vmatpush.msra.mxu0 0.0
          %727 = vmatpush.msra.mxu0 0.0
          %728 = vmatpush.msra.mxu0 0.0
          %729 = vmatpush.msra.mxu0 0.0
          %730 = vmatpush.msra.mxu0 %v698
          %731 = vmatpush.msra.mxu0 %v696
          %732 = vmatpush.msra.mxu0 %v694
          %733 = vmatpush.msra.mxu0 %v692
          %734 = vmatpush.msra.mxu0 %v690
          %735 = vmatpush.msra.mxu0 %v688
          %736 = vmatpush.msra.mxu0 %v686
          %737 = vmatpush.msra.mxu0 %v684
          %738 = vmatmul.f32.gmra.mxu0 %v700
          %v739 = vpop.f32.mrf.mxu0
          %v740 = vadd.f32 0.0, %v739
          %741 = vdwg.mxu0
          %742 = vst [vmem:[#allocation3] sm:$0xff] %v720
          %743 = vst [vmem:[#allocation3 + $0x8] sm:$0xff] %v740
          %v744 = vld [vmem:[%s530] sm:$0xff]
          %v745 = vld [vmem:[%s530 + $0x8] sm:$0xff]
          %v746 = vmul.f32 %v744, %v744
          %v747 = vmul.f32 %v745, %v745
          %vm748 = vcmask 261120
          %v749 = vsel %vm748, %v746, 0.0
          %750 = vadd.xlane.f32.xlu0 %v749
          %v751 = vpop.xlane.xlu0 %750
          %v752 = vsel %vm748, %v747, 0.0
          %753 = vadd.xlane.f32.xlu0 %v752
          %v754 = vpop.xlane.xlu0 %753
          %v755 = vrcp.pop 32.0
          %v756 = vmul.f32 32.0, %v755
          %v757 = vsub.f32 1.0, %v756
          %v758 = vmul.f32 %v755, %v757
          %v759 = vadd.f32 %v755, %v758
          %vm760 = vweird.f32 %v755
          %v761 = vsel %vm760, %v755, %v759
          %v762 = vmul.f32 %v751, %v761
          %v763 = vmul.f32 %v754, %v761
          %v764 = vadd.f32 %v762, 1e-06
          %v765 = vadd.f32 %v763, 1e-06
          %v766 = vrsqrt.pop %v764
          %v767 = vmul.f32 %v766, %v764
          %v768 = vmul.f32 %v767, %v766
          %v769 = vmul.f32 0.5, %v768
          %v770 = vsub.f32 1.5, %v769
          %v771 = vmul.f32 %v766, %v770
          %vm772 = vweird.f32 %v764
          %vm773 = vweird.f32 %v766
          %vm774 = vmor %vm772, %vm773
          %v775 = vsel %vm774, %v766, %v771
          %v776 = vrsqrt.pop %v765
          %v777 = vmul.f32 %v776, %v765
          %v778 = vmul.f32 %v777, %v776
          %v779 = vmul.f32 0.5, %v778
          %v780 = vsub.f32 1.5, %v779
          %v781 = vmul.f32 %v776, %v780
          %vm782 = vweird.f32 %v765
          %vm783 = vweird.f32 %v776
          %vm784 = vmor %vm782, %vm783
          %v785 = vsel %vm784, %v776, %v781
          %v786 = vmul.f32 %v744, %v775
          %v787 = vmul.f32 %v745, %v785
          %v789 = vperm.slane %v615, 0
          %v791 = vmul.f32 %v786, %v789
          %v792 = vmul.f32 %v787, %v789
          %v793 = vmul.f32 %v791, 0.17677669
          %v794 = vmul.f32 %v792, 0.17677669
          %795 = vst.msk [vmem:[#allocation2] sm:$0xff] %vm748, %v793
          %796 = vst.msk [vmem:[#allocation2 + $0x8] sm:$0xff] %vm748, %v794
          %799 = vrot.lane.b32.xlu0 %v746, 96
          %v800 = vpop.permute.xlu0 %799
          %801 = vrot.lane.b32.xlu0 %v747, 96
          %v802 = vpop.permute.xlu0 %801
          %v805 = vsel %vm748, %v800, 0.0
          %806 = vadd.xlane.f32.xlu0 %v805
          %v807 = vpop.xlane.xlu0 %806
          %v808 = vsel %vm748, %v802, 0.0
          %809 = vadd.xlane.f32.xlu0 %v808
          %v810 = vpop.xlane.xlu0 %809
          %v811 = vmul.f32 %v807, %v761
          %v812 = vmul.f32 %v810, %v761
          %v813 = vadd.f32 %v811, 1e-06
          %v814 = vadd.f32 %v812, 1e-06
          %v815 = vrsqrt.pop %v813
          %v816 = vmul.f32 %v815, %v813
          %v817 = vmul.f32 %v816, %v815
          %v818 = vmul.f32 0.5, %v817
          %v819 = vsub.f32 1.5, %v818
          %v820 = vmul.f32 %v815, %v819
          %vm821 = vweird.f32 %v813
          %vm822 = vweird.f32 %v815
          %vm823 = vmor %vm821, %vm822
          %v824 = vsel %vm823, %v815, %v820
          %v825 = vrsqrt.pop %v814
          %v826 = vmul.f32 %v825, %v814
          %v827 = vmul.f32 %v826, %v825
          %v828 = vmul.f32 0.5, %v827
          %v829 = vsub.f32 1.5, %v828
          %v830 = vmul.f32 %v825, %v829
          %vm831 = vweird.f32 %v814
          %vm832 = vweird.f32 %v825
          %vm833 = vmor %vm831, %vm832
          %v834 = vsel %vm833, %v825, %v830
          %v835 = vmul.f32 %v744, %v824
          %v836 = vmul.f32 %v745, %v834
          %837 = vrot.lane.b32.xlu0 %v789, 32
          %v838 = vpop.permute.xlu0 %837
          %v840 = vmul.f32 %v835, %v838
          %v841 = vmul.f32 %v836, %v838
          %v842 = vmul.f32 %v840, 0.17677669
          %v843 = vmul.f32 %v841, 0.17677669
          %vm844 = vcmask 523520
          %845 = vst.msk [vmem:[#allocation2] sm:$0xff] %vm844, %v842
          %846 = vst.msk [vmem:[#allocation2 + $0x8] sm:$0xff] %vm844, %v843
          %847 = vrot.lane.b32.xlu0 %v746, 64
          %v848 = vpop.permute.xlu0 %847
          %849 = vrot.lane.b32.xlu0 %v747, 64
          %v850 = vpop.permute.xlu0 %849
          %v853 = vsel %vm748, %v848, 0.0
          %854 = vadd.xlane.f32.xlu0 %v853
          %v855 = vpop.xlane.xlu0 %854
          %v856 = vsel %vm748, %v850, 0.0
          %857 = vadd.xlane.f32.xlu0 %v856
          %v858 = vpop.xlane.xlu0 %857
          %v859 = vmul.f32 %v855, %v761
          %v860 = vmul.f32 %v858, %v761
          %v861 = vadd.f32 %v859, 1e-06
          %v862 = vadd.f32 %v860, 1e-06
          %v863 = vrsqrt.pop %v861
          %v864 = vmul.f32 %v863, %v861
          %v865 = vmul.f32 %v864, %v863
          %v866 = vmul.f32 0.5, %v865
          %v867 = vsub.f32 1.5, %v866
          %v868 = vmul.f32 %v863, %v867
          %vm869 = vweird.f32 %v861
          %vm870 = vweird.f32 %v863
          %vm871 = vmor %vm869, %vm870
          %v872 = vsel %vm871, %v863, %v868
          %v873 = vrsqrt.pop %v862
          %v874 = vmul.f32 %v873, %v862
          %v875 = vmul.f32 %v874, %v873
          %v876 = vmul.f32 0.5, %v875
          %v877 = vsub.f32 1.5, %v876
          %v878 = vmul.f32 %v873, %v877
          %vm879 = vweird.f32 %v862
          %vm880 = vweird.f32 %v873
          %vm881 = vmor %vm879, %vm880
          %v882 = vsel %vm881, %v873, %v878
          %v883 = vmul.f32 %v744, %v872
          %v884 = vmul.f32 %v745, %v882
          %885 = vrot.lane.b32.xlu0 %v789, 64
          %v886 = vpop.permute.xlu0 %885
          %v888 = vmul.f32 %v883, %v886
          %v889 = vmul.f32 %v884, %v886
          %v890 = vmul.f32 %v888, 0.17677669
          %v891 = vmul.f32 %v889, 0.17677669
          %vm892 = vcmask 785920
          %893 = vst.msk [vmem:[#allocation2] sm:$0xff] %vm892, %v890
          %894 = vst.msk [vmem:[#allocation2 + $0x8] sm:$0xff] %vm892, %v891
          %895 = vrot.lane.b32.xlu0 %v746, 32
          %v896 = vpop.permute.xlu0 %895
          %897 = vrot.lane.b32.xlu0 %v747, 32
          %v898 = vpop.permute.xlu0 %897
          %v901 = vsel %vm748, %v896, 0.0
          %902 = vadd.xlane.f32.xlu0 %v901
          %v903 = vpop.xlane.xlu0 %902
          %v904 = vsel %vm748, %v898, 0.0
          %905 = vadd.xlane.f32.xlu0 %v904
          %v906 = vpop.xlane.xlu0 %905
          %v907 = vmul.f32 %v903, %v761
          %v908 = vmul.f32 %v906, %v761
          %v909 = vadd.f32 %v907, 1e-06
          %v910 = vadd.f32 %v908, 1e-06
          %v911 = vrsqrt.pop %v909
          %v912 = vmul.f32 %v911, %v909
          %v913 = vmul.f32 %v912, %v911
          %v914 = vmul.f32 0.5, %v913
          %v915 = vsub.f32 1.5, %v914
          %v916 = vmul.f32 %v911, %v915
          %vm917 = vweird.f32 %v909
          %vm918 = vweird.f32 %v911
          %vm919 = vmor %vm917, %vm918
          %v920 = vsel %vm919, %v911, %v916
          %v921 = vrsqrt.pop %v910
          %v922 = vmul.f32 %v921, %v910
          %v923 = vmul.f32 %v922, %v921
          %v924 = vmul.f32 0.5, %v923
          %v925 = vsub.f32 1.5, %v924
          %v926 = vmul.f32 %v921, %v925
          %vm927 = vweird.f32 %v910
          %vm928 = vweird.f32 %v921
          %vm929 = vmor %vm927, %vm928
          %v930 = vsel %vm929, %v921, %v926
          %v931 = vmul.f32 %v744, %v920
          %v932 = vmul.f32 %v745, %v930
          %933 = vrot.lane.b32.xlu0 %v789, 96
          %v934 = vpop.permute.xlu0 %933
          %v936 = vmul.f32 %v931, %v934
          %v937 = vmul.f32 %v932, %v934
          %v938 = vmul.f32 %v936, 0.17677669
          %v939 = vmul.f32 %v937, 0.17677669
          %vm940 = vcmask 1048320
          %941 = vst.msk [vmem:[#allocation2] sm:$0xff] %vm940, %v938
          %942 = vst.msk [vmem:[#allocation2 + $0x8] sm:$0xff] %vm940, %v939
        $region92: #{tpu_custom_call.1} parent=59 // pred_fallthru
          _
        %v943 = vld [vmem:[%s540] sm:$0xff]
        %v944 = vld [vmem:[%s540 + $0x8] sm:$0xff]
        %v945 = vld [vmem:[%s550] sm:$0xff]
        %v946 = vld [vmem:[%s550 + $0x8] sm:$0xff]
        %v947 = vld [vmem:[#allocation2] sm:$0xff]
        %v948 = vld [vmem:[#allocation2 + $0x8] sm:$0xff]
        %v949 = vmul.f32 %v943, %v943
        %v950 = vmul.f32 %v944, %v944
        %vm951 = vcmask 261120
        %v952 = vsel %vm951, %v949, 0.0
        %953 = vadd.xlane.f32.xlu0 %v952
        %v954 = vpop.xlane.xlu0 %953
        %v955 = vsel %vm951, %v950, 0.0
        %956 = vadd.xlane.f32.xlu0 %v955
        %v957 = vpop.xlane.xlu0 %956
        %v958 = vrcp.pop 32.0
        %v959 = vmul.f32 32.0, %v958
        %v960 = vsub.f32 1.0, %v959
        %v961 = vmul.f32 %v958, %v960
        %v962 = vadd.f32 %v958, %v961
        %vm963 = vweird.f32 %v958
        %v964 = vsel %vm963, %v958, %v962
        %v965 = vmul.f32 %v954, %v964
        %v966 = vmul.f32 %v957, %v964
        %v967 = vadd.f32 %v965, 1e-06
        %v968 = vadd.f32 %v966, 1e-06
        %v969 = vrsqrt.pop %v967
        %v970 = vmul.f32 %v969, %v967
        %v971 = vmul.f32 %v970, %v969
        %v972 = vmul.f32 0.5, %v971
        %v973 = vsub.f32 1.5, %v972
        %v974 = vmul.f32 %v969, %v973
        %vm975 = vweird.f32 %v967
        %vm976 = vweird.f32 %v969
        %vm977 = vmor %vm975, %vm976
        %v978 = vsel %vm977, %v969, %v974
        %v979 = vrsqrt.pop %v968
        %v980 = vmul.f32 %v979, %v968
        %v981 = vmul.f32 %v980, %v979
        %v982 = vmul.f32 0.5, %v981
        %v983 = vsub.f32 1.5, %v982
        %v984 = vmul.f32 %v979, %v983
        %vm985 = vweird.f32 %v968
        %vm986 = vweird.f32 %v979
        %vm987 = vmor %vm985, %vm986
        %v988 = vsel %vm987, %v979, %v984
        %v989 = vmul.f32 %v943, %v978
        %v990 = vmul.f32 %v944, %v988
        %v992 = vperm.slane %v616, 0
        %v994 = vmul.f32 %v989, %v992
        %v995 = vmul.f32 %v990, %v992
        %v997 = vsel %vm951, %v947, 0
        %v1000 = vsel %vm951, %v948, 0
        %v1003 = vsel %vm951, %v994, 0
        %v1006 = vsel %vm951, %v995, 0
        %1008 = vmatpush.xpose.msra.mxu0 0.0
        %1009 = vmatpush.xpose.msra.mxu0 0.0
        %1010 = vmatpush.xpose.msra.mxu0 0.0
        %1011 = vmatpush.xpose.msra.mxu0 0.0
        %1012 = vmatpush.xpose.msra.mxu0 0.0
        %1013 = vmatpush.xpose.msra.mxu0 0.0
        %1014 = vmatpush.xpose.msra.mxu0 0.0
        %1015 = vmatpush.xpose.msra.mxu0 0.0
        %1016 = vmatpush.xpose.msra.mxu0 0.0
        %1017 = vmatpush.xpose.msra.mxu0 0.0
        %1018 = vmatpush.xpose.msra.mxu0 0.0
        %1019 = vmatpush.xpose.msra.mxu0 0.0
        %1020 = vmatpush.xpose.msra.mxu0 0.0
        %1021 = vmatpush.xpose.msra.mxu0 0.0
        %1022 = vmatpush.xpose.msra.mxu0 %v1006
        %1023 = vmatpush.xpose.msra.mxu0 %v1003
        %1024 = vmatmul.f32.gmra.mxu0 %v997
        %v1025 = vpop.f32.mrf.mxu0
        %v1026 = vadd.f32 0.0, %v1025
        %1027 = vmatmul.f32.gmra.mxu0 %v1000
        %v1028 = vpop.f32.mrf.mxu0
        %v1029 = vadd.f32 0.0, %v1028
        %1030 = vdwg.mxu0
        %v1031 = vld [vmem:[#allocation4] sm:$0xff]
        %v1032 = vld [vmem:[#allocation4 + $0x8] sm:$0xff]
        %vm1033 = vcmask 130048
        %v1034 = vsel %vm1033, %v1026, -inf
        %1035 = vmax.xlane.f32.xlu0 %v1034
        %v1036 = vpop.xlane.xlu0 %1035
        %v1037 = vsel %vm1033, %v1029, -inf
        %1038 = vmax.xlane.f32.xlu0 %v1037
        %v1039 = vpop.xlane.xlu0 %1038
        %v1040 = vmax.f32 %v1031, %v1036
        %v1041 = vmax.f32 %v1032, %v1039
        %v1042 = vsub.f32 %v1031, %v1040
        %v1043 = vsub.f32 %v1032, %v1041
        %v1044 = vmul.f32 %v1042, 1.442695
        %v1045 = vpow.pop %v1044
        %v1046 = vmul.f32 %v1043, 1.442695
        %v1047 = vpow.pop %v1046
        %1049 = vset.pattern.permute.xlu0 0
        %1050 = vperm.xlu0 %1049, %v1040
        %v1051 = vpop.permute.xlu0 %1050
        %1054 = vset.pattern.permute.xlu0 0
        %1055 = vperm.xlu0 %1054, %v1041
        %v1056 = vpop.permute.xlu0 %1055
        %v1058 = vsub.f32 %v1026, %v1051
        %v1059 = vsub.f32 %v1029, %v1056
        %v1060 = vmul.f32 %v1058, 1.442695
        %v1061 = vpow.pop %v1060
        %v1062 = vmul.f32 %v1059, 1.442695
        %v1063 = vpow.pop %v1062
        %v1064 = vld [vmem:[#allocation5] sm:$0xff]
        %v1065 = vld [vmem:[#allocation5 + $0x8] sm:$0xff]
        %v1066 = vmul.f32 %v1045, %v1064
        %v1067 = vmul.f32 %v1047, %v1065
        %v1068 = vsel %vm1033, %v1061, 0.0
        %1069 = vadd.xlane.f32.xlu0 %v1068
        %v1070 = vpop.xlane.xlu0 %1069
        %v1071 = vsel %vm1033, %v1063, 0.0
        %1072 = vadd.xlane.f32.xlu0 %v1071
        %v1073 = vpop.xlane.xlu0 %1072
        %v1074 = vadd.f32 %v1066, %v1070
        %v1075 = vadd.f32 %v1067, %v1073
        %vm1076 = vcmask 7168
        %1077 = vst.msk [vmem:[#allocation5] sm:$0xff] %vm1076, %v1074
        %1078 = vst.msk [vmem:[#allocation5 + $0x8] sm:$0xff] %vm1076, %v1075
        %v1080 = vsel %vm1033, %v1061, 0
        %v1083 = vsel %vm1033, %v1063, 0
        %1085 = vmatpush.msra.mxu0 0.0
        %1086 = vmatpush.msra.mxu0 0.0
        %1087 = vmatpush.msra.mxu0 0.0
        %1088 = vmatpush.msra.mxu0 0.0
        %1089 = vmatpush.msra.mxu0 0.0
        %1090 = vmatpush.msra.mxu0 0.0
        %1091 = vmatpush.msra.mxu0 0.0
        %1092 = vmatpush.msra.mxu0 0.0
        %1093 = vmatpush.msra.mxu0 0.0
        %1094 = vmatpush.msra.mxu0 0.0
        %1095 = vmatpush.msra.mxu0 0.0
        %1096 = vmatpush.msra.mxu0 0.0
        %1097 = vmatpush.msra.mxu0 0.0
        %1098 = vmatpush.msra.mxu0 0.0
        %1099 = vmatpush.msra.mxu0 %v946
        %1100 = vmatpush.msra.mxu0 %v945
        %1101 = vmatmul.f32.gmra.mxu0 %v1080
        %v1102 = vpop.f32.mrf.mxu0
        %v1103 = vadd.f32 0.0, %v1102
        %1104 = vmatmul.f32.gmra.mxu0 %v1083
        %v1105 = vpop.f32.mrf.mxu0
        %v1106 = vadd.f32 0.0, %v1105
        %1107 = vdwg.mxu0
        %v1108 = vld [vmem:[#allocation6] sm:$0xff]
        %v1109 = vld [vmem:[#allocation6 + $0x8] sm:$0xff]
        %1111 = vset.pattern.permute.xlu0 0
        %1112 = vperm.xlu0 %1111, %v1045
        %v1113 = vpop.permute.xlu0 %1112
        %1116 = vset.pattern.permute.xlu0 0
        %1117 = vperm.xlu0 %1116, %v1047
        %v1118 = vpop.permute.xlu0 %1117
        %v1120 = vmul.f32 %v1113, %v1108
        %v1121 = vmul.f32 %v1118, %v1109
        %v1122 = vadd.f32 %v1120, %v1103
        %v1123 = vadd.f32 %v1121, %v1106
        %1124 = vst.msk [vmem:[#allocation6] sm:$0xff] %vm951, %v1122
        %1125 = vst.msk [vmem:[#allocation6 + $0x8] sm:$0xff] %vm951, %v1123
        %1126 = vst.msk [vmem:[#allocation4] sm:$0xff] %vm1076, %v1040
        %1127 = vst.msk [vmem:[#allocation4 + $0x8] sm:$0xff] %vm1076, %v1041
        %v1128 = vld [vmem:[#allocation2] sm:$0xff]
        %v1129 = vld [vmem:[#allocation2 + $0x8] sm:$0xff]
        %1132 = vrot.lane.b32.xlu0 %v949, 96
        %v1133 = vpop.permute.xlu0 %1132
        %1134 = vrot.lane.b32.xlu0 %v950, 96
        %v1135 = vpop.permute.xlu0 %1134
        %v1138 = vsel %vm951, %v1133, 0.0
        %1139 = vadd.xlane.f32.xlu0 %v1138
        %v1140 = vpop.xlane.xlu0 %1139
        %v1141 = vsel %vm951, %v1135, 0.0
        %1142 = vadd.xlane.f32.xlu0 %v1141
        %v1143 = vpop.xlane.xlu0 %1142
        %v1144 = vmul.f32 %v1140, %v964
        %v1145 = vmul.f32 %v1143, %v964
        %v1146 = vadd.f32 %v1144, 1e-06
        %v1147 = vadd.f32 %v1145, 1e-06
        %v1148 = vrsqrt.pop %v1146
        %v1149 = vmul.f32 %v1148, %v1146
        %v1150 = vmul.f32 %v1149, %v1148
        %v1151 = vmul.f32 0.5, %v1150
        %v1152 = vsub.f32 1.5, %v1151
        %v1153 = vmul.f32 %v1148, %v1152
        %vm1154 = vweird.f32 %v1146
        %vm1155 = vweird.f32 %v1148
        %vm1156 = vmor %vm1154, %vm1155
        %v1157 = vsel %vm1156, %v1148, %v1153
        %v1158 = vrsqrt.pop %v1147
        %v1159 = vmul.f32 %v1158, %v1147
        %v1160 = vmul.f32 %v1159, %v1158
        %v1161 = vmul.f32 0.5, %v1160
        %v1162 = vsub.f32 1.5, %v1161
        %v1163 = vmul.f32 %v1158, %v1162
        %vm1164 = vweird.f32 %v1147
        %vm1165 = vweird.f32 %v1158
        %vm1166 = vmor %vm1164, %vm1165
        %v1167 = vsel %vm1166, %v1158, %v1163
        %v1168 = vmul.f32 %v943, %v1157
        %v1169 = vmul.f32 %v944, %v1167
        %1170 = vrot.lane.b32.xlu0 %v992, 32
        %v1171 = vpop.permute.xlu0 %1170
        %v1173 = vmul.f32 %v1168, %v1171
        %v1174 = vmul.f32 %v1169, %v1171
        %1177 = vrot.lane.b32.xlu0 %v1128, 96
        %v1178 = vpop.permute.xlu0 %1177
        %1179 = vrot.lane.b32.xlu0 %v1129, 96
        %v1180 = vpop.permute.xlu0 %1179
        %1183 = vrot.lane.b32.xlu0 %v1173, 96
        %v1184 = vpop.permute.xlu0 %1183
        %1185 = vrot.lane.b32.xlu0 %v1174, 96
        %v1186 = vpop.permute.xlu0 %1185
        %v1187 = vsel %vm951, %v1178, 0
        %v1189 = vsel %vm951, %v1180, 0
        %v1191 = vsel %vm951, %v1184, 0
        %v1193 = vsel %vm951, %v1186, 0
        %1195 = vmatpush.xpose.msra.mxu0 0.0
        %1196 = vmatpush.xpose.msra.mxu0 0.0
        %1197 = vmatpush.xpose.msra.mxu0 0.0
        %1198 = vmatpush.xpose.msra.mxu0 0.0
        %1199 = vmatpush.xpose.msra.mxu0 0.0
        %1200 = vmatpush.xpose.msra.mxu0 0.0
        %1201 = vmatpush.xpose.msra.mxu0 0.0
        %1202 = vmatpush.xpose.msra.mxu0 0.0
        %1203 = vmatpush.xpose.msra.mxu0 0.0
        %1204 = vmatpush.xpose.msra.mxu0 0.0
        %1205 = vmatpush.xpose.msra.mxu0 0.0
        %1206 = vmatpush.xpose.msra.mxu0 0.0
        %1207 = vmatpush.xpose.msra.mxu0 0.0
        %1208 = vmatpush.xpose.msra.mxu0 0.0
        %1209 = vmatpush.xpose.msra.mxu0 %v1193
        %1210 = vmatpush.xpose.msra.mxu0 %v1191
        %1211 = vmatmul.f32.gmra.mxu0 %v1187
        %v1212 = vpop.f32.mrf.mxu0
        %v1213 = vadd.f32 0.0, %v1212
        %1214 = vmatmul.f32.gmra.mxu0 %v1189
        %v1215 = vpop.f32.mrf.mxu0
        %v1216 = vadd.f32 0.0, %v1215
        %1217 = vdwg.mxu0
        %s1218 = scalar_lea.vmem [#allocation4], 16
        %v1219 = vld [vmem:[%s1218] sm:$0xff]
        %v1220 = vld [vmem:[%s1218 + $0x8] sm:$0xff]
        %v1221 = vsel %vm1033, %v1213, -inf
        %1222 = vmax.xlane.f32.xlu0 %v1221
        %v1223 = vpop.xlane.xlu0 %1222
        %v1224 = vsel %vm1033, %v1216, -inf
        %1225 = vmax.xlane.f32.xlu0 %v1224
        %v1226 = vpop.xlane.xlu0 %1225
        %v1227 = vmax.f32 %v1219, %v1223
        %v1228 = vmax.f32 %v1220, %v1226
        %v1229 = vsub.f32 %v1219, %v1227
        %v1230 = vsub.f32 %v1220, %v1228
        %v1231 = vmul.f32 %v1229, 1.442695
        %v1232 = vpow.pop %v1231
        %v1233 = vmul.f32 %v1230, 1.442695
        %v1234 = vpow.pop %v1233
        %1236 = vset.pattern.permute.xlu0 0
        %1237 = vperm.xlu0 %1236, %v1227
        %v1238 = vpop.permute.xlu0 %1237
        %1241 = vset.pattern.permute.xlu0 0
        %1242 = vperm.xlu0 %1241, %v1228
        %v1243 = vpop.permute.xlu0 %1242
        %v1245 = vsub.f32 %v1213, %v1238
        %v1246 = vsub.f32 %v1216, %v1243
        %v1247 = vmul.f32 %v1245, 1.442695
        %v1248 = vpow.pop %v1247
        %v1249 = vmul.f32 %v1246, 1.442695
        %v1250 = vpow.pop %v1249
        %s1251 = scalar_lea.vmem [#allocation5], 16
        %v1252 = vld [vmem:[%s1251] sm:$0xff]
        %v1253 = vld [vmem:[%s1251 + $0x8] sm:$0xff]
        %v1254 = vmul.f32 %v1232, %v1252
        %v1255 = vmul.f32 %v1234, %v1253
        %v1256 = vsel %vm1033, %v1248, 0.0
        %1257 = vadd.xlane.f32.xlu0 %v1256
        %v1258 = vpop.xlane.xlu0 %1257
        %v1259 = vsel %vm1033, %v1250, 0.0
        %1260 = vadd.xlane.f32.xlu0 %v1259
        %v1261 = vpop.xlane.xlu0 %1260
        %v1262 = vadd.f32 %v1254, %v1258
        %v1263 = vadd.f32 %v1255, %v1261
        %1264 = vst.msk [vmem:[%s1251] sm:$0xff] %vm1076, %v1262
        %1265 = vst.msk [vmem:[%s1251 + $0x8] sm:$0xff] %vm1076, %v1263
        %1268 = vrot.lane.b32.xlu0 %v945, 96
        %v1269 = vpop.permute.xlu0 %1268
        %1270 = vrot.lane.b32.xlu0 %v946, 96
        %v1271 = vpop.permute.xlu0 %1270
        %v1275 = vsel %vm1033, %v1248, 0
        %v1278 = vsel %vm1033, %v1250, 0
        %1280 = vmatpush.msra.mxu0 0.0
        %1281 = vmatpush.msra.mxu0 0.0
        %1282 = vmatpush.msra.mxu0 0.0
        %1283 = vmatpush.msra.mxu0 0.0
        %1284 = vmatpush.msra.mxu0 0.0
        %1285 = vmatpush.msra.mxu0 0.0
        %1286 = vmatpush.msra.mxu0 0.0
        %1287 = vmatpush.msra.mxu0 0.0
        %1288 = vmatpush.msra.mxu0 0.0
        %1289 = vmatpush.msra.mxu0 0.0
        %1290 = vmatpush.msra.mxu0 0.0
        %1291 = vmatpush.msra.mxu0 0.0
        %1292 = vmatpush.msra.mxu0 0.0
        %1293 = vmatpush.msra.mxu0 0.0
        %1294 = vmatpush.msra.mxu0 %v1271
        %1295 = vmatpush.msra.mxu0 %v1269
        %1296 = vmatmul.f32.gmra.mxu0 %v1275
        %v1297 = vpop.f32.mrf.mxu0
        %v1298 = vadd.f32 0.0, %v1297
        %1299 = vmatmul.f32.gmra.mxu0 %v1278
        %v1300 = vpop.f32.mrf.mxu0
        %v1301 = vadd.f32 0.0, %v1300
        %1302 = vdwg.mxu0
        %v1303 = vld [vmem:[#allocation6] sm:$0xff]
        %v1304 = vld [vmem:[#allocation6 + $0x8] sm:$0xff]
        %1306 = vset.pattern.permute.xlu0 0
        %1307 = vperm.xlu0 %1306, %v1232
        %v1308 = vpop.permute.xlu0 %1307
        %1311 = vset.pattern.permute.xlu0 0
        %1312 = vperm.xlu0 %1311, %v1234
        %v1313 = vpop.permute.xlu0 %1312
        %v1315 = vmul.f32 %v1308, %v1303
        %v1316 = vmul.f32 %v1313, %v1304
        %1319 = vrot.lane.b32.xlu0 %v1298, 32
        %v1320 = vpop.permute.xlu0 %1319
        %1321 = vrot.lane.b32.xlu0 %v1301, 32
        %v1322 = vpop.permute.xlu0 %1321
        %v1325 = vadd.f32 %v1315, %v1320
        %v1326 = vadd.f32 %v1316, %v1322
        %vm1327 = vcmask 523520
        %1328 = vst.msk [vmem:[#allocation6] sm:$0xff] %vm1327, %v1325
        %1329 = vst.msk [vmem:[#allocation6 + $0x8] sm:$0xff] %vm1327, %v1326
        %1330 = vst.msk [vmem:[%s1218] sm:$0xff] %vm1076, %v1227
        %1331 = vst.msk [vmem:[%s1218 + $0x8] sm:$0xff] %vm1076, %v1228
        %v1332 = vld [vmem:[#allocation2] sm:$0xff]
        %v1333 = vld [vmem:[#allocation2 + $0x8] sm:$0xff]
        %1334 = vrot.lane.b32.xlu0 %v949, 64
        %v1335 = vpop.permute.xlu0 %1334
        %1336 = vrot.lane.b32.xlu0 %v950, 64
        %v1337 = vpop.permute.xlu0 %1336
        %v1340 = vsel %vm951, %v1335, 0.0
        %1341 = vadd.xlane.f32.xlu0 %v1340
        %v1342 = vpop.xlane.xlu0 %1341
        %v1343 = vsel %vm951, %v1337, 0.0
        %1344 = vadd.xlane.f32.xlu0 %v1343
        %v1345 = vpop.xlane.xlu0 %1344
        %v1346 = vmul.f32 %v1342, %v964
        %v1347 = vmul.f32 %v1345, %v964
        %v1348 = vadd.f32 %v1346, 1e-06
        %v1349 = vadd.f32 %v1347, 1e-06
        %v1350 = vrsqrt.pop %v1348
        %v1351 = vmul.f32 %v1350, %v1348
        %v1352 = vmul.f32 %v1351, %v1350
        %v1353 = vmul.f32 0.5, %v1352
        %v1354 = vsub.f32 1.5, %v1353
        %v1355 = vmul.f32 %v1350, %v1354
        %vm1356 = vweird.f32 %v1348
        %vm1357 = vweird.f32 %v1350
        %vm1358 = vmor %vm1356, %vm1357
        %v1359 = vsel %vm1358, %v1350, %v1355
        %v1360 = vrsqrt.pop %v1349
        %v1361 = vmul.f32 %v1360, %v1349
        %v1362 = vmul.f32 %v1361, %v1360
        %v1363 = vmul.f32 0.5, %v1362
        %v1364 = vsub.f32 1.5, %v1363
        %v1365 = vmul.f32 %v1360, %v1364
        %vm1366 = vweird.f32 %v1349
        %vm1367 = vweird.f32 %v1360
        %vm1368 = vmor %vm1366, %vm1367
        %v1369 = vsel %vm1368, %v1360, %v1365
        %v1370 = vmul.f32 %v943, %v1359
        %v1371 = vmul.f32 %v944, %v1369
        %1372 = vrot.lane.b32.xlu0 %v992, 64
        %v1373 = vpop.permute.xlu0 %1372
        %v1375 = vmul.f32 %v1370, %v1373
        %v1376 = vmul.f32 %v1371, %v1373
        %1379 = vrot.lane.b32.xlu0 %v1332, 64
        %v1380 = vpop.permute.xlu0 %1379
        %1381 = vrot.lane.b32.xlu0 %v1333, 64
        %v1382 = vpop.permute.xlu0 %1381
        %1385 = vrot.lane.b32.xlu0 %v1375, 64
        %v1386 = vpop.permute.xlu0 %1385
        %1387 = vrot.lane.b32.xlu0 %v1376, 64
        %v1388 = vpop.permute.xlu0 %1387
        %v1389 = vsel %vm951, %v1380, 0
        %v1391 = vsel %vm951, %v1382, 0
        %v1393 = vsel %vm951, %v1386, 0
        %v1395 = vsel %vm951, %v1388, 0
        %1397 = vmatpush.xpose.msra.mxu0 0.0
        %1398 = vmatpush.xpose.msra.mxu0 0.0
        %1399 = vmatpush.xpose.msra.mxu0 0.0
        %1400 = vmatpush.xpose.msra.mxu0 0.0
        %1401 = vmatpush.xpose.msra.mxu0 0.0
        %1402 = vmatpush.xpose.msra.mxu0 0.0
        %1403 = vmatpush.xpose.msra.mxu0 0.0
        %1404 = vmatpush.xpose.msra.mxu0 0.0
        %1405 = vmatpush.xpose.msra.mxu0 0.0
        %1406 = vmatpush.xpose.msra.mxu0 0.0
        %1407 = vmatpush.xpose.msra.mxu0 0.0
        %1408 = vmatpush.xpose.msra.mxu0 0.0
        %1409 = vmatpush.xpose.msra.mxu0 0.0
        %1410 = vmatpush.xpose.msra.mxu0 0.0
        %1411 = vmatpush.xpose.msra.mxu0 %v1395
        %1412 = vmatpush.xpose.msra.mxu0 %v1393
        %1413 = vmatmul.f32.gmra.mxu0 %v1389
        %v1414 = vpop.f32.mrf.mxu0
        %v1415 = vadd.f32 0.0, %v1414
        %1416 = vmatmul.f32.gmra.mxu0 %v1391
        %v1417 = vpop.f32.mrf.mxu0
        %v1418 = vadd.f32 0.0, %v1417
        %1419 = vdwg.mxu0
        %s1420 = scalar_lea.vmem [#allocation4], 32
        %v1421 = vld [vmem:[%s1420] sm:$0xff]
        %v1422 = vld [vmem:[%s1420 + $0x8] sm:$0xff]
        %v1423 = vsel %vm1033, %v1415, -inf
        %1424 = vmax.xlane.f32.xlu0 %v1423
        %v1425 = vpop.xlane.xlu0 %1424
        %v1426 = vsel %vm1033, %v1418, -inf
        %1427 = vmax.xlane.f32.xlu0 %v1426
        %v1428 = vpop.xlane.xlu0 %1427
        %v1429 = vmax.f32 %v1421, %v1425
        %v1430 = vmax.f32 %v1422, %v1428
        %v1431 = vsub.f32 %v1421, %v1429
        %v1432 = vsub.f32 %v1422, %v1430
        %v1433 = vmul.f32 %v1431, 1.442695
        %v1434 = vpow.pop %v1433
        %v1435 = vmul.f32 %v1432, 1.442695
        %v1436 = vpow.pop %v1435
        %1438 = vset.pattern.permute.xlu0 0
        %1439 = vperm.xlu0 %1438, %v1429
        %v1440 = vpop.permute.xlu0 %1439
        %1443 = vset.pattern.permute.xlu0 0
        %1444 = vperm.xlu0 %1443, %v1430
        %v1445 = vpop.permute.xlu0 %1444
        %v1447 = vsub.f32 %v1415, %v1440
        %v1448 = vsub.f32 %v1418, %v1445
        %v1449 = vmul.f32 %v1447, 1.442695
        %v1450 = vpow.pop %v1449
        %v1451 = vmul.f32 %v1448, 1.442695
        %v1452 = vpow.pop %v1451
        %s1453 = scalar_lea.vmem [#allocation5], 32
        %v1454 = vld [vmem:[%s1453] sm:$0xff]
        %v1455 = vld [vmem:[%s1453 + $0x8] sm:$0xff]
        %v1456 = vmul.f32 %v1434, %v1454
        %v1457 = vmul.f32 %v1436, %v1455
        %v1458 = vsel %vm1033, %v1450, 0.0
        %1459 = vadd.xlane.f32.xlu0 %v1458
        %v1460 = vpop.xlane.xlu0 %1459
        %v1461 = vsel %vm1033, %v1452, 0.0
        %1462 = vadd.xlane.f32.xlu0 %v1461
        %v1463 = vpop.xlane.xlu0 %1462
        %v1464 = vadd.f32 %v1456, %v1460
        %v1465 = vadd.f32 %v1457, %v1463
        %1466 = vst.msk [vmem:[%s1453] sm:$0xff] %vm1076, %v1464
        %1467 = vst.msk [vmem:[%s1453 + $0x8] sm:$0xff] %vm1076, %v1465
        %1468 = vrot.lane.b32.xlu0 %v945, 64
        %v1469 = vpop.permute.xlu0 %1468
        %1470 = vrot.lane.b32.xlu0 %v946, 64
        %v1471 = vpop.permute.xlu0 %1470
        %v1475 = vsel %vm1033, %v1450, 0
        %v1478 = vsel %vm1033, %v1452, 0
        %1480 = vmatpush.msra.mxu0 0.0
        %1481 = vmatpush.msra.mxu0 0.0
        %1482 = vmatpush.msra.mxu0 0.0
        %1483 = vmatpush.msra.mxu0 0.0
        %1484 = vmatpush.msra.mxu0 0.0
        %1485 = vmatpush.msra.mxu0 0.0
        %1486 = vmatpush.msra.mxu0 0.0
        %1487 = vmatpush.msra.mxu0 0.0
        %1488 = vmatpush.msra.mxu0 0.0
        %1489 = vmatpush.msra.mxu0 0.0
        %1490 = vmatpush.msra.mxu0 0.0
        %1491 = vmatpush.msra.mxu0 0.0
        %1492 = vmatpush.msra.mxu0 0.0
        %1493 = vmatpush.msra.mxu0 0.0
        %1494 = vmatpush.msra.mxu0 %v1471
        %1495 = vmatpush.msra.mxu0 %v1469
        %1496 = vmatmul.f32.gmra.mxu0 %v1475
        %v1497 = vpop.f32.mrf.mxu0
        %v1498 = vadd.f32 0.0, %v1497
        %1499 = vmatmul.f32.gmra.mxu0 %v1478
        %v1500 = vpop.f32.mrf.mxu0
        %v1501 = vadd.f32 0.0, %v1500
        %1502 = vdwg.mxu0
        %v1503 = vld [vmem:[#allocation6] sm:$0xff]
        %v1504 = vld [vmem:[#allocation6 + $0x8] sm:$0xff]
        %1506 = vset.pattern.permute.xlu0 0
        %1507 = vperm.xlu0 %1506, %v1434
        %v1508 = vpop.permute.xlu0 %1507
        %1511 = vset.pattern.permute.xlu0 0
        %1512 = vperm.xlu0 %1511, %v1436
        %v1513 = vpop.permute.xlu0 %1512
        %v1515 = vmul.f32 %v1508, %v1503
        %v1516 = vmul.f32 %v1513, %v1504
        %1519 = vrot.lane.b32.xlu0 %v1498, 64
        %v1520 = vpop.permute.xlu0 %1519
        %1521 = vrot.lane.b32.xlu0 %v1501, 64
        %v1522 = vpop.permute.xlu0 %1521
        %v1525 = vadd.f32 %v1515, %v1520
        %v1526 = vadd.f32 %v1516, %v1522
        %vm1527 = vcmask 785920
        %1528 = vst.msk [vmem:[#allocation6] sm:$0xff] %vm1527, %v1525
        %1529 = vst.msk [vmem:[#allocation6 + $0x8] sm:$0xff] %vm1527, %v1526
        %1530 = vst.msk [vmem:[%s1420] sm:$0xff] %vm1076, %v1429
        %1531 = vst.msk [vmem:[%s1420 + $0x8] sm:$0xff] %vm1076, %v1430
        %v1532 = vld [vmem:[#allocation2] sm:$0xff]
        %v1533 = vld [vmem:[#allocation2 + $0x8] sm:$0xff]
        %1534 = vrot.lane.b32.xlu0 %v949, 32
        %v1535 = vpop.permute.xlu0 %1534
        %1536 = vrot.lane.b32.xlu0 %v950, 32
        %v1537 = vpop.permute.xlu0 %1536
        %v1540 = vsel %vm951, %v1535, 0.0
        %1541 = vadd.xlane.f32.xlu0 %v1540
        %v1542 = vpop.xlane.xlu0 %1541
        %v1543 = vsel %vm951, %v1537, 0.0
        %1544 = vadd.xlane.f32.xlu0 %v1543
        %v1545 = vpop.xlane.xlu0 %1544
        %v1546 = vmul.f32 %v1542, %v964
        %v1547 = vmul.f32 %v1545, %v964
        %v1548 = vadd.f32 %v1546, 1e-06
        %v1549 = vadd.f32 %v1547, 1e-06
        %v1550 = vrsqrt.pop %v1548
        %v1551 = vmul.f32 %v1550, %v1548
        %v1552 = vmul.f32 %v1551, %v1550
        %v1553 = vmul.f32 0.5, %v1552
        %v1554 = vsub.f32 1.5, %v1553
        %v1555 = vmul.f32 %v1550, %v1554
        %vm1556 = vweird.f32 %v1548
        %vm1557 = vweird.f32 %v1550
        %vm1558 = vmor %vm1556, %vm1557
        %v1559 = vsel %vm1558, %v1550, %v1555
        %v1560 = vrsqrt.pop %v1549
        %v1561 = vmul.f32 %v1560, %v1549
        %v1562 = vmul.f32 %v1561, %v1560
        %v1563 = vmul.f32 0.5, %v1562
        %v1564 = vsub.f32 1.5, %v1563
        %v1565 = vmul.f32 %v1560, %v1564
        %vm1566 = vweird.f32 %v1549
        %vm1567 = vweird.f32 %v1560
        %vm1568 = vmor %vm1566, %vm1567
        %v1569 = vsel %vm1568, %v1560, %v1565
        %v1570 = vmul.f32 %v943, %v1559
        %v1571 = vmul.f32 %v944, %v1569
        %1572 = vrot.lane.b32.xlu0 %v992, 96
        %v1573 = vpop.permute.xlu0 %1572
        %v1575 = vmul.f32 %v1570, %v1573
        %v1576 = vmul.f32 %v1571, %v1573
        %1579 = vrot.lane.b32.xlu0 %v1532, 32
        %v1580 = vpop.permute.xlu0 %1579
        %1581 = vrot.lane.b32.xlu0 %v1533, 32
        %v1582 = vpop.permute.xlu0 %1581
        %1585 = vrot.lane.b32.xlu0 %v1575, 32
        %v1586 = vpop.permute.xlu0 %1585
        %1587 = vrot.lane.b32.xlu0 %v1576, 32
        %v1588 = vpop.permute.xlu0 %1587
        %v1589 = vsel %vm951, %v1580, 0
        %v1591 = vsel %vm951, %v1582, 0
        %v1593 = vsel %vm951, %v1586, 0
        %v1595 = vsel %vm951, %v1588, 0
        %1597 = vmatpush.xpose.msra.mxu0 0.0
        %1598 = vmatpush.xpose.msra.mxu0 0.0
        %1599 = vmatpush.xpose.msra.mxu0 0.0
        %1600 = vmatpush.xpose.msra.mxu0 0.0
        %1601 = vmatpush.xpose.msra.mxu0 0.0
        %1602 = vmatpush.xpose.msra.mxu0 0.0
        %1603 = vmatpush.xpose.msra.mxu0 0.0
        %1604 = vmatpush.xpose.msra.mxu0 0.0
        %1605 = vmatpush.xpose.msra.mxu0 0.0
        %1606 = vmatpush.xpose.msra.mxu0 0.0
        %1607 = vmatpush.xpose.msra.mxu0 0.0
        %1608 = vmatpush.xpose.msra.mxu0 0.0
        %1609 = vmatpush.xpose.msra.mxu0 0.0
        %1610 = vmatpush.xpose.msra.mxu0 0.0
        %1611 = vmatpush.xpose.msra.mxu0 %v1595
        %1612 = vmatpush.xpose.msra.mxu0 %v1593
        %1613 = vmatmul.f32.gmra.mxu0 %v1589
        %v1614 = vpop.f32.mrf.mxu0
        %v1615 = vadd.f32 0.0, %v1614
        %1616 = vmatmul.f32.gmra.mxu0 %v1591
        %v1617 = vpop.f32.mrf.mxu0
        %v1618 = vadd.f32 0.0, %v1617
        %1619 = vdwg.mxu0
        %s1620 = scalar_lea.vmem [#allocation4], 48
        %v1621 = vld [vmem:[%s1620] sm:$0xff]
        %v1622 = vld [vmem:[%s1620 + $0x8] sm:$0xff]
        %v1623 = vsel %vm1033, %v1615, -inf
        %1624 = vmax.xlane.f32.xlu0 %v1623
        %v1625 = vpop.xlane.xlu0 %1624
        %v1626 = vsel %vm1033, %v1618, -inf
        %1627 = vmax.xlane.f32.xlu0 %v1626
        %v1628 = vpop.xlane.xlu0 %1627
        %v1629 = vmax.f32 %v1621, %v1625
        %v1630 = vmax.f32 %v1622, %v1628
        %v1631 = vsub.f32 %v1621, %v1629
        %v1632 = vsub.f32 %v1622, %v1630
        %v1633 = vmul.f32 %v1631, 1.442695
        %v1634 = vpow.pop %v1633
        %v1635 = vmul.f32 %v1632, 1.442695
        %v1636 = vpow.pop %v1635
        %1638 = vset.pattern.permute.xlu0 0
        %1639 = vperm.xlu0 %1638, %v1629
        %v1640 = vpop.permute.xlu0 %1639
        %1643 = vset.pattern.permute.xlu0 0
        %1644 = vperm.xlu0 %1643, %v1630
        %v1645 = vpop.permute.xlu0 %1644
        %v1647 = vsub.f32 %v1615, %v1640
        %v1648 = vsub.f32 %v1618, %v1645
        %v1649 = vmul.f32 %v1647, 1.442695
        %v1650 = vpow.pop %v1649
        %v1651 = vmul.f32 %v1648, 1.442695
        %v1652 = vpow.pop %v1651
        %s1653 = scalar_lea.vmem [#allocation5], 48
        %v1654 = vld [vmem:[%s1653] sm:$0xff]
        %v1655 = vld [vmem:[%s1653 + $0x8] sm:$0xff]
        %v1656 = vmul.f32 %v1634, %v1654
        %v1657 = vmul.f32 %v1636, %v1655
        %v1658 = vsel %vm1033, %v1650, 0.0
        %1659 = vadd.xlane.f32.xlu0 %v1658
        %v1660 = vpop.xlane.xlu0 %1659
        %v1661 = vsel %vm1033, %v1652, 0.0
        %1662 = vadd.xlane.f32.xlu0 %v1661
        %v1663 = vpop.xlane.xlu0 %1662
        %v1664 = vadd.f32 %v1656, %v1660
        %v1665 = vadd.f32 %v1657, %v1663
        %1666 = vst.msk [vmem:[%s1653] sm:$0xff] %vm1076, %v1664
        %1667 = vst.msk [vmem:[%s1653 + $0x8] sm:$0xff] %vm1076, %v1665
        %1668 = vrot.lane.b32.xlu0 %v945, 32
        %v1669 = vpop.permute.xlu0 %1668
        %1670 = vrot.lane.b32.xlu0 %v946, 32
        %v1671 = vpop.permute.xlu0 %1670
        %v1675 = vsel %vm1033, %v1650, 0
        %v1678 = vsel %vm1033, %v1652, 0
        %1680 = vmatpush.msra.mxu0 0.0
        %1681 = vmatpush.msra.mxu0 0.0
        %1682 = vmatpush.msra.mxu0 0.0
        %1683 = vmatpush.msra.mxu0 0.0
        %1684 = vmatpush.msra.mxu0 0.0
        %1685 = vmatpush.msra.mxu0 0.0
        %1686 = vmatpush.msra.mxu0 0.0
        %1687 = vmatpush.msra.mxu0 0.0
        %1688 = vmatpush.msra.mxu0 0.0
        %1689 = vmatpush.msra.mxu0 0.0
        %1690 = vmatpush.msra.mxu0 0.0
        %1691 = vmatpush.msra.mxu0 0.0
        %1692 = vmatpush.msra.mxu0 0.0
        %1693 = vmatpush.msra.mxu0 0.0
        %1694 = vmatpush.msra.mxu0 %v1671
        %1695 = vmatpush.msra.mxu0 %v1669
        %1696 = vmatmul.f32.gmra.mxu0 %v1675
        %v1697 = vpop.f32.mrf.mxu0
        %v1698 = vadd.f32 0.0, %v1697
        %1699 = vmatmul.f32.gmra.mxu0 %v1678
        %v1700 = vpop.f32.mrf.mxu0
        %v1701 = vadd.f32 0.0, %v1700
        %1702 = vdwg.mxu0
        %v1703 = vld [vmem:[#allocation6] sm:$0xff]
        %v1704 = vld [vmem:[#allocation6 + $0x8] sm:$0xff]
        %1706 = vset.pattern.permute.xlu0 0
        %1707 = vperm.xlu0 %1706, %v1634
        %v1708 = vpop.permute.xlu0 %1707
        %1711 = vset.pattern.permute.xlu0 0
        %1712 = vperm.xlu0 %1711, %v1636
        %v1713 = vpop.permute.xlu0 %1712
        %v1715 = vmul.f32 %v1708, %v1703
        %v1716 = vmul.f32 %v1713, %v1704
        %1719 = vrot.lane.b32.xlu0 %v1698, 96
        %v1720 = vpop.permute.xlu0 %1719
        %1721 = vrot.lane.b32.xlu0 %v1701, 96
        %v1722 = vpop.permute.xlu0 %1721
        %v1725 = vadd.f32 %v1715, %v1720
        %v1726 = vadd.f32 %v1716, %v1722
        %vm1727 = vcmask 1048320
        %1728 = vst.msk [vmem:[#allocation6] sm:$0xff] %vm1727, %v1725
        %1729 = vst.msk [vmem:[#allocation6 + $0x8] sm:$0xff] %vm1727, %v1726
        %1730 = vst.msk [vmem:[%s1620] sm:$0xff] %vm1076, %v1629
        %1731 = vst.msk [vmem:[%s1620 + $0x8] sm:$0xff] %vm1076, %v1630
        // Predicated region
        $region93: #{tpu_custom_call.1} parent=59 // pred_check
          %p1732 = pneg %p618
        $region94: #{tpu_custom_call.1} parent=59 // pred_check_branch
          %1734 = sbr.rel (%p1732) target = $region96
        $region95: #{tpu_custom_call.1} parent=59 // pred_region
          %v1735 = vld [vmem:[#allocation3] sm:$0xff]
          %v1736 = vld [vmem:[#allocation3 + $0x8] sm:$0xff]
          %v1737 = vld [vmem:[#allocation2] sm:$0xff]
          %v1738 = vld [vmem:[#allocation2 + $0x8] sm:$0xff]
          %v1739 = vmul.f32 %v1735, %v1735
          %v1740 = vsel %vm951, %v1739, 0.0
          %1741 = vadd.xlane.f32.xlu0 %v1740
          %v1742 = vpop.xlane.xlu0 %1741
          %v1743 = vmul.f32 %v1742, %v964
          %v1744 = vadd.f32 %v1743, 1e-06
          %v1745 = vrsqrt.pop %v1744
          %v1746 = vmul.f32 %v1745, %v1744
          %v1747 = vmul.f32 %v1746, %v1745
          %v1748 = vmul.f32 0.5, %v1747
          %v1749 = vsub.f32 1.5, %v1748
          %v1750 = vmul.f32 %v1745, %v1749
          %vm1751 = vweird.f32 %v1744
          %vm1752 = vweird.f32 %v1745
          %vm1753 = vmor %vm1751, %vm1752
          %v1754 = vsel %vm1753, %v1745, %v1750
          %v1755 = vmul.f32 %v1735, %v1754
          %v1757 = vperm.slane %v617, 0
          %v1759 = vmul.f32 %v1755, %v1757
          %v1761 = vsel %vm951, %v1737, 0
          %v1764 = vsel %vm951, %v1738, 0
          %v1767 = vsel %vm951, %v1759, 0
          %1769 = vmatpush.xpose.msra.mxu0 0.0
          %1770 = vmatpush.xpose.msra.mxu0 0.0
          %1771 = vmatpush.xpose.msra.mxu0 0.0
          %1772 = vmatpush.xpose.msra.mxu0 0.0
          %1773 = vmatpush.xpose.msra.mxu0 0.0
          %1774 = vmatpush.xpose.msra.mxu0 0.0
          %1775 = vmatpush.xpose.msra.mxu0 0.0
          %1776 = vmatpush.xpose.msra.mxu0 0.0
          %1777 = vmatpush.xpose.msra.mxu0 0.0
          %1778 = vmatpush.xpose.msra.mxu0 0.0
          %1779 = vmatpush.xpose.msra.mxu0 0.0
          %1780 = vmatpush.xpose.msra.mxu0 0.0
          %1781 = vmatpush.xpose.msra.mxu0 0.0
          %1782 = vmatpush.xpose.msra.mxu0 0.0
          %1783 = vmatpush.xpose.msra.mxu0 0.0
          %1784 = vmatpush.xpose.msra.mxu0 %v1767
          %1785 = vmatmul.f32.gmra.mxu0 %v1761
          %v1786 = vpop.f32.mrf.mxu0
          %v1787 = vadd.f32 0.0, %v1786
          %1788 = vmatmul.f32.gmra.mxu0 %v1764
          %v1789 = vpop.f32.mrf.mxu0
          %v1790 = vadd.f32 0.0, %v1789
          %1791 = vdwg.mxu0
          %v1792 = vld [vmem:[#allocation4] sm:$0xff]
          %v1793 = vld [vmem:[#allocation4 + $0x8] sm:$0xff]
          %vm1794 = vcmask 64512
          %v1795 = vsel %vm1794, %v1787, -inf
          %1796 = vmax.xlane.f32.xlu0 %v1795
          %v1797 = vpop.xlane.xlu0 %1796
          %v1798 = vsel %vm1794, %v1790, -inf
          %1799 = vmax.xlane.f32.xlu0 %v1798
          %v1800 = vpop.xlane.xlu0 %1799
          %v1801 = vmax.f32 %v1792, %v1797
          %v1802 = vmax.f32 %v1793, %v1800
          %v1803 = vsub.f32 %v1792, %v1801
          %v1804 = vsub.f32 %v1793, %v1802
          %v1805 = vmul.f32 %v1803, 1.442695
          %v1806 = vpow.pop %v1805
          %v1807 = vmul.f32 %v1804, 1.442695
          %v1808 = vpow.pop %v1807
          %1810 = vset.pattern.permute.xlu0 0
          %1811 = vperm.xlu0 %1810, %v1801
          %v1812 = vpop.permute.xlu0 %1811
          %1815 = vset.pattern.permute.xlu0 0
          %1816 = vperm.xlu0 %1815, %v1802
          %v1817 = vpop.permute.xlu0 %1816
          %v1819 = vsub.f32 %v1787, %v1812
          %v1820 = vsub.f32 %v1790, %v1817
          %v1821 = vmul.f32 %v1819, 1.442695
          %v1822 = vpow.pop %v1821
          %v1823 = vmul.f32 %v1820, 1.442695
          %v1824 = vpow.pop %v1823
          %v1825 = vld [vmem:[#allocation5] sm:$0xff]
          %v1826 = vld [vmem:[#allocation5 + $0x8] sm:$0xff]
          %v1827 = vmul.f32 %v1806, %v1825
          %v1828 = vmul.f32 %v1808, %v1826
          %v1829 = vsel %vm1794, %v1822, 0.0
          %1830 = vadd.xlane.f32.xlu0 %v1829
          %v1831 = vpop.xlane.xlu0 %1830
          %v1832 = vsel %vm1794, %v1824, 0.0
          %1833 = vadd.xlane.f32.xlu0 %v1832
          %v1834 = vpop.xlane.xlu0 %1833
          %v1835 = vadd.f32 %v1827, %v1831
          %v1836 = vadd.f32 %v1828, %v1834
          %v1837 = vld [vmem:[#allocation6] sm:$0xff]
          %v1838 = vld [vmem:[#allocation6 + $0x8] sm:$0xff]
          %1840 = vset.pattern.permute.xlu0 0
          %1841 = vperm.xlu0 %1840, %v1806
          %v1842 = vpop.permute.xlu0 %1841
          %1845 = vset.pattern.permute.xlu0 0
          %1846 = vperm.xlu0 %1845, %v1808
          %v1847 = vpop.permute.xlu0 %1846
          %v1849 = vmul.f32 %v1842, %v1837
          %v1850 = vmul.f32 %v1847, %v1838
          %v1852 = vsel %vm1794, %v1822, 0
          %v1855 = vsel %vm1794, %v1824, 0
          %1857 = vmatpush.msra.mxu0 0.0
          %1858 = vmatpush.msra.mxu0 0.0
          %1859 = vmatpush.msra.mxu0 0.0
          %1860 = vmatpush.msra.mxu0 0.0
          %1861 = vmatpush.msra.mxu0 0.0
          %1862 = vmatpush.msra.mxu0 0.0
          %1863 = vmatpush.msra.mxu0 0.0
          %1864 = vmatpush.msra.mxu0 0.0
          %1865 = vmatpush.msra.mxu0 0.0
          %1866 = vmatpush.msra.mxu0 0.0
          %1867 = vmatpush.msra.mxu0 0.0
          %1868 = vmatpush.msra.mxu0 0.0
          %1869 = vmatpush.msra.mxu0 0.0
          %1870 = vmatpush.msra.mxu0 0.0
          %1871 = vmatpush.msra.mxu0 0.0
          %1872 = vmatpush.msra.mxu0 %v1736
          %1873 = vmatmul.f32.gmra.mxu0 %v1852
          %v1874 = vpop.f32.mrf.mxu0
          %v1875 = vadd.f32 0.0, %v1874
          %1876 = vmatmul.f32.gmra.mxu0 %v1855
          %v1877 = vpop.f32.mrf.mxu0
          %v1878 = vadd.f32 0.0, %v1877
          %1879 = vdwg.mxu0
          %v1880 = vadd.f32 %v1849, %v1875
          %v1881 = vadd.f32 %v1850, %v1878
          %v1882 = vrcp.pop %v1835
          %v1883 = vmul.f32 %v1835, %v1882
          %v1884 = vsub.f32 1.0, %v1883
          %v1885 = vmul.f32 %v1882, %v1884
          %v1886 = vadd.f32 %v1882, %v1885
          %vm1887 = vweird.f32 %v1835
          %vm1888 = vweird.f32 %v1882
          %vm1889 = vmor %vm1887, %vm1888
          %v1890 = vsel %vm1889, %v1882, %v1886
          %v1891 = vand.u32 2147483647, %v1835
          %vm1892 = vcmp.eq.f32.partialorder %v1891, 8.507059e+37
          %v1893 = vand.u32 %v1835, 2147483648
          %v1894 = vor.u32 1.1754944e-38, %v1893
          %v1895 = vsel %vm1892, %v1894, %v1890
          %v1896 = vrcp.pop %v1836
          %v1897 = vmul.f32 %v1836, %v1896
          %v1898 = vsub.f32 1.0, %v1897
          %v1899 = vmul.f32 %v1896, %v1898
          %v1900 = vadd.f32 %v1896, %v1899
          %vm1901 = vweird.f32 %v1836
          %vm1902 = vweird.f32 %v1896
          %vm1903 = vmor %vm1901, %vm1902
          %v1904 = vsel %vm1903, %v1896, %v1900
          %v1905 = vand.u32 2147483647, %v1836
          %vm1906 = vcmp.eq.f32.partialorder %v1905, 8.507059e+37
          %v1907 = vand.u32 %v1836, 2147483648
          %v1908 = vor.u32 1.1754944e-38, %v1907
          %v1909 = vsel %vm1906, %v1908, %v1904
          %1911 = vset.pattern.permute.xlu0 0
          %1912 = vperm.xlu0 %1911, %v1895
          %v1913 = vpop.permute.xlu0 %1912
          %1916 = vset.pattern.permute.xlu0 0
          %1917 = vperm.xlu0 %1916, %v1909
          %v1918 = vpop.permute.xlu0 %1917
          %v1920 = vmul.f32 %v1880, %v1913
          %v1921 = vmul.f32 %v1881, %v1918
          %1922 = vst.msk [vmem:[#allocation6] sm:$0xff] %vm951, %v1920
          %1923 = vst.msk [vmem:[#allocation6 + $0x8] sm:$0xff] %vm951, %v1921
          %v1924 = vld [vmem:[#allocation2] sm:$0xff]
          %v1925 = vld [vmem:[#allocation2 + $0x8] sm:$0xff]
          %1927 = vrot.lane.b32.xlu0 %v1739, 96
          %v1928 = vpop.permute.xlu0 %1927
          %v1930 = vsel %vm951, %v1928, 0.0
          %1931 = vadd.xlane.f32.xlu0 %v1930
          %v1932 = vpop.xlane.xlu0 %1931
          %v1933 = vmul.f32 %v1932, %v964
          %v1934 = vadd.f32 %v1933, 1e-06
          %v1935 = vrsqrt.pop %v1934
          %v1936 = vmul.f32 %v1935, %v1934
          %v1937 = vmul.f32 %v1936, %v1935
          %v1938 = vmul.f32 0.5, %v1937
          %v1939 = vsub.f32 1.5, %v1938
          %v1940 = vmul.f32 %v1935, %v1939
          %vm1941 = vweird.f32 %v1934
          %vm1942 = vweird.f32 %v1935
          %vm1943 = vmor %vm1941, %vm1942
          %v1944 = vsel %vm1943, %v1935, %v1940
          %v1945 = vmul.f32 %v1735, %v1944
          %1946 = vrot.lane.b32.xlu0 %v1757, 32
          %v1947 = vpop.permute.xlu0 %1946
          %v1949 = vmul.f32 %v1945, %v1947
          %1952 = vrot.lane.b32.xlu0 %v1924, 96
          %v1953 = vpop.permute.xlu0 %1952
          %1954 = vrot.lane.b32.xlu0 %v1925, 96
          %v1955 = vpop.permute.xlu0 %1954
          %1957 = vrot.lane.b32.xlu0 %v1949, 96
          %v1958 = vpop.permute.xlu0 %1957
          %v1959 = vsel %vm951, %v1953, 0
          %v1961 = vsel %vm951, %v1955, 0
          %v1963 = vsel %vm951, %v1958, 0
          %1965 = vmatpush.xpose.msra.mxu0 0.0
          %1966 = vmatpush.xpose.msra.mxu0 0.0
          %1967 = vmatpush.xpose.msra.mxu0 0.0
          %1968 = vmatpush.xpose.msra.mxu0 0.0
          %1969 = vmatpush.xpose.msra.mxu0 0.0
          %1970 = vmatpush.xpose.msra.mxu0 0.0
          %1971 = vmatpush.xpose.msra.mxu0 0.0
          %1972 = vmatpush.xpose.msra.mxu0 0.0
          %1973 = vmatpush.xpose.msra.mxu0 0.0
          %1974 = vmatpush.xpose.msra.mxu0 0.0
          %1975 = vmatpush.xpose.msra.mxu0 0.0
          %1976 = vmatpush.xpose.msra.mxu0 0.0
          %1977 = vmatpush.xpose.msra.mxu0 0.0
          %1978 = vmatpush.xpose.msra.mxu0 0.0
          %1979 = vmatpush.xpose.msra.mxu0 0.0
          %1980 = vmatpush.xpose.msra.mxu0 %v1963
          %1981 = vmatmul.f32.gmra.mxu0 %v1959
          %v1982 = vpop.f32.mrf.mxu0
          %v1983 = vadd.f32 0.0, %v1982
          %1984 = vmatmul.f32.gmra.mxu0 %v1961
          %v1985 = vpop.f32.mrf.mxu0
          %v1986 = vadd.f32 0.0, %v1985
          %1987 = vdwg.mxu0
          %v1988 = vld [vmem:[%s1218] sm:$0xff]
          %v1989 = vld [vmem:[%s1218 + $0x8] sm:$0xff]
          %v1990 = vsel %vm1794, %v1983, -inf
          %1991 = vmax.xlane.f32.xlu0 %v1990
          %v1992 = vpop.xlane.xlu0 %1991
          %v1993 = vsel %vm1794, %v1986, -inf
          %1994 = vmax.xlane.f32.xlu0 %v1993
          %v1995 = vpop.xlane.xlu0 %1994
          %v1996 = vmax.f32 %v1988, %v1992
          %v1997 = vmax.f32 %v1989, %v1995
          %v1998 = vsub.f32 %v1988, %v1996
          %v1999 = vsub.f32 %v1989, %v1997
          %v2000 = vmul.f32 %v1998, 1.442695
          %v2001 = vpow.pop %v2000
          %v2002 = vmul.f32 %v1999, 1.442695
          %v2003 = vpow.pop %v2002
          %2005 = vset.pattern.permute.xlu0 0
          %2006 = vperm.xlu0 %2005, %v1996
          %v2007 = vpop.permute.xlu0 %2006
          %2010 = vset.pattern.permute.xlu0 0
          %2011 = vperm.xlu0 %2010, %v1997
          %v2012 = vpop.permute.xlu0 %2011
          %v2014 = vsub.f32 %v1983, %v2007
          %v2015 = vsub.f32 %v1986, %v2012
          %v2016 = vmul.f32 %v2014, 1.442695
          %v2017 = vpow.pop %v2016
          %v2018 = vmul.f32 %v2015, 1.442695
          %v2019 = vpow.pop %v2018
          %v2020 = vld [vmem:[%s1251] sm:$0xff]
          %v2021 = vld [vmem:[%s1251 + $0x8] sm:$0xff]
          %v2022 = vmul.f32 %v2001, %v2020
          %v2023 = vmul.f32 %v2003, %v2021
          %v2024 = vsel %vm1794, %v2017, 0.0
          %2025 = vadd.xlane.f32.xlu0 %v2024
          %v2026 = vpop.xlane.xlu0 %2025
          %v2027 = vsel %vm1794, %v2019, 0.0
          %2028 = vadd.xlane.f32.xlu0 %v2027
          %v2029 = vpop.xlane.xlu0 %2028
          %v2030 = vadd.f32 %v2022, %v2026
          %v2031 = vadd.f32 %v2023, %v2029
          %v2032 = vld [vmem:[#allocation6] sm:$0xff]
          %v2033 = vld [vmem:[#allocation6 + $0x8] sm:$0xff]
          %2035 = vset.pattern.permute.xlu0 0
          %2036 = vperm.xlu0 %2035, %v2001
          %v2037 = vpop.permute.xlu0 %2036
          %2040 = vset.pattern.permute.xlu0 0
          %2041 = vperm.xlu0 %2040, %v2003
          %v2042 = vpop.permute.xlu0 %2041
          %v2044 = vmul.f32 %v2037, %v2032
          %v2045 = vmul.f32 %v2042, %v2033
          %2047 = vrot.lane.b32.xlu0 %v1736, 96
          %v2048 = vpop.permute.xlu0 %2047
          %v2051 = vsel %vm1794, %v2017, 0
          %v2054 = vsel %vm1794, %v2019, 0
          %2056 = vmatpush.msra.mxu0 0.0
          %2057 = vmatpush.msra.mxu0 0.0
          %2058 = vmatpush.msra.mxu0 0.0
          %2059 = vmatpush.msra.mxu0 0.0
          %2060 = vmatpush.msra.mxu0 0.0
          %2061 = vmatpush.msra.mxu0 0.0
          %2062 = vmatpush.msra.mxu0 0.0
          %2063 = vmatpush.msra.mxu0 0.0
          %2064 = vmatpush.msra.mxu0 0.0
          %2065 = vmatpush.msra.mxu0 0.0
          %2066 = vmatpush.msra.mxu0 0.0
          %2067 = vmatpush.msra.mxu0 0.0
          %2068 = vmatpush.msra.mxu0 0.0
          %2069 = vmatpush.msra.mxu0 0.0
          %2070 = vmatpush.msra.mxu0 0.0
          %2071 = vmatpush.msra.mxu0 %v2048
          %2072 = vmatmul.f32.gmra.mxu0 %v2051
          %v2073 = vpop.f32.mrf.mxu0
          %v2074 = vadd.f32 0.0, %v2073
          %2075 = vmatmul.f32.gmra.mxu0 %v2054
          %v2076 = vpop.f32.mrf.mxu0
          %v2077 = vadd.f32 0.0, %v2076
          %2078 = vdwg.mxu0
          %2081 = vrot.lane.b32.xlu0 %v2074, 32
          %v2082 = vpop.permute.xlu0 %2081
          %2083 = vrot.lane.b32.xlu0 %v2077, 32
          %v2084 = vpop.permute.xlu0 %2083
          %v2087 = vadd.f32 %v2044, %v2082
          %v2088 = vadd.f32 %v2045, %v2084
          %v2089 = vrcp.pop %v2030
          %v2090 = vmul.f32 %v2030, %v2089
          %v2091 = vsub.f32 1.0, %v2090
          %v2092 = vmul.f32 %v2089, %v2091
          %v2093 = vadd.f32 %v2089, %v2092
          %vm2094 = vweird.f32 %v2030
          %vm2095 = vweird.f32 %v2089
          %vm2096 = vmor %vm2094, %vm2095
          %v2097 = vsel %vm2096, %v2089, %v2093
          %v2098 = vand.u32 2147483647, %v2030
          %vm2099 = vcmp.eq.f32.partialorder %v2098, 8.507059e+37
          %v2100 = vand.u32 %v2030, 2147483648
          %v2101 = vor.u32 1.1754944e-38, %v2100
          %v2102 = vsel %vm2099, %v2101, %v2097
          %v2103 = vrcp.pop %v2031
          %v2104 = vmul.f32 %v2031, %v2103
          %v2105 = vsub.f32 1.0, %v2104
          %v2106 = vmul.f32 %v2103, %v2105
          %v2107 = vadd.f32 %v2103, %v2106
          %vm2108 = vweird.f32 %v2031
          %vm2109 = vweird.f32 %v2103
          %vm2110 = vmor %vm2108, %vm2109
          %v2111 = vsel %vm2110, %v2103, %v2107
          %v2112 = vand.u32 2147483647, %v2031
          %vm2113 = vcmp.eq.f32.partialorder %v2112, 8.507059e+37
          %v2114 = vand.u32 %v2031, 2147483648
          %v2115 = vor.u32 1.1754944e-38, %v2114
          %v2116 = vsel %vm2113, %v2115, %v2111
          %2118 = vset.pattern.permute.xlu0 0
          %2119 = vperm.xlu0 %2118, %v2102
          %v2120 = vpop.permute.xlu0 %2119
          %2123 = vset.pattern.permute.xlu0 0
          %2124 = vperm.xlu0 %2123, %v2116
          %v2125 = vpop.permute.xlu0 %2124
          %v2127 = vmul.f32 %v2087, %v2120
          %v2128 = vmul.f32 %v2088, %v2125
          %2129 = vst.msk [vmem:[#allocation6] sm:$0xff] %vm1327, %v2127
          %2130 = vst.msk [vmem:[#allocation6 + $0x8] sm:$0xff] %vm1327, %v2128
          %v2131 = vld [vmem:[#allocation2] sm:$0xff]
          %v2132 = vld [vmem:[#allocation2 + $0x8] sm:$0xff]
          %2133 = vrot.lane.b32.xlu0 %v1739, 64
          %v2134 = vpop.permute.xlu0 %2133
          %v2136 = vsel %vm951, %v2134, 0.0
          %2137 = vadd.xlane.f32.xlu0 %v2136
          %v2138 = vpop.xlane.xlu0 %2137
          %v2139 = vmul.f32 %v2138, %v964
          %v2140 = vadd.f32 %v2139, 1e-06
          %v2141 = vrsqrt.pop %v2140
          %v2142 = vmul.f32 %v2141, %v2140
          %v2143 = vmul.f32 %v2142, %v2141
          %v2144 = vmul.f32 0.5, %v2143
          %v2145 = vsub.f32 1.5, %v2144
          %v2146 = vmul.f32 %v2141, %v2145
          %vm2147 = vweird.f32 %v2140
          %vm2148 = vweird.f32 %v2141
          %vm2149 = vmor %vm2147, %vm2148
          %v2150 = vsel %vm2149, %v2141, %v2146
          %v2151 = vmul.f32 %v1735, %v2150
          %2152 = vrot.lane.b32.xlu0 %v1757, 64
          %v2153 = vpop.permute.xlu0 %2152
          %v2155 = vmul.f32 %v2151, %v2153
          %2158 = vrot.lane.b32.xlu0 %v2131, 64
          %v2159 = vpop.permute.xlu0 %2158
          %2160 = vrot.lane.b32.xlu0 %v2132, 64
          %v2161 = vpop.permute.xlu0 %2160
          %2163 = vrot.lane.b32.xlu0 %v2155, 64
          %v2164 = vpop.permute.xlu0 %2163
          %v2165 = vsel %vm951, %v2159, 0
          %v2167 = vsel %vm951, %v2161, 0
          %v2169 = vsel %vm951, %v2164, 0
          %2171 = vmatpush.xpose.msra.mxu0 0.0
          %2172 = vmatpush.xpose.msra.mxu0 0.0
          %2173 = vmatpush.xpose.msra.mxu0 0.0
          %2174 = vmatpush.xpose.msra.mxu0 0.0
          %2175 = vmatpush.xpose.msra.mxu0 0.0
          %2176 = vmatpush.xpose.msra.mxu0 0.0
          %2177 = vmatpush.xpose.msra.mxu0 0.0
          %2178 = vmatpush.xpose.msra.mxu0 0.0
          %2179 = vmatpush.xpose.msra.mxu0 0.0
          %2180 = vmatpush.xpose.msra.mxu0 0.0
          %2181 = vmatpush.xpose.msra.mxu0 0.0
          %2182 = vmatpush.xpose.msra.mxu0 0.0
          %2183 = vmatpush.xpose.msra.mxu0 0.0
          %2184 = vmatpush.xpose.msra.mxu0 0.0
          %2185 = vmatpush.xpose.msra.mxu0 0.0
          %2186 = vmatpush.xpose.msra.mxu0 %v2169
          %2187 = vmatmul.f32.gmra.mxu0 %v2165
          %v2188 = vpop.f32.mrf.mxu0
          %v2189 = vadd.f32 0.0, %v2188
          %2190 = vmatmul.f32.gmra.mxu0 %v2167
          %v2191 = vpop.f32.mrf.mxu0
          %v2192 = vadd.f32 0.0, %v2191
          %2193 = vdwg.mxu0
          %v2194 = vld [vmem:[%s1420] sm:$0xff]
          %v2195 = vld [vmem:[%s1420 + $0x8] sm:$0xff]
          %v2196 = vsel %vm1794, %v2189, -inf
          %2197 = vmax.xlane.f32.xlu0 %v2196
          %v2198 = vpop.xlane.xlu0 %2197
          %v2199 = vsel %vm1794, %v2192, -inf
          %2200 = vmax.xlane.f32.xlu0 %v2199
          %v2201 = vpop.xlane.xlu0 %2200
          %v2202 = vmax.f32 %v2194, %v2198
          %v2203 = vmax.f32 %v2195, %v2201
          %v2204 = vsub.f32 %v2194, %v2202
          %v2205 = vsub.f32 %v2195, %v2203
          %v2206 = vmul.f32 %v2204, 1.442695
          %v2207 = vpow.pop %v2206
          %v2208 = vmul.f32 %v2205, 1.442695
          %v2209 = vpow.pop %v2208
          %2211 = vset.pattern.permute.xlu0 0
          %2212 = vperm.xlu0 %2211, %v2202
          %v2213 = vpop.permute.xlu0 %2212
          %2216 = vset.pattern.permute.xlu0 0
          %2217 = vperm.xlu0 %2216, %v2203
          %v2218 = vpop.permute.xlu0 %2217
          %v2220 = vsub.f32 %v2189, %v2213
          %v2221 = vsub.f32 %v2192, %v2218
          %v2222 = vmul.f32 %v2220, 1.442695
          %v2223 = vpow.pop %v2222
          %v2224 = vmul.f32 %v2221, 1.442695
          %v2225 = vpow.pop %v2224
          %v2226 = vld [vmem:[%s1453] sm:$0xff]
          %v2227 = vld [vmem:[%s1453 + $0x8] sm:$0xff]
          %v2228 = vmul.f32 %v2207, %v2226
          %v2229 = vmul.f32 %v2209, %v2227
          %v2230 = vsel %vm1794, %v2223, 0.0
          %2231 = vadd.xlane.f32.xlu0 %v2230
          %v2232 = vpop.xlane.xlu0 %2231
          %v2233 = vsel %vm1794, %v2225, 0.0
          %2234 = vadd.xlane.f32.xlu0 %v2233
          %v2235 = vpop.xlane.xlu0 %2234
          %v2236 = vadd.f32 %v2228, %v2232
          %v2237 = vadd.f32 %v2229, %v2235
          %v2238 = vld [vmem:[#allocation6] sm:$0xff]
          %v2239 = vld [vmem:[#allocation6 + $0x8] sm:$0xff]
          %2241 = vset.pattern.permute.xlu0 0
          %2242 = vperm.xlu0 %2241, %v2207
          %v2243 = vpop.permute.xlu0 %2242
          %2246 = vset.pattern.permute.xlu0 0
          %2247 = vperm.xlu0 %2246, %v2209
          %v2248 = vpop.permute.xlu0 %2247
          %v2250 = vmul.f32 %v2243, %v2238
          %v2251 = vmul.f32 %v2248, %v2239
          %2252 = vrot.lane.b32.xlu0 %v1736, 64
          %v2253 = vpop.permute.xlu0 %2252
          %v2256 = vsel %vm1794, %v2223, 0
          %v2259 = vsel %vm1794, %v2225, 0
          %2261 = vmatpush.msra.mxu0 0.0
          %2262 = vmatpush.msra.mxu0 0.0
          %2263 = vmatpush.msra.mxu0 0.0
          %2264 = vmatpush.msra.mxu0 0.0
          %2265 = vmatpush.msra.mxu0 0.0
          %2266 = vmatpush.msra.mxu0 0.0
          %2267 = vmatpush.msra.mxu0 0.0
          %2268 = vmatpush.msra.mxu0 0.0
          %2269 = vmatpush.msra.mxu0 0.0
          %2270 = vmatpush.msra.mxu0 0.0
          %2271 = vmatpush.msra.mxu0 0.0
          %2272 = vmatpush.msra.mxu0 0.0
          %2273 = vmatpush.msra.mxu0 0.0
          %2274 = vmatpush.msra.mxu0 0.0
          %2275 = vmatpush.msra.mxu0 0.0
          %2276 = vmatpush.msra.mxu0 %v2253
          %2277 = vmatmul.f32.gmra.mxu0 %v2256
          %v2278 = vpop.f32.mrf.mxu0
          %v2279 = vadd.f32 0.0, %v2278
          %2280 = vmatmul.f32.gmra.mxu0 %v2259
          %v2281 = vpop.f32.mrf.mxu0
          %v2282 = vadd.f32 0.0, %v2281
          %2283 = vdwg.mxu0
          %2286 = vrot.lane.b32.xlu0 %v2279, 64
          %v2287 = vpop.permute.xlu0 %2286
          %2288 = vrot.lane.b32.xlu0 %v2282, 64
          %v2289 = vpop.permute.xlu0 %2288
          %v2292 = vadd.f32 %v2250, %v2287
          %v2293 = vadd.f32 %v2251, %v2289
          %v2294 = vrcp.pop %v2236
          %v2295 = vmul.f32 %v2236, %v2294
          %v2296 = vsub.f32 1.0, %v2295
          %v2297 = vmul.f32 %v2294, %v2296
          %v2298 = vadd.f32 %v2294, %v2297
          %vm2299 = vweird.f32 %v2236
          %vm2300 = vweird.f32 %v2294
          %vm2301 = vmor %vm2299, %vm2300
          %v2302 = vsel %vm2301, %v2294, %v2298
          %v2303 = vand.u32 2147483647, %v2236
          %vm2304 = vcmp.eq.f32.partialorder %v2303, 8.507059e+37
          %v2305 = vand.u32 %v2236, 2147483648
          %v2306 = vor.u32 1.1754944e-38, %v2305
          %v2307 = vsel %vm2304, %v2306, %v2302
          %v2308 = vrcp.pop %v2237
          %v2309 = vmul.f32 %v2237, %v2308
          %v2310 = vsub.f32 1.0, %v2309
          %v2311 = vmul.f32 %v2308, %v2310
          %v2312 = vadd.f32 %v2308, %v2311
          %vm2313 = vweird.f32 %v2237
          %vm2314 = vweird.f32 %v2308
          %vm2315 = vmor %vm2313, %vm2314
          %v2316 = vsel %vm2315, %v2308, %v2312
          %v2317 = vand.u32 2147483647, %v2237
          %vm2318 = vcmp.eq.f32.partialorder %v2317, 8.507059e+37
          %v2319 = vand.u32 %v2237, 2147483648
          %v2320 = vor.u32 1.1754944e-38, %v2319
          %v2321 = vsel %vm2318, %v2320, %v2316
          %2323 = vset.pattern.permute.xlu0 0
          %2324 = vperm.xlu0 %2323, %v2307
          %v2325 = vpop.permute.xlu0 %2324
          %2328 = vset.pattern.permute.xlu0 0
          %2329 = vperm.xlu0 %2328, %v2321
          %v2330 = vpop.permute.xlu0 %2329
          %v2332 = vmul.f32 %v2292, %v2325
          %v2333 = vmul.f32 %v2293, %v2330
          %2334 = vst.msk [vmem:[#allocation6] sm:$0xff] %vm1527, %v2332
          %2335 = vst.msk [vmem:[#allocation6 + $0x8] sm:$0xff] %vm1527, %v2333
          %v2336 = vld [vmem:[#allocation2] sm:$0xff]
          %v2337 = vld [vmem:[#allocation2 + $0x8] sm:$0xff]
          %2338 = vrot.lane.b32.xlu0 %v1739, 32
          %v2339 = vpop.permute.xlu0 %2338
          %v2341 = vsel %vm951, %v2339, 0.0
          %2342 = vadd.xlane.f32.xlu0 %v2341
          %v2343 = vpop.xlane.xlu0 %2342
          %v2344 = vmul.f32 %v2343, %v964
          %v2345 = vadd.f32 %v2344, 1e-06
          %v2346 = vrsqrt.pop %v2345
          %v2347 = vmul.f32 %v2346, %v2345
          %v2348 = vmul.f32 %v2347, %v2346
          %v2349 = vmul.f32 0.5, %v2348
          %v2350 = vsub.f32 1.5, %v2349
          %v2351 = vmul.f32 %v2346, %v2350
          %vm2352 = vweird.f32 %v2345
          %vm2353 = vweird.f32 %v2346
          %vm2354 = vmor %vm2352, %vm2353
          %v2355 = vsel %vm2354, %v2346, %v2351
          %v2356 = vmul.f32 %v1735, %v2355
          %2357 = vrot.lane.b32.xlu0 %v1757, 96
          %v2358 = vpop.permute.xlu0 %2357
          %v2360 = vmul.f32 %v2356, %v2358
          %2363 = vrot.lane.b32.xlu0 %v2336, 32
          %v2364 = vpop.permute.xlu0 %2363
          %2365 = vrot.lane.b32.xlu0 %v2337, 32
          %v2366 = vpop.permute.xlu0 %2365
          %2368 = vrot.lane.b32.xlu0 %v2360, 32
          %v2369 = vpop.permute.xlu0 %2368
          %v2370 = vsel %vm951, %v2364, 0
          %v2372 = vsel %vm951, %v2366, 0
          %v2374 = vsel %vm951, %v2369, 0
          %2376 = vmatpush.xpose.msra.mxu0 0.0
          %2377 = vmatpush.xpose.msra.mxu0 0.0
          %2378 = vmatpush.xpose.msra.mxu0 0.0
          %2379 = vmatpush.xpose.msra.mxu0 0.0
          %2380 = vmatpush.xpose.msra.mxu0 0.0
          %2381 = vmatpush.xpose.msra.mxu0 0.0
          %2382 = vmatpush.xpose.msra.mxu0 0.0
          %2383 = vmatpush.xpose.msra.mxu0 0.0
          %2384 = vmatpush.xpose.msra.mxu0 0.0
          %2385 = vmatpush.xpose.msra.mxu0 0.0
          %2386 = vmatpush.xpose.msra.mxu0 0.0
          %2387 = vmatpush.xpose.msra.mxu0 0.0
          %2388 = vmatpush.xpose.msra.mxu0 0.0
          %2389 = vmatpush.xpose.msra.mxu0 0.0
          %2390 = vmatpush.xpose.msra.mxu0 0.0
          %2391 = vmatpush.xpose.msra.mxu0 %v2374
          %2392 = vmatmul.f32.gmra.mxu0 %v2370
          %v2393 = vpop.f32.mrf.mxu0
          %v2394 = vadd.f32 0.0, %v2393
          %2395 = vmatmul.f32.gmra.mxu0 %v2372
          %v2396 = vpop.f32.mrf.mxu0
          %v2397 = vadd.f32 0.0, %v2396
          %2398 = vdwg.mxu0
          %v2399 = vld [vmem:[%s1620] sm:$0xff]
          %v2400 = vld [vmem:[%s1620 + $0x8] sm:$0xff]
          %v2401 = vsel %vm1794, %v2394, -inf
          %2402 = vmax.xlane.f32.xlu0 %v2401
          %v2403 = vpop.xlane.xlu0 %2402
          %v2404 = vsel %vm1794, %v2397, -inf
          %2405 = vmax.xlane.f32.xlu0 %v2404
          %v2406 = vpop.xlane.xlu0 %2405
          %v2407 = vmax.f32 %v2399, %v2403
          %v2408 = vmax.f32 %v2400, %v2406
          %v2409 = vsub.f32 %v2399, %v2407
          %v2410 = vsub.f32 %v2400, %v2408
          %v2411 = vmul.f32 %v2409, 1.442695
          %v2412 = vpow.pop %v2411
          %v2413 = vmul.f32 %v2410, 1.442695
          %v2414 = vpow.pop %v2413
          %2416 = vset.pattern.permute.xlu0 0
          %2417 = vperm.xlu0 %2416, %v2407
          %v2418 = vpop.permute.xlu0 %2417
          %2421 = vset.pattern.permute.xlu0 0
          %2422 = vperm.xlu0 %2421, %v2408
          %v2423 = vpop.permute.xlu0 %2422
          %v2425 = vsub.f32 %v2394, %v2418
          %v2426 = vsub.f32 %v2397, %v2423
          %v2427 = vmul.f32 %v2425, 1.442695
          %v2428 = vpow.pop %v2427
          %v2429 = vmul.f32 %v2426, 1.442695
          %v2430 = vpow.pop %v2429
          %v2431 = vld [vmem:[%s1653] sm:$0xff]
          %v2432 = vld [vmem:[%s1653 + $0x8] sm:$0xff]
          %v2433 = vmul.f32 %v2412, %v2431
          %v2434 = vmul.f32 %v2414, %v2432
          %v2435 = vsel %vm1794, %v2428, 0.0
          %2436 = vadd.xlane.f32.xlu0 %v2435
          %v2437 = vpop.xlane.xlu0 %2436
          %v2438 = vsel %vm1794, %v2430, 0.0
          %2439 = vadd.xlane.f32.xlu0 %v2438
          %v2440 = vpop.xlane.xlu0 %2439
          %v2441 = vadd.f32 %v2433, %v2437
          %v2442 = vadd.f32 %v2434, %v2440
          %v2443 = vld [vmem:[#allocation6] sm:$0xff]
          %v2444 = vld [vmem:[#allocation6 + $0x8] sm:$0xff]
          %2446 = vset.pattern.permute.xlu0 0
          %2447 = vperm.xlu0 %2446, %v2412
          %v2448 = vpop.permute.xlu0 %2447
          %2451 = vset.pattern.permute.xlu0 0
          %2452 = vperm.xlu0 %2451, %v2414
          %v2453 = vpop.permute.xlu0 %2452
          %v2455 = vmul.f32 %v2448, %v2443
          %v2456 = vmul.f32 %v2453, %v2444
          %2457 = vrot.lane.b32.xlu0 %v1736, 32
          %v2458 = vpop.permute.xlu0 %2457
          %v2461 = vsel %vm1794, %v2428, 0
          %v2464 = vsel %vm1794, %v2430, 0
          %2466 = vmatpush.msra.mxu0 0.0
          %2467 = vmatpush.msra.mxu0 0.0
          %2468 = vmatpush.msra.mxu0 0.0
          %2469 = vmatpush.msra.mxu0 0.0
          %2470 = vmatpush.msra.mxu0 0.0
          %2471 = vmatpush.msra.mxu0 0.0
          %2472 = vmatpush.msra.mxu0 0.0
          %2473 = vmatpush.msra.mxu0 0.0
          %2474 = vmatpush.msra.mxu0 0.0
          %2475 = vmatpush.msra.mxu0 0.0
          %2476 = vmatpush.msra.mxu0 0.0
          %2477 = vmatpush.msra.mxu0 0.0
          %2478 = vmatpush.msra.mxu0 0.0
          %2479 = vmatpush.msra.mxu0 0.0
          %2480 = vmatpush.msra.mxu0 0.0
          %2481 = vmatpush.msra.mxu0 %v2458
          %2482 = vmatmul.f32.gmra.mxu0 %v2461
          %v2483 = vpop.f32.mrf.mxu0
          %v2484 = vadd.f32 0.0, %v2483
          %2485 = vmatmul.f32.gmra.mxu0 %v2464
          %v2486 = vpop.f32.mrf.mxu0
          %v2487 = vadd.f32 0.0, %v2486
          %2488 = vdwg.mxu0
          %2491 = vrot.lane.b32.xlu0 %v2484, 96
          %v2492 = vpop.permute.xlu0 %2491
          %2493 = vrot.lane.b32.xlu0 %v2487, 96
          %v2494 = vpop.permute.xlu0 %2493
          %v2497 = vadd.f32 %v2455, %v2492
          %v2498 = vadd.f32 %v2456, %v2494
          %v2499 = vrcp.pop %v2441
          %v2500 = vmul.f32 %v2441, %v2499
          %v2501 = vsub.f32 1.0, %v2500
          %v2502 = vmul.f32 %v2499, %v2501
          %v2503 = vadd.f32 %v2499, %v2502
          %vm2504 = vweird.f32 %v2441
          %vm2505 = vweird.f32 %v2499
          %vm2506 = vmor %vm2504, %vm2505
          %v2507 = vsel %vm2506, %v2499, %v2503
          %v2508 = vand.u32 2147483647, %v2441
          %vm2509 = vcmp.eq.f32.partialorder %v2508, 8.507059e+37
          %v2510 = vand.u32 %v2441, 2147483648
          %v2511 = vor.u32 1.1754944e-38, %v2510
          %v2512 = vsel %vm2509, %v2511, %v2507
          %v2513 = vrcp.pop %v2442
          %v2514 = vmul.f32 %v2442, %v2513
          %v2515 = vsub.f32 1.0, %v2514
          %v2516 = vmul.f32 %v2513, %v2515
          %v2517 = vadd.f32 %v2513, %v2516
          %vm2518 = vweird.f32 %v2442
          %vm2519 = vweird.f32 %v2513
          %vm2520 = vmor %vm2518, %vm2519
          %v2521 = vsel %vm2520, %v2513, %v2517
          %v2522 = vand.u32 2147483647, %v2442
          %vm2523 = vcmp.eq.f32.partialorder %v2522, 8.507059e+37
          %v2524 = vand.u32 %v2442, 2147483648
          %v2525 = vor.u32 1.1754944e-38, %v2524
          %v2526 = vsel %vm2523, %v2525, %v2521
          %2528 = vset.pattern.permute.xlu0 0
          %2529 = vperm.xlu0 %2528, %v2512
          %v2530 = vpop.permute.xlu0 %2529
          %2533 = vset.pattern.permute.xlu0 0
          %2534 = vperm.xlu0 %2533, %v2526
          %v2535 = vpop.permute.xlu0 %2534
          %v2537 = vmul.f32 %v2497, %v2530
          %v2538 = vmul.f32 %v2498, %v2535
          %2539 = vst.msk [vmem:[#allocation6] sm:$0xff] %vm1727, %v2537
          %2540 = vst.msk [vmem:[#allocation6 + $0x8] sm:$0xff] %vm1727, %v2538
          %v2541 = vld [vmem:[#allocation6] sm:$0xff]
          %v2542 = vld [vmem:[#allocation6 + $0x8] sm:$0xff]
          %2543 = vst [vmem:[%s610] sm:$0xff] %v2541
          %2544 = vst [vmem:[%s610 + $0x8] sm:$0xff] %v2542
        $region96: #{tpu_custom_call.1} parent=59 // pred_fallthru
          _
        %s2545 = sand.u32 %s306, 1
        %s2546 = scalar_lea.sflag [#allocation9], %s2545
        %s2547 = sand.u32 %s306, 1
        %s2548 = smul.addr %s2547, 16
        %s2549 = scalar_lea.vmem [#allocation18], %s2548
        // Predicated region
        $region97: #{tpu_custom_call.1} parent=59 // pred_check
          %p2550 = pneg %p316
        $region98: #{tpu_custom_call.1} parent=59 // pred_check_branch
          %2552 = sbr.rel (%p2550) target = $region100
        $region99: #{tpu_custom_call.1} parent=59 // pred_region
          %s2553 = smul.u32 2, %s37
          %2555 = vsyncadd %s2546, 0
          %s2556 = smul.addr %s36, 2
          %s2557 = sadd.s32 %s2553, %s2556
          %s2558 = smul.addr %s2557, 8
          %s2559 = scalar_lea.hbm %s10, %s2558
          %s2560 = sshll.u32 %s2549, 4
          %s2561 = int_to_ptr.vmem [resolvable:$true] %s2560
          %s2562 = sshll.u32 %s2559, 4
          %s2563 = int_to_ptr.hbm [resolvable:$true] %s2562
          %2568 = dma.vmem_to_hbm [thread:$0]  %s2561, 256, %s2563, %s2546, 128, 128, 8
        $region100: #{tpu_custom_call.1} parent=59 // pred_fallthru
          _
      $region60: #{tpu_custom_call.1} parent=5 // pred_fallthru
        _
      %p2569 = scmp.le.s32.totalorder 2, %s26
      // Predicated region
      $region101: #{tpu_custom_call.1} parent=5 // pred_check
        %p2570 = pneg %p2569
      $region102: #{tpu_custom_call.1} parent=5 // pred_check_branch
        %2572 = sbr.rel (%p2570) target = $region104
      $region103: #{tpu_custom_call.1} parent=5 // pred_region
        %s2573 = ssub.s32 %s26, 2
        // Predicated region
        $region105: #{tpu_custom_call.1} parent=103 // pred_check
          %p2574 = pneg %p322
        $region106: #{tpu_custom_call.1} parent=103 // pred_check_branch
          %2576 = sbr.rel (%p2574) target = $region108
        $region107: #{tpu_custom_call.1} parent=103 // pred_region
          %s2577 = sand.u32 %s307, 1
          %s2578 = scalar_lea.sflag [#allocation9], %s2577
          %s2579 = sand.u32 %s307, 1
          %s2580 = smul.addr %s2579, 16
          %s2581 = scalar_lea.vmem [#allocation18], %s2580
          %2583 = dma.done %s2578, 256
        $region108: #{tpu_custom_call.1} parent=103 // pred_fallthru
          _
      $region104: #{tpu_custom_call.1} parent=5 // pred_fallthru
        _
    $region6: #{tpu_custom_call.1} parent=1 // loop_footer
      %s30 = sadd.s32 1, %s26
    $region7: #{tpu_custom_call.1} parent=1 // loop_footer_branch
      %25 = sbr.rel target = $region3
    $region8: #{tpu_custom_call.1} parent=1 // loop_exit
      _
    %2584 = vsyncpa [#allocation8], 1
    %s2585 = scalar_lea.sflag [#allocation8], 1
    %2586 = vsyncpa %s2585, 1
    %2587 = vsyncpa [#allocation11], 1
    %s2588 = scalar_lea.sflag [#allocation11], 1
    %2589 = vsyncpa %s2588, 1
    %2590 = vsyncpa [#allocation14], 1
    %2591 = vsyncpa [#allocation9], 1
    %s2592 = scalar_lea.sflag [#allocation9], 1
    %2593 = vsyncpa %s2592, 1

</llo_original>
